<compile_context>
chip_gen: v6e
topology: v6e:2x2x1
jax: 0.10.0
libtpu: 0.0.40
codegen_flags: <defaults>
</compile_context>

<pallas_src>
import jax
import jax.numpy as jnp
from jax import lax
from jax.experimental import pallas as pl
from jax.experimental.pallas import tpu as pltpu


def _attn_kernel(x_ref, ctxmt_ref, eye_ref, keep_ref, wf_ref, o_ref):
    # x_ref    : (bb, N, D)   block of permuted inputs
    # ctxmt_ref: (N, N)       ctxm^T: [k,j] = 1.0 where (adj[j,k]!=0 and j!=k) else 0.0
    # eye_ref  : (N, N)       identity
    # keep_ref : (N, N)       1.0 where adj != 0 else 0.0   (exact masked_fill mask)
    # wf_ref   : (D, D+3)     fused weight [W^T | W^T a1 | W^T a2 | W^T a3]
    # o_ref    : (bb, N, N)   attention output block
    x = x_ref[...]
    bb, n, d = x.shape

    # --- all shared-weight projections in ONE flattened MXU matmul (M = bb*N) ---
    x2d = x.reshape(bb * n, d)                                        # layout-preserving
    hp = jnp.dot(x2d, wf_ref[...], preferred_element_type=jnp.float32)  # (bb*N, D+3)
    h = hp[:, :d].reshape(bb, n, d)                                   # h[b,k,:]
    s1 = hp[:, d:d + 1].reshape(bb, n, 1)                             # a1 . h[b,i]
    pa2 = hp[:, d + 1:d + 2].reshape(bb, n, 1)                        # a2 . h[b,k]
    pa3 = hp[:, d + 2:d + 3].reshape(bb, n, 1)                        # a3 . h[b,k]

    # sim[b,k,j] = <h[b,k], h[b,j]>  (symmetric) -- batched MXU contraction over D
    bnd_bmd = (((2,), (2,)), ((0,), (0,)))                            # 'bnd,bmd->bnm'
    sim = lax.dot_general(h, h, bnd_bmd, preferred_element_type=jnp.float32)  # (bb,N,N)

    # j-indexed score term built directly in lane-major (bb,1,N) form via a sublane
    # reduction (no transpose, no K=1 MXU outer product):
    #   s23[b,j] = a2.h[b,j] + a3.ctx[b,j]
    #            = sum_k ( pa2[b,k]*I[k,j] + pa3[b,k]*sim[b,k,j]*ctxm[j,k] )
    contrib = pa3 * sim * ctxmt_ref[...] + pa2 * eye_ref[...]         # (bb,N,N) over [b,k,j]
    s23_row = jnp.sum(contrib, axis=1, keepdims=True)                 # (bb,1,N)

    scores = s1 + s23_row                                             # (bb,N,N)
    scores = jnp.maximum(scores, 0.2 * scores)                        # LeakyReLU(0.2)
    scores = jnp.where(keep_ref[...] != 0.0, scores, -9e15)           # exact masked_fill

    m = jnp.max(scores, axis=-1, keepdims=True)
    e = jnp.exp(scores - m)
    denom = jnp.sum(e, axis=-1, keepdims=True)
    inv = pl.reciprocal(denom, approx=True)                           # EUP slot, not a divide
    inv = inv * (2.0 - denom * inv)                                   # Newton step -> f32 acc
    o_ref[...] = e * inv


def _roundup(v, m):
    return ((v + m - 1) // m) * m


def _tpu_vmem_bytes():
    try:
        return int(pltpu.get_tpu_info().vmem_capacity_bytes)
    except Exception:
        return 64 * 1024 * 1024          # v7x per-TensorCore physical; conservative floor


def _num_tensorcores():
    try:
        dev = jax.devices()[0]
    except Exception:
        return 2
    n = getattr(dev, "num_cores", None)
    if isinstance(n, int) and n > 0:
        return n
    kind = str(getattr(dev, "device_kind", "")).lower()
    single_core = ("v5e", "v5 lite", "v5lite", "v6e", "v6 lite", "v6lite")
    if any(t in kind for t in single_core):
        return 1                          # v5e/v6e: one TC -> prefer a single grid step
    return 2                              # v7x / megacore: keep grid a multiple of 2


def _per_batch_vmem_bytes(N, D):
    """Padded-f32 VMEM bytes per batch element per step (double-buffered blocks + live
    intermediates), used both to cap bb and to pick vmem_limit_bytes."""
    n_sub = _roundup(N, 8)
    n_lane = _roundup(N, 128)
    d_lane = _roundup(D, 128)
    dp_lane = _roundup(D + 3, 128)
    x_blk = n_sub * d_lane                       # input block (double-buffered)
    out_blk = n_sub * n_lane                     # output block (double-buffered)
    inter = n_sub * (dp_lane + d_lane) + 6 * n_sub * n_lane   # hp, h, sim/contrib/scores/e/...
    return 4 * (2 * x_blk + 2 * out_blk + inter)


def _pick_block_batches(B, N, D):
    """Batches per grid step: largest divisor of B that fits VMEM; on multi-TensorCore
    chips cap at B/num_cores so the 'parallel' batch axis feeds every core."""
    vmem = _tpu_vmem_bytes()
    cores = _num_tensorcores()
    budget = vmem // 4                           # headroom: compiler scratch, shared operands
    cap = max(1, budget // _per_batch_vmem_bytes(N, D))
    cap = min(cap, B)
    if cores > 1:
        cap = min(cap, max(1, B // cores))
    bb = 1
    for cand in range(1, cap + 1):
        if B % cand == 0:
            bb = cand
    return bb, vmem


def attention_with_context(x, adj, w, a, *, block_b=None):
    """x: (B, input_dim, N), adj: (N, N), w: (D, D) Linear weight, a: (1, 3D) Linear weight."""
    B, D, N = x.shape
    x3 = jnp.transpose(x, (0, 2, 1)).astype(jnp.float32)            # (B, N, D)
    wt = jnp.transpose(w).astype(jnp.float32)                       # (D, D) = W^T
    a_cols = jnp.transpose(a.reshape(3, D)).astype(jnp.float32)     # (D, 3) = [a1 | a2 | a3]
    # fused weight: x @ wf == [h | h.a1 | h.a2 | h.a3]
    wf = jnp.concatenate([wt, jnp.dot(wt, a_cols)], axis=1)         # (D, D+3)

    adj_nz = adj != 0
    eye_b = jnp.eye(N, dtype=bool)
    ctxm = (adj_nz & (~eye_b)).astype(jnp.float32)                  # context mask (no self-loop)
    ctxmt = jnp.transpose(ctxm)                                     # [k,j] = ctxm[j,k]
    eyef = jnp.eye(N, dtype=jnp.float32)
    keep = adj_nz.astype(jnp.float32)                               # exact masked_fill mask

    vmem_total = _tpu_vmem_bytes()
    if block_b is not None:
        bb = block_b
    else:
        bb, vmem_total = _pick_block_batches(B, N, D)
    assert B % bb == 0, f"block_b={bb} must divide batch={B}"
    grid = (B // bb,)

    step_bytes = bb * _per_batch_vmem_bytes(N, D) + 8 * _roundup(N, 8) * _roundup(N, 128) \
        + 4 * _roundup(D, 8) * _roundup(D + 3, 128)
    vmem_limit = int(min(vmem_total * 3 // 4, max(32 * 1024 * 1024, 2 * step_bytes)))

    return pl.pallas_call(
        _attn_kernel,
        out_shape=jax.ShapeDtypeStruct((B, N, N), jnp.float32),
        grid_spec=pltpu.PrefetchScalarGridSpec(
            num_scalar_prefetch=0,
            grid=grid,
            in_specs=[
                pl.BlockSpec((bb, N, D), lambda g: (g, 0, 0)),      # x3: per-step batch block
                pl.BlockSpec((N, N), lambda g: (0, 0)),             # ctxm^T (shared, resident)
                pl.BlockSpec((N, N), lambda g: (0, 0)),             # identity (shared)
                pl.BlockSpec((N, N), lambda g: (0, 0)),             # keep mask (shared)
                pl.BlockSpec((D, D + 3), lambda g: (0, 0)),         # fused [W^T | W^T a*]
            ],
            out_specs=pl.BlockSpec((bb, N, N), lambda g: (g, 0, 0)),
        ),
        compiler_params=pltpu.CompilerParams(
            dimension_semantics=("parallel",),
            vmem_limit_bytes=vmem_limit,
        ),
    )(x3, ctxmt, eyef, keep, wf)


def _reference(x, adj, w, a):
    """Pure-JAX reproduction of the PyTorch forward (vectorized form of the loop)."""
    B, D, N = x.shape
    xp = jnp.transpose(x, (0, 2, 1))                       # (B, N, D)
    h = xp @ w.T                                           # (B, N, D)
    sim = jnp.einsum("bid,bjd->bij", h, h)                 # (B, N, N)
    m = (adj != 0) & (jnp.eye(N) == 0)
    c = jnp.einsum("bik,bkd->bid", jnp.where(m, sim, 0.0), h)
    a1, a2, a3 = a[0, :D], a[0, D:2 * D], a[0, 2 * D:]
    s1 = h @ a1
    s2 = h @ a2
    s3 = c @ a3
    scores = s1[:, :, None] + (s2 + s3)[:, None, :]
    scores = jnp.where(scores > 0, scores, 0.2 * scores)
    scores = jnp.where(adj[None, :, :] == 0, -9e15, scores)
    return jax.nn.softmax(scores, axis=-1)


if __name__ == "__main__":
    key = jax.random.PRNGKey(0)
    kx, kadj, kw, ka = jax.random.split(key, 4)

    B, D, N = 64, 32, 8   # batch, input_dim, node_num
    x = jax.random.normal(kx, (B, D, N), dtype=jnp.float32)
    adj = (jax.random.uniform(kadj, (N, N)) > 0.4).astype(jnp.float32)
    adj = adj.at[jnp.arange(N), jnp.arange(N)].set(1.0)
    adj = adj.at[N - 1, :].set(0.0)   # isolated node: exercises the fully-masked softmax row

    # shapes from nn.Linear in __init__ (both bias=False)
    w = jax.random.normal(kw, (D, D), dtype=jnp.float32) * 0.1      # W: Linear(D, D)
    a = jax.random.normal(ka, (1, 3 * D), dtype=jnp.float32) * 0.1  # a: Linear(3D, 1)

    out = jax.block_until_ready(attention_with_context(x, adj, w, a))
    ref = _reference(x, adj, w, a)

    assert out.shape == (B, N, N)
    err = float(jnp.max(jnp.abs(out - ref)))
    # tolerance covers the re-associated x @ (W^T a_c) projections and the EUP
    # reciprocal (+ Newton step); both are far below 1e-3 on softmax outputs.
    assert err < 1e-3, f"max abs diff {err}"
    print("KERNEL_OK")
</pallas_src>

<mosaic_0001>
module attributes {stable_mosaic.version = 11 : i64} {
  func.func @_attn_kernel(%arg0: i32, %arg1: memref<32x8x32xf32, #tpu.memory_space<vmem>>, %arg2: memref<8x8xf32, #tpu.memory_space<vmem>>, %arg3: memref<8x8xf32, #tpu.memory_space<vmem>>, %arg4: memref<8x8xf32, #tpu.memory_space<vmem>>, %arg5: memref<32x35xf32, #tpu.memory_space<vmem>>, %arg6: memref<32x8x8xf32, #tpu.memory_space<vmem>>) attributes {dimension_semantics = [#tpu.dimension_semantics<parallel>], iteration_bounds = array<i64: 2>, scalar_prefetch = 0 : i64, scratch_operands = 0 : i64, tpu.core_type = #tpu.core_type<tc>, window_params = [{transform_indices = @transform_0, window_bounds = array<i64: 32, 8, 32>}, {pipeline_mode = #tpu.pipeline_mode<synchronous>, transform_indices = @transform_1, window_bounds = array<i64: 8, 8>}, {pipeline_mode = #tpu.pipeline_mode<synchronous>, transform_indices = @transform_2, window_bounds = array<i64: 8, 8>}, {pipeline_mode = #tpu.pipeline_mode<synchronous>, transform_indices = @transform_3, window_bounds = array<i64: 8, 8>}, {pipeline_mode = #tpu.pipeline_mode<synchronous>, transform_indices = @transform_4, window_bounds = array<i64: 32, 35>}, {transform_indices = @transform_5, window_bounds = array<i64: 32, 8, 8>}]} {
    %c0 = arith.constant 0 : index
    %c0_0 = arith.constant 0 : index
    %c0_1 = arith.constant 0 : index
    %0 = vector.load %arg1[%c0, %c0_0, %c0_1] : memref<32x8x32xf32, #tpu.memory_space<vmem>>, vector<32x8x32xf32>
    %1 = vector.shape_cast %0 : vector<32x8x32xf32> to vector<256x32xf32>
    %c0_2 = arith.constant 0 : index
    %c0_3 = arith.constant 0 : index
    %2 = vector.load %arg5[%c0_2, %c0_3] : memref<32x35xf32, #tpu.memory_space<vmem>>, vector<32x35xf32>
    %cst = arith.constant dense<0.000000e+00> : vector<256x35xf32>
    %3 = tpu.matmul %1, %2, %cst {dimension_numbers = #tpu.dot_dimension_numbers<[1], [0], [0], [1], [0, 0, 1, 1], [], []>} : vector<256x32xf32>, vector<32x35xf32>, vector<256x35xf32> -> vector<256x35xf32>
    %4 = vector.extract_strided_slice %3 {offsets = [0, 0], sizes = [256, 32], strides = [1, 1]} : vector<256x35xf32> to vector<256x32xf32>
    %5 = vector.shape_cast %4 : vector<256x32xf32> to vector<32x8x32xf32>
    %6 = vector.extract_strided_slice %3 {offsets = [0, 32], sizes = [256, 1], strides = [1, 1]} : vector<256x35xf32> to vector<256x1xf32>
    %7 = vector.shape_cast %6 : vector<256x1xf32> to vector<32x8x1xf32>
    %8 = vector.extract_strided_slice %3 {offsets = [0, 33], sizes = [256, 1], strides = [1, 1]} : vector<256x35xf32> to vector<256x1xf32>
    %9 = vector.shape_cast %8 : vector<256x1xf32> to vector<32x8x1xf32>
    %10 = vector.extract_strided_slice %3 {offsets = [0, 34], sizes = [256, 1], strides = [1, 1]} : vector<256x35xf32> to vector<256x1xf32>
    %11 = vector.shape_cast %10 : vector<256x1xf32> to vector<32x8x1xf32>
    %cst_4 = arith.constant dense<0.000000e+00> : vector<32x8x8xf32>
    %12 = tpu.matmul %5, %5, %cst_4 {dimension_numbers = #tpu.dot_dimension_numbers<[2], [2], [1], [1], [0, 0, 0, 1, 1, 1], [0], [0]>} : vector<32x8x32xf32>, vector<32x8x32xf32>, vector<32x8x8xf32> -> vector<32x8x8xf32>
    %13 = vector.broadcast %11 : vector<32x8x1xf32> to vector<32x8x8xf32>
    %14 = arith.mulf %13, %12 : vector<32x8x8xf32>
    %c0_5 = arith.constant 0 : index
    %c0_6 = arith.constant 0 : index
    %15 = vector.load %arg2[%c0_5, %c0_6] : memref<8x8xf32, #tpu.memory_space<vmem>>, vector<8x8xf32>
    %16 = vector.shape_cast %15 : vector<8x8xf32> to vector<1x8x8xf32>
    %17 = vector.broadcast %16 : vector<1x8x8xf32> to vector<32x8x8xf32>
    %18 = arith.mulf %14, %17 : vector<32x8x8xf32>
    %c0_7 = arith.constant 0 : index
    %c0_8 = arith.constant 0 : index
    %19 = vector.load %arg3[%c0_7, %c0_8] : memref<8x8xf32, #tpu.memory_space<vmem>>, vector<8x8xf32>
    %20 = vector.shape_cast %19 : vector<8x8xf32> to vector<1x8x8xf32>
    %21 = vector.broadcast %9 : vector<32x8x1xf32> to vector<32x8x8xf32>
    %22 = vector.broadcast %20 : vector<1x8x8xf32> to vector<32x8x8xf32>
    %23 = arith.mulf %21, %22 : vector<32x8x8xf32>
    %24 = arith.addf %18, %23 : vector<32x8x8xf32>
    %cst_9 = arith.constant dense<0.000000e+00> : vector<32x8xf32>
    %25 = vector.multi_reduction <add>, %24, %cst_9 [1] : vector<32x8x8xf32> to vector<32x8xf32>
    %26 = vector.shape_cast %25 : vector<32x8xf32> to vector<32x1x8xf32>
    %27 = vector.broadcast %7 : vector<32x8x1xf32> to vector<32x8x8xf32>
    %28 = vector.broadcast %26 : vector<32x1x8xf32> to vector<32x8x8xf32>
    %29 = arith.addf %27, %28 : vector<32x8x8xf32>
    %cst_10 = arith.constant 2.000000e-01 : f32
    %30 = vector.broadcast %cst_10 : f32 to vector<32x8x8xf32>
    %31 = arith.mulf %30, %29 : vector<32x8x8xf32>
    %32 = arith.maximumf %29, %31 : vector<32x8x8xf32>
    %c0_11 = arith.constant 0 : index
    %c0_12 = arith.constant 0 : index
    %33 = vector.load %arg4[%c0_11, %c0_12] : memref<8x8xf32, #tpu.memory_space<vmem>>, vector<8x8xf32>
    %cst_13 = arith.constant 0.000000e+00 : f32
    %34 = vector.broadcast %cst_13 : f32 to vector<8x8xf32>
    %35 = arith.cmpf one, %33, %34 : vector<8x8xf32>
    %cst_14 = arith.constant -9.000000e+15 : f32
    %36 = vector.shape_cast %35 : vector<8x8xi1> to vector<1x8x8xi1>
    %37 = vector.broadcast %36 : vector<1x8x8xi1> to vector<32x8x8xi1>
    %38 = vector.broadcast %cst_14 : f32 to vector<32x8x8xf32>
    %39 = arith.select %37, %32, %38 : vector<32x8x8xi1>, vector<32x8x8xf32>
    %cst_15 = arith.constant dense<0xFF800000> : vector<32x8xf32>
    %40 = vector.multi_reduction <maximumf>, %39, %cst_15 [2] : vector<32x8x8xf32> to vector<32x8xf32>
    %41 = vector.shape_cast %40 : vector<32x8xf32> to vector<32x8x1xf32>
    %42 = vector.broadcast %41 : vector<32x8x1xf32> to vector<32x8x8xf32>
    %43 = arith.subf %39, %42 : vector<32x8x8xf32>
    %44 = math.exp %43 : vector<32x8x8xf32>
    %cst_16 = arith.constant dense<0.000000e+00> : vector<32x8xf32>
    %45 = vector.multi_reduction <add>, %44, %cst_16 [2] : vector<32x8x8xf32> to vector<32x8xf32>
    %46 = vector.shape_cast %45 : vector<32x8xf32> to vector<32x8x1xf32>
    %47 = tpu.reciprocal %46 {approx = true} : vector<32x8x1xf32> -> vector<32x8x1xf32>
    %48 = arith.mulf %46, %47 : vector<32x8x1xf32>
    %cst_17 = arith.constant 2.000000e+00 : f32
    %49 = vector.broadcast %cst_17 : f32 to vector<32x8x1xf32>
    %50 = arith.subf %49, %48 : vector<32x8x1xf32>
    %51 = arith.mulf %47, %50 : vector<32x8x1xf32>
    %52 = vector.broadcast %51 : vector<32x8x1xf32> to vector<32x8x8xf32>
    %53 = arith.mulf %44, %52 : vector<32x8x8xf32>
    %c0_18 = arith.constant 0 : index
    %c0_19 = arith.constant 0 : index
    %c0_20 = arith.constant 0 : index
    %54 = vector.load %arg6[%c0_18, %c0_19, %c0_20] : memref<32x8x8xf32, #tpu.memory_space<vmem>>, vector<32x8x8xf32>
    tpu.vector_store %arg6[%c0_18, %c0_19, %c0_20], %53 {strides = array<i32>} : memref<32x8x8xf32, #tpu.memory_space<vmem>>, vector<32x8x8xf32>,
    return
  }
  func.func @transform_0(%arg0: i32) -> (i32, i32, i32) {
    %c0_i32 = arith.constant 0 : i32
    %c0_i32_0 = arith.constant 0 : i32
    %c0_i32_1 = arith.constant 0 : i32
    return %arg0, %c0_i32, %c0_i32_0 : i32, i32, i32
  }
  func.func @transform_1(%arg0: i32) -> (i32, i32) {
    %c0_i32 = arith.constant 0 : i32
    %c0_i32_0 = arith.constant 0 : i32
    %c0_i32_1 = arith.constant 0 : i32
    return %c0_i32, %c0_i32_0 : i32, i32
  }
  func.func @transform_2(%arg0: i32) -> (i32, i32) {
    %c0_i32 = arith.constant 0 : i32
    %c0_i32_0 = arith.constant 0 : i32
    %c0_i32_1 = arith.constant 0 : i32
    return %c0_i32, %c0_i32_0 : i32, i32
  }
  func.func @transform_3(%arg0: i32) -> (i32, i32) {
    %c0_i32 = arith.constant 0 : i32
    %c0_i32_0 = arith.constant 0 : i32
    %c0_i32_1 = arith.constant 0 : i32
    return %c0_i32, %c0_i32_0 : i32, i32
  }
  func.func @transform_4(%arg0: i32) -> (i32, i32) {
    %c0_i32 = arith.constant 0 : i32
    %c0_i32_0 = arith.constant 0 : i32
    %c0_i32_1 = arith.constant 0 : i32
    return %c0_i32, %c0_i32_0 : i32, i32
  }
  func.func @transform_5(%arg0: i32) -> (i32, i32, i32) {
    %c0_i32 = arith.constant 0 : i32
    %c0_i32_0 = arith.constant 0 : i32
    %c0_i32_1 = arith.constant 0 : i32
    return %arg0, %c0_i32, %c0_i32_0 : i32, i32, i32
  }
}

</mosaic_0001>

<llo_original>
// kernel: tpu_custom_call.1
$region0: #{tpu_custom_call.1}
  #allocation0 [shape = 'u32[]', space=smem, size = 0x4, offset = 0x4, fixed_abs, tag = 'smem constant byte address 0x4 - core index']
  #allocation1 [shape = 'u32[144,128]{1,0:T(1,128)}', space=vmem, size = 0x12000, scoped, tag = 'internal scratch']
  %s0 = inlined_call_operand.vmem [shape: f32[64,8,32], index: 0, kind: input, shape index: {}]
  %s1 = inlined_call_operand.vmem [shape: f32[8,8], index: 1, kind: input, shape index: {}]
  %s2 = inlined_call_operand.vmem [shape: f32[8,8], index: 2, kind: input, shape index: {}]
  %s3 = inlined_call_operand.vmem [shape: f32[8,8], index: 3, kind: input, shape index: {}]
  %s4 = inlined_call_operand.vmem [shape: f32[32,35], index: 4, kind: input, shape index: {}]
  %s5 = inlined_call_operand.vmem [shape: f32[64,8,8], index: 5, kind: output, shape index: {}]
  %s6 = sld [smem:[#allocation0]]
  $region53: #{tpu_custom_call.1} parent=0
    _
  %s8 = ssub.s32 1, %s6
  %s9 = scalar_select 0, %s8, %s6
  loop: start=0, step=1, limit=4
  $region2: #{tpu_custom_call.1} parent=0 // loop_pre_header
    _
  $region3: #{tpu_custom_call.1} parent=0 // loop_header
    %s11 = sphi 0, %s15
    %p12 = scmp.ge.s32.totalorder %s11, 4
    %s21 = sphi 0, %s23
    %s24 = sphi 0, %s21
    %s25 = sphi 0, %s24
    %s41 = sphi 0, %s25
    %s45 = sphi 0, %s45
    %s47 = sphi 0, %s45
    %s48 = sphi 0, %s47
    %s62 = sphi 0, %s48
    %s66 = sphi 0, %s66
    %s68 = sphi 0, %s66
    %s69 = sphi 0, %s68
    %s83 = sphi 0, %s69
    %s87 = sphi 0, %s87
    %s89 = sphi 0, %s87
    %s90 = sphi 0, %s89
    %s104 = sphi 0, %s90
    %s108 = sphi 0, %s108
    %s110 = sphi 0, %s108
    %s111 = sphi 0, %s110
    %s125 = sphi 0, %s111
    %s131 = sphi 0, %s133
    %s134 = sphi 0, %s131
    %s135 = sphi 0, %s134
    %s151 = sphi 0, %s135
  $region4: #{tpu_custom_call.1} parent=0 // loop_header_branch
    %14 = sbr.rel (%p12) target = $region8
  $region5: #{tpu_custom_call.1} parent=0 // loop_body
    %s16 = ssub.s32 %s11, 1
    %s17 = ssub.s32 %s11, 2
    %s18 = sadd.s32 %s11, 1
    %s19 = ssub.s32 %s11, %s18
    %p20 = scmp.eq.s32.totalorder %s19, 0
    %s22 = sadd.s32 %s21, 1
    %s23 = scalar_select %p20, %s21, %s22
    %p26 = pneg %p20
    %p27 = scmp.eq.s32.totalorder %s11, 1
    %p28 = por %p26, %p27
    %p29 = scmp.ne.s32.totalorder %s21, %s24
    %p30 = scmp.eq.s32.totalorder %s11, 0
    %p31 = por %p29, %p30
    %p32 = scmp.ne.s32.totalorder %s21, %s24
    %p33 = scmp.eq.s32.totalorder %s16, 1
    %p34 = por %p32, %p33
    %p35 = scmp.ne.s32.totalorder %s24, %s25
    %p36 = scmp.eq.s32.totalorder %s16, 0
    %p37 = por %p35, %p36
    %p38 = scmp.ne.s32.totalorder %s24, %s25
    %p39 = scmp.eq.s32.totalorder %s17, 1
    %p40 = por %p38, %p39
    %p42 = scmp.ne.s32.totalorder %s25, %s41
    %p43 = scmp.eq.s32.totalorder %s17, 0
    %p44 = por %p42, %p43
    %s46 = sadd.s32 %s45, 1
    %p49 = scmp.eq.s32.totalorder %s11, 1
    %p50 = scmp.ne.s32.totalorder %s45, %s47
    %p51 = scmp.eq.s32.totalorder %s11, 0
    %p52 = por %p50, %p51
    %p53 = scmp.ne.s32.totalorder %s45, %s47
    %p54 = scmp.eq.s32.totalorder %s16, 1
    %p55 = por %p53, %p54
    %p56 = scmp.ne.s32.totalorder %s47, %s48
    %p57 = scmp.eq.s32.totalorder %s16, 0
    %p58 = por %p56, %p57
    %p59 = scmp.ne.s32.totalorder %s47, %s48
    %p60 = scmp.eq.s32.totalorder %s17, 1
    %p61 = por %p59, %p60
    %p63 = scmp.ne.s32.totalorder %s48, %s62
    %p64 = scmp.eq.s32.totalorder %s17, 0
    %p65 = por %p63, %p64
    %s67 = sadd.s32 %s66, 1
    %p70 = scmp.eq.s32.totalorder %s11, 1
    %p71 = scmp.ne.s32.totalorder %s66, %s68
    %p72 = scmp.eq.s32.totalorder %s11, 0
    %p73 = por %p71, %p72
    %p74 = scmp.ne.s32.totalorder %s66, %s68
    %p75 = scmp.eq.s32.totalorder %s16, 1
    %p76 = por %p74, %p75
    %p77 = scmp.ne.s32.totalorder %s68, %s69
    %p78 = scmp.eq.s32.totalorder %s16, 0
    %p79 = por %p77, %p78
    %p80 = scmp.ne.s32.totalorder %s68, %s69
    %p81 = scmp.eq.s32.totalorder %s17, 1
    %p82 = por %p80, %p81
    %p84 = scmp.ne.s32.totalorder %s69, %s83
    %p85 = scmp.eq.s32.totalorder %s17, 0
    %p86 = por %p84, %p85
    %s88 = sadd.s32 %s87, 1
    %p91 = scmp.eq.s32.totalorder %s11, 1
    %p92 = scmp.ne.s32.totalorder %s87, %s89
    %p93 = scmp.eq.s32.totalorder %s11, 0
    %p94 = por %p92, %p93
    %p95 = scmp.ne.s32.totalorder %s87, %s89
    %p96 = scmp.eq.s32.totalorder %s16, 1
    %p97 = por %p95, %p96
    %p98 = scmp.ne.s32.totalorder %s89, %s90
    %p99 = scmp.eq.s32.totalorder %s16, 0
    %p100 = por %p98, %p99
    %p101 = scmp.ne.s32.totalorder %s89, %s90
    %p102 = scmp.eq.s32.totalorder %s17, 1
    %p103 = por %p101, %p102
    %p105 = scmp.ne.s32.totalorder %s90, %s104
    %p106 = scmp.eq.s32.totalorder %s17, 0
    %p107 = por %p105, %p106
    %s109 = sadd.s32 %s108, 1
    %p112 = scmp.eq.s32.totalorder %s11, 1
    %p113 = scmp.ne.s32.totalorder %s108, %s110
    %p114 = scmp.eq.s32.totalorder %s11, 0
    %p115 = por %p113, %p114
    %p116 = scmp.ne.s32.totalorder %s108, %s110
    %p117 = scmp.eq.s32.totalorder %s16, 1
    %p118 = por %p116, %p117
    %p119 = scmp.ne.s32.totalorder %s110, %s111
    %p120 = scmp.eq.s32.totalorder %s16, 0
    %p121 = por %p119, %p120
    %p122 = scmp.ne.s32.totalorder %s110, %s111
    %p123 = scmp.eq.s32.totalorder %s17, 1
    %p124 = por %p122, %p123
    %p126 = scmp.ne.s32.totalorder %s111, %s125
    %p127 = scmp.eq.s32.totalorder %s17, 0
    %p128 = por %p126, %p127
    %s129 = ssub.s32 %s11, %s18
    %p130 = scmp.eq.s32.totalorder %s129, 0
    %s132 = sadd.s32 %s131, 1
    %s133 = scalar_select %p130, %s131, %s132
    %p136 = pneg %p130
    %p137 = scmp.eq.s32.totalorder %s11, 1
    %p138 = por %p136, %p137
    %p139 = scmp.ne.s32.totalorder %s131, %s134
    %p140 = scmp.eq.s32.totalorder %s11, 0
    %p141 = por %p139, %p140
    %p142 = scmp.ne.s32.totalorder %s131, %s134
    %p143 = scmp.eq.s32.totalorder %s16, 1
    %p144 = por %p142, %p143
    %p145 = scmp.ne.s32.totalorder %s134, %s135
    %p146 = scmp.eq.s32.totalorder %s16, 0
    %p147 = por %p145, %p146
    %p148 = scmp.ne.s32.totalorder %s134, %s135
    %p149 = scmp.eq.s32.totalorder %s17, 1
    %p150 = por %p148, %p149
    %p152 = scmp.ne.s32.totalorder %s135, %s151
    %p153 = scmp.eq.s32.totalorder %s17, 0
    %p154 = por %p152, %p153
    %p155 = scmp.le.s32.totalorder 1, %s11
    %p156 = scmp.lt.s32.totalorder %s11, 3
    %p157 = pnand %p155, %p156
    %p158 = pneg %p157
    // Predicated region
    $region9: #{tpu_custom_call.1} parent=5 // pred_check
      _
    $region10: #{tpu_custom_call.1} parent=5 // pred_check_branch
      %160 = sbr.rel (%p157) target = $region12
    $region11: #{tpu_custom_call.1} parent=5 // pred_region
      %s161 = ssub.s32 %s11, 1
      // Predicated region
      $region13: #{tpu_custom_call.1} parent=11 // pred_check
        %p162 = pneg %p58
      $region14: #{tpu_custom_call.1} parent=11 // pred_check_branch
        %164 = sbr.rel (%p162) target = $region16
      $region15: #{tpu_custom_call.1} parent=11 // pred_region
        _
      $region16: #{tpu_custom_call.1} parent=11 // pred_fallthru
        _
      // Predicated region
      $region17: #{tpu_custom_call.1} parent=11 // pred_check
        %p165 = pneg %p79
      $region18: #{tpu_custom_call.1} parent=11 // pred_check_branch
        %167 = sbr.rel (%p165) target = $region20
      $region19: #{tpu_custom_call.1} parent=11 // pred_region
        _
      $region20: #{tpu_custom_call.1} parent=11 // pred_fallthru
        _
      // Predicated region
      $region21: #{tpu_custom_call.1} parent=11 // pred_check
        %p168 = pneg %p100
      $region22: #{tpu_custom_call.1} parent=11 // pred_check_branch
        %170 = sbr.rel (%p168) target = $region24
      $region23: #{tpu_custom_call.1} parent=11 // pred_region
        _
      $region24: #{tpu_custom_call.1} parent=11 // pred_fallthru
        _
      // Predicated region
      $region25: #{tpu_custom_call.1} parent=11 // pred_check
        %p171 = pneg %p121
      $region26: #{tpu_custom_call.1} parent=11 // pred_check_branch
        %173 = sbr.rel (%p171) target = $region28
      $region27: #{tpu_custom_call.1} parent=11 // pred_region
        _
      $region28: #{tpu_custom_call.1} parent=11 // pred_fallthru
        _
    $region12: #{tpu_custom_call.1} parent=5 // pred_fallthru
      _
    %p174 = scmp.lt.s32.totalorder %s11, 2
    // Predicated region
    $region29: #{tpu_custom_call.1} parent=5 // pred_check
      %p175 = pneg %p174
    $region30: #{tpu_custom_call.1} parent=5 // pred_check_branch
      %177 = sbr.rel (%p175) target = $region32
    $region31: #{tpu_custom_call.1} parent=5 // pred_region
      // Predicated region
      $region33: #{tpu_custom_call.1} parent=31 // pred_check
        %p178 = pneg %p31
      $region34: #{tpu_custom_call.1} parent=31 // pred_check_branch
        %180 = sbr.rel (%p178) target = $region36
      $region35: #{tpu_custom_call.1} parent=31 // pred_region
        %s181 = smul.u32 32, %s11
        %p182 = scmp.lt.s32.totalorder %s181, 63
        %s183 = scalar_select %p182, %s181, 63
        %s184 = smul.addr %s183, 8
        %s185 = scalar_lea.vmem %s0, %s184
        %s186 = smul.u32 32, %s11
      $region36: #{tpu_custom_call.1} parent=31 // pred_fallthru
        _
    $region32: #{tpu_custom_call.1} parent=5 // pred_fallthru
      _
    %p187 = scmp.le.s32.totalorder 1, %s11
    %p188 = scmp.lt.s32.totalorder %s11, 3
    %p189 = pnand %p187, %p188
    %p190 = pneg %p189
    // Predicated region
    $region37: #{tpu_custom_call.1} parent=5 // pred_check
      _
    $region38: #{tpu_custom_call.1} parent=5 // pred_check_branch
      %192 = sbr.rel (%p189) target = $region40
    $region39: #{tpu_custom_call.1} parent=5 // pred_region
      %s193 = ssub.s32 %s11, 1
      %s194 = smul.u32 32, %s16
      %p195 = scmp.lt.s32.totalorder %s194, 63
      %s196 = scalar_select %p195, %s194, 63
      %s197 = smul.addr %s196, 8
      %s198 = scalar_lea.vmem %s0, %s197
      %p199 = pneg %p37
      %p200 = pneg %p34
      %p201 = pneg %p58
      %p202 = pneg %p55
      %p203 = pneg %p79
      %p204 = pneg %p76
      %p205 = pneg %p100
      %p206 = pneg %p97
      %p207 = pneg %p121
      %p208 = pneg %p118
      %p209 = pneg %p147
      %p210 = pneg %p144
      %s211 = smul.u32 32, %s16
      %p212 = scmp.lt.s32.totalorder %s211, 63
      %s213 = scalar_select %p212, %s211, 63
      %s214 = smul.addr %s213, 8
      %s215 = scalar_lea.vmem %s5, %s214
      %s216 = smul.u32 32, %s16
      %p217 = scmp.lt.s32.totalorder %s216, 63
      %s218 = scalar_select %p217, %s216, 63
      %s219 = smul.addr %s218, 8
      %s220 = scalar_lea.vmem %s0, %s219
      %s221 = smul.u32 32, %s16
      %s222 = smul.u32 32, %s16
      %p223 = scmp.lt.s32.totalorder %s222, 63
      %s224 = scalar_select %p223, %s222, 63
      %s225 = smul.addr %s224, 8
      %s226 = scalar_lea.vmem %s5, %s225
      %s227 = smul.u32 32, %s16
      %v228 = vld [vmem:[%s220] sm:$0xff]
      %v229 = vld [vmem:[%s220 + $0x8] sm:$0xff]
      %v230 = vld [vmem:[%s220 + $0x10] sm:$0xff]
      %v231 = vld [vmem:[%s220 + $0x18] sm:$0xff]
      %v232 = vld [vmem:[%s220 + $0x20] sm:$0xff]
      %v233 = vld [vmem:[%s220 + $0x28] sm:$0xff]
      %v234 = vld [vmem:[%s220 + $0x30] sm:$0xff]
      %v235 = vld [vmem:[%s220 + $0x38] sm:$0xff]
      %v236 = vld [vmem:[%s220 + $0x40] sm:$0xff]
      %v237 = vld [vmem:[%s220 + $0x48] sm:$0xff]
      %v238 = vld [vmem:[%s220 + $0x50] sm:$0xff]
      %v239 = vld [vmem:[%s220 + $0x58] sm:$0xff]
      %v240 = vld [vmem:[%s220 + $0x60] sm:$0xff]
      %v241 = vld [vmem:[%s220 + $0x68] sm:$0xff]
      %v242 = vld [vmem:[%s220 + $0x70] sm:$0xff]
      %v243 = vld [vmem:[%s220 + $0x78] sm:$0xff]
      %v244 = vld [vmem:[%s220 + $0x80] sm:$0xff]
      %v245 = vld [vmem:[%s220 + $0x88] sm:$0xff]
      %v246 = vld [vmem:[%s220 + $0x90] sm:$0xff]
      %v247 = vld [vmem:[%s220 + $0x98] sm:$0xff]
      %v248 = vld [vmem:[%s220 + $0xa0] sm:$0xff]
      %v249 = vld [vmem:[%s220 + $0xa8] sm:$0xff]
      %v250 = vld [vmem:[%s220 + $0xb0] sm:$0xff]
      %v251 = vld [vmem:[%s220 + $0xb8] sm:$0xff]
      %v252 = vld [vmem:[%s220 + $0xc0] sm:$0xff]
      %v253 = vld [vmem:[%s220 + $0xc8] sm:$0xff]
      %v254 = vld [vmem:[%s220 + $0xd0] sm:$0xff]
      %v255 = vld [vmem:[%s220 + $0xd8] sm:$0xff]
      %v256 = vld [vmem:[%s220 + $0xe0] sm:$0xff]
      %v257 = vld [vmem:[%s220 + $0xe8] sm:$0xff]
      %v258 = vld [vmem:[%s220 + $0xf0] sm:$0xff]
      %v259 = vld [vmem:[%s220 + $0xf8] sm:$0xff]
      %v260 = vld [vmem:[%s4] sm:$0xff]
      %v261 = vld [vmem:[%s4 + $0x8] sm:$0xff]
      %v262 = vld [vmem:[%s4 + $0x10] sm:$0xff]
      %v263 = vld [vmem:[%s4 + $0x18] sm:$0xff]
      %vm264 = vcmask 261120
      %v266 = vsel %vm264, %v228, 0
      %v269 = vsel %vm264, %v229, 0
      %v272 = vsel %vm264, %v230, 0
      %v275 = vsel %vm264, %v231, 0
      %v278 = vsel %vm264, %v232, 0
      %v281 = vsel %vm264, %v233, 0
      %v284 = vsel %vm264, %v234, 0
      %v287 = vsel %vm264, %v235, 0
      %v290 = vsel %vm264, %v236, 0
      %v293 = vsel %vm264, %v237, 0
      %v296 = vsel %vm264, %v238, 0
      %v299 = vsel %vm264, %v239, 0
      %v302 = vsel %vm264, %v240, 0
      %v305 = vsel %vm264, %v241, 0
      %v308 = vsel %vm264, %v242, 0
      %v311 = vsel %vm264, %v243, 0
      %v314 = vsel %vm264, %v244, 0
      %v317 = vsel %vm264, %v245, 0
      %v320 = vsel %vm264, %v246, 0
      %v323 = vsel %vm264, %v247, 0
      %v326 = vsel %vm264, %v248, 0
      %v329 = vsel %vm264, %v249, 0
      %v332 = vsel %vm264, %v250, 0
      %v335 = vsel %vm264, %v251, 0
      %v338 = vsel %vm264, %v252, 0
      %v341 = vsel %vm264, %v253, 0
      %v344 = vsel %vm264, %v254, 0
      %v347 = vsel %vm264, %v255, 0
      %v350 = vsel %vm264, %v256, 0
      %v353 = vsel %vm264, %v257, 0
      %v356 = vsel %vm264, %v258, 0
      %v359 = vsel %vm264, %v259, 0
      %361 = vmatprep.subr.mxu0 0.0
      %362 = vmatpush1.msra.mxu0 0.0
      %363 = vmatprep.subr.mxu0 0.0
      %364 = vmatpush1.msra.mxu0 0.0
      %365 = vmatprep.subr.mxu0 0.0
      %366 = vmatpush1.msra.mxu0 0.0
      %367 = vmatprep.subr.mxu0 0.0
      %368 = vmatpush1.msra.mxu0 0.0
      %369 = vmatprep.subr.mxu0 0.0
      %370 = vmatpush1.msra.mxu0 0.0
      %371 = vmatprep.subr.mxu0 0.0
      %372 = vmatpush1.msra.mxu0 0.0
      %373 = vmatprep.subr.mxu0 0.0
      %374 = vmatpush1.msra.mxu0 0.0
      %375 = vmatprep.subr.mxu0 0.0
      %376 = vmatpush1.msra.mxu0 0.0
      %377 = vmatprep.subr.mxu0 0.0
      %378 = vmatpush1.msra.mxu0 0.0
      %379 = vmatprep.subr.mxu0 0.0
      %380 = vmatpush1.msra.mxu0 0.0
      %381 = vmatprep.subr.mxu0 0.0
      %382 = vmatpush1.msra.mxu0 0.0
      %383 = vmatprep.subr.mxu0 0.0
      %384 = vmatpush1.msra.mxu0 0.0
      %385 = vmatprep.subr.mxu0 0.0
      %386 = vmatpush1.msra.mxu0 %v263
      %387 = vmatprep.subr.mxu0 0.0
      %388 = vmatpush1.msra.mxu0 %v262
      %389 = vmatprep.subr.mxu0 0.0
      %390 = vmatpush1.msra.mxu0 %v261
      %391 = vmatprep.subr.mxu0 0.0
      %392 = vmatpush1.msra.mxu0 %v260
      %393 = vmatprep.subr.mxu0 0.0
      %394 = vmatpush2.msra.mxu0 0.0
      %395 = vmatprep.subr.mxu0 0.0
      %396 = vmatpush2.msra.mxu0 0.0
      %397 = vmatprep.subr.mxu0 0.0
      %398 = vmatpush2.msra.mxu0 0.0
      %399 = vmatprep.subr.mxu0 0.0
      %400 = vmatpush2.msra.mxu0 0.0
      %401 = vmatprep.subr.mxu0 0.0
      %402 = vmatpush2.msra.mxu0 0.0
      %403 = vmatprep.subr.mxu0 0.0
      %404 = vmatpush2.msra.mxu0 0.0
      %405 = vmatprep.subr.mxu0 0.0
      %406 = vmatpush2.msra.mxu0 0.0
      %407 = vmatprep.subr.mxu0 0.0
      %408 = vmatpush2.msra.mxu0 0.0
      %409 = vmatprep.subr.mxu0 0.0
      %410 = vmatpush2.msra.mxu0 0.0
      %411 = vmatprep.subr.mxu0 0.0
      %412 = vmatpush2.msra.mxu0 0.0
      %413 = vmatprep.subr.mxu0 0.0
      %414 = vmatpush2.msra.mxu0 0.0
      %415 = vmatprep.subr.mxu0 0.0
      %416 = vmatpush2.msra.mxu0 0.0
      %417 = vmatprep.subr.mxu0 0.0
      %418 = vmatpush2.msra.mxu0 0.0
      %419 = vmatprep.subr.mxu0 0.0
      %420 = vmatpush2.msra.mxu0 0.0
      %421 = vmatprep.subr.mxu0 0.0
      %422 = vmatpush2.msra.mxu0 0.0
      %423 = vmatprep.subr.mxu0 0.0
      %424 = vmatpush2.msra.mxu0 0.0
      %425 = vmatprep.mubr.f32.mxu0 0.0
      %426 = vmatmul.mubr.f32.gmra.mxu0 %v266
      %v427 = vpop.f32.mrf.mxu0
      %v428 = vadd.f32 0.0, %v427
      %v429 = vpop.f32.mrf.mxu0
      %430 = vmatprep.mubr.f32.mxu0 0.0
      %431 = vmatmul.mubr.f32.gmra.mxu0 %v269
      %v432 = vpop.f32.mrf.mxu0
      %v433 = vadd.f32 0.0, %v432
      %v434 = vpop.f32.mrf.mxu0
      %435 = vmatprep.mubr.f32.mxu0 0.0
      %436 = vmatmul.mubr.f32.gmra.mxu0 %v272
      %v437 = vpop.f32.mrf.mxu0
      %v438 = vadd.f32 0.0, %v437
      %v439 = vpop.f32.mrf.mxu0
      %440 = vmatprep.mubr.f32.mxu0 0.0
      %441 = vmatmul.mubr.f32.gmra.mxu0 %v275
      %v442 = vpop.f32.mrf.mxu0
      %v443 = vadd.f32 0.0, %v442
      %v444 = vpop.f32.mrf.mxu0
      %445 = vmatprep.mubr.f32.mxu0 0.0
      %446 = vmatmul.mubr.f32.gmra.mxu0 %v278
      %v447 = vpop.f32.mrf.mxu0
      %v448 = vadd.f32 0.0, %v447
      %v449 = vpop.f32.mrf.mxu0
      %450 = vmatprep.mubr.f32.mxu0 0.0
      %451 = vmatmul.mubr.f32.gmra.mxu0 %v281
      %v452 = vpop.f32.mrf.mxu0
      %v453 = vadd.f32 0.0, %v452
      %v454 = vpop.f32.mrf.mxu0
      %455 = vmatprep.mubr.f32.mxu0 0.0
      %456 = vmatmul.mubr.f32.gmra.mxu0 %v284
      %v457 = vpop.f32.mrf.mxu0
      %v458 = vadd.f32 0.0, %v457
      %v459 = vpop.f32.mrf.mxu0
      %460 = vmatprep.mubr.f32.mxu0 0.0
      %461 = vmatmul.mubr.f32.gmra.mxu0 %v287
      %v462 = vpop.f32.mrf.mxu0
      %v463 = vadd.f32 0.0, %v462
      %v464 = vpop.f32.mrf.mxu0
      %465 = vmatprep.mubr.f32.mxu0 0.0
      %466 = vmatmul.mubr.f32.gmra.mxu0 %v290
      %v467 = vpop.f32.mrf.mxu0
      %v468 = vadd.f32 0.0, %v467
      %v469 = vpop.f32.mrf.mxu0
      %470 = vmatprep.mubr.f32.mxu0 0.0
      %471 = vmatmul.mubr.f32.gmra.mxu0 %v293
      %v472 = vpop.f32.mrf.mxu0
      %v473 = vadd.f32 0.0, %v472
      %v474 = vpop.f32.mrf.mxu0
      %475 = vmatprep.mubr.f32.mxu0 0.0
      %476 = vmatmul.mubr.f32.gmra.mxu0 %v296
      %v477 = vpop.f32.mrf.mxu0
      %v478 = vadd.f32 0.0, %v477
      %v479 = vpop.f32.mrf.mxu0
      %480 = vmatprep.mubr.f32.mxu0 0.0
      %481 = vmatmul.mubr.f32.gmra.mxu0 %v299
      %v482 = vpop.f32.mrf.mxu0
      %v483 = vadd.f32 0.0, %v482
      %v484 = vpop.f32.mrf.mxu0
      %485 = vmatprep.mubr.f32.mxu0 0.0
      %486 = vmatmul.mubr.f32.gmra.mxu0 %v302
      %v487 = vpop.f32.mrf.mxu0
      %v488 = vadd.f32 0.0, %v487
      %v489 = vpop.f32.mrf.mxu0
      %490 = vmatprep.mubr.f32.mxu0 0.0
      %491 = vmatmul.mubr.f32.gmra.mxu0 %v305
      %v492 = vpop.f32.mrf.mxu0
      %v493 = vadd.f32 0.0, %v492
      %v494 = vpop.f32.mrf.mxu0
      %495 = vmatprep.mubr.f32.mxu0 0.0
      %496 = vmatmul.mubr.f32.gmra.mxu0 %v308
      %v497 = vpop.f32.mrf.mxu0
      %v498 = vadd.f32 0.0, %v497
      %v499 = vpop.f32.mrf.mxu0
      %500 = vmatprep.mubr.f32.mxu0 0.0
      %501 = vmatmul.mubr.f32.gmra.mxu0 %v311
      %v502 = vpop.f32.mrf.mxu0
      %v503 = vadd.f32 0.0, %v502
      %v504 = vpop.f32.mrf.mxu0
      %505 = vmatprep.mubr.f32.mxu0 0.0
      %506 = vmatmul.mubr.f32.gmra.mxu0 %v314
      %v507 = vpop.f32.mrf.mxu0
      %v508 = vadd.f32 0.0, %v507
      %v509 = vpop.f32.mrf.mxu0
      %510 = vmatprep.mubr.f32.mxu0 0.0
      %511 = vmatmul.mubr.f32.gmra.mxu0 %v317
      %v512 = vpop.f32.mrf.mxu0
      %v513 = vadd.f32 0.0, %v512
      %v514 = vpop.f32.mrf.mxu0
      %515 = vmatprep.mubr.f32.mxu0 0.0
      %516 = vmatmul.mubr.f32.gmra.mxu0 %v320
      %v517 = vpop.f32.mrf.mxu0
      %v518 = vadd.f32 0.0, %v517
      %v519 = vpop.f32.mrf.mxu0
      %520 = vmatprep.mubr.f32.mxu0 0.0
      %521 = vmatmul.mubr.f32.gmra.mxu0 %v323
      %v522 = vpop.f32.mrf.mxu0
      %v523 = vadd.f32 0.0, %v522
      %v524 = vpop.f32.mrf.mxu0
      %525 = vmatprep.mubr.f32.mxu0 0.0
      %526 = vmatmul.mubr.f32.gmra.mxu0 %v326
      %v527 = vpop.f32.mrf.mxu0
      %v528 = vadd.f32 0.0, %v527
      %v529 = vpop.f32.mrf.mxu0
      %530 = vmatprep.mubr.f32.mxu0 0.0
      %531 = vmatmul.mubr.f32.gmra.mxu0 %v329
      %v532 = vpop.f32.mrf.mxu0
      %v533 = vadd.f32 0.0, %v532
      %v534 = vpop.f32.mrf.mxu0
      %535 = vmatprep.mubr.f32.mxu0 0.0
      %536 = vmatmul.mubr.f32.gmra.mxu0 %v332
      %v537 = vpop.f32.mrf.mxu0
      %v538 = vadd.f32 0.0, %v537
      %v539 = vpop.f32.mrf.mxu0
      %540 = vmatprep.mubr.f32.mxu0 0.0
      %541 = vmatmul.mubr.f32.gmra.mxu0 %v335
      %v542 = vpop.f32.mrf.mxu0
      %v543 = vadd.f32 0.0, %v542
      %v544 = vpop.f32.mrf.mxu0
      %545 = vmatprep.mubr.f32.mxu0 0.0
      %546 = vmatmul.mubr.f32.gmra.mxu0 %v338
      %v547 = vpop.f32.mrf.mxu0
      %v548 = vadd.f32 0.0, %v547
      %v549 = vpop.f32.mrf.mxu0
      %550 = vmatprep.mubr.f32.mxu0 0.0
      %551 = vmatmul.mubr.f32.gmra.mxu0 %v341
      %v552 = vpop.f32.mrf.mxu0
      %v553 = vadd.f32 0.0, %v552
      %v554 = vpop.f32.mrf.mxu0
      %555 = vmatprep.mubr.f32.mxu0 0.0
      %556 = vmatmul.mubr.f32.gmra.mxu0 %v344
      %v557 = vpop.f32.mrf.mxu0
      %v558 = vadd.f32 0.0, %v557
      %v559 = vpop.f32.mrf.mxu0
      %560 = vmatprep.mubr.f32.mxu0 0.0
      %561 = vmatmul.mubr.f32.gmra.mxu0 %v347
      %v562 = vpop.f32.mrf.mxu0
      %v563 = vadd.f32 0.0, %v562
      %v564 = vpop.f32.mrf.mxu0
      %565 = vmatprep.mubr.f32.mxu0 0.0
      %566 = vmatmul.mubr.f32.gmra.mxu0 %v350
      %v567 = vpop.f32.mrf.mxu0
      %v568 = vadd.f32 0.0, %v567
      %v569 = vpop.f32.mrf.mxu0
      %570 = vmatprep.mubr.f32.mxu0 0.0
      %571 = vmatmul.mubr.f32.gmra.mxu0 %v353
      %v572 = vpop.f32.mrf.mxu0
      %v573 = vadd.f32 0.0, %v572
      %v574 = vpop.f32.mrf.mxu0
      %575 = vmatprep.mubr.f32.mxu0 0.0
      %576 = vmatmul.mubr.f32.gmra.mxu0 %v356
      %v577 = vpop.f32.mrf.mxu0
      %v578 = vadd.f32 0.0, %v577
      %v579 = vpop.f32.mrf.mxu0
      %580 = vmatprep.mubr.f32.mxu0 0.0
      %581 = vmatmul.mubr.f32.gmra.mxu0 %v359
      %v582 = vpop.f32.mrf.mxu0
      %v583 = vadd.f32 0.0, %v582
      %v584 = vpop.f32.mrf.mxu0
      %585 = vdwg.mxu0
      %v587 = vsel %vm264, %v428, 0
      %589 = vmatprep.subr.mxu0 0.0
      %590 = vmatpush1.xpose.msra.mxu0 0.0
      %591 = vmatprep.subr.mxu0 0.0
      %592 = vmatpush1.xpose.msra.mxu0 0.0
      %593 = vmatprep.subr.mxu0 0.0
      %594 = vmatpush1.xpose.msra.mxu0 0.0
      %595 = vmatprep.subr.mxu0 0.0
      %596 = vmatpush1.xpose.msra.mxu0 0.0
      %597 = vmatprep.subr.mxu0 0.0
      %598 = vmatpush1.xpose.msra.mxu0 0.0
      %599 = vmatprep.subr.mxu0 0.0
      %600 = vmatpush1.xpose.msra.mxu0 0.0
      %601 = vmatprep.subr.mxu0 0.0
      %602 = vmatpush1.xpose.msra.mxu0 0.0
      %603 = vmatprep.subr.mxu0 0.0
      %604 = vmatpush1.xpose.msra.mxu0 0.0
      %605 = vmatprep.subr.mxu0 0.0
      %606 = vmatpush1.xpose.msra.mxu0 0.0
      %607 = vmatprep.subr.mxu0 0.0
      %608 = vmatpush1.xpose.msra.mxu0 0.0
      %609 = vmatprep.subr.mxu0 0.0
      %610 = vmatpush1.xpose.msra.mxu0 0.0
      %611 = vmatprep.subr.mxu0 0.0
      %612 = vmatpush1.xpose.msra.mxu0 0.0
      %613 = vmatprep.subr.mxu0 0.0
      %614 = vmatpush1.xpose.msra.mxu0 0.0
      %615 = vmatprep.subr.mxu0 0.0
      %616 = vmatpush1.xpose.msra.mxu0 0.0
      %617 = vmatprep.subr.mxu0 0.0
      %618 = vmatpush1.xpose.msra.mxu0 0.0
      %619 = vmatprep.subr.mxu0 0.0
      %620 = vmatpush1.xpose.msra.mxu0 %v587
      %621 = vmatprep.subr.mxu0 0.0
      %622 = vmatpush2.xpose.msra.mxu0 0.0
      %623 = vmatprep.subr.mxu0 0.0
      %624 = vmatpush2.xpose.msra.mxu0 0.0
      %625 = vmatprep.subr.mxu0 0.0
      %626 = vmatpush2.xpose.msra.mxu0 0.0
      %627 = vmatprep.subr.mxu0 0.0
      %628 = vmatpush2.xpose.msra.mxu0 0.0
      %629 = vmatprep.subr.mxu0 0.0
      %630 = vmatpush2.xpose.msra.mxu0 0.0
      %631 = vmatprep.subr.mxu0 0.0
      %632 = vmatpush2.xpose.msra.mxu0 0.0
      %633 = vmatprep.subr.mxu0 0.0
      %634 = vmatpush2.xpose.msra.mxu0 0.0
      %635 = vmatprep.subr.mxu0 0.0
      %636 = vmatpush2.xpose.msra.mxu0 0.0
      %637 = vmatprep.subr.mxu0 0.0
      %638 = vmatpush2.xpose.msra.mxu0 0.0
      %639 = vmatprep.subr.mxu0 0.0
      %640 = vmatpush2.xpose.msra.mxu0 0.0
      %641 = vmatprep.subr.mxu0 0.0
      %642 = vmatpush2.xpose.msra.mxu0 0.0
      %643 = vmatprep.subr.mxu0 0.0
      %644 = vmatpush2.xpose.msra.mxu0 0.0
      %645 = vmatprep.subr.mxu0 0.0
      %646 = vmatpush2.xpose.msra.mxu0 0.0
      %647 = vmatprep.subr.mxu0 0.0
      %648 = vmatpush2.xpose.msra.mxu0 0.0
      %649 = vmatprep.subr.mxu0 0.0
      %650 = vmatpush2.xpose.msra.mxu0 0.0
      %651 = vmatprep.subr.mxu0 0.0
      %652 = vmatpush2.xpose.msra.mxu0 0.0
      %653 = vmatprep.mubr.f32.mxu0 0.0
      %654 = vmatmul.mubr.f32.gmra.mxu0 %v587
      %v655 = vpop.f32.mrf.mxu0
      %v656 = vadd.f32 0.0, %v655
      %v657 = vpop.f32.mrf.mxu0
      %658 = vdwg.mxu0
      %v660 = vsel %vm264, %v433, 0
      %662 = vmatprep.subr.mxu0 0.0
      %663 = vmatpush1.xpose.msra.mxu0 0.0
      %664 = vmatprep.subr.mxu0 0.0
      %665 = vmatpush1.xpose.msra.mxu0 0.0
      %666 = vmatprep.subr.mxu0 0.0
      %667 = vmatpush1.xpose.msra.mxu0 0.0
      %668 = vmatprep.subr.mxu0 0.0
      %669 = vmatpush1.xpose.msra.mxu0 0.0
      %670 = vmatprep.subr.mxu0 0.0
      %671 = vmatpush1.xpose.msra.mxu0 0.0
      %672 = vmatprep.subr.mxu0 0.0
      %673 = vmatpush1.xpose.msra.mxu0 0.0
      %674 = vmatprep.subr.mxu0 0.0
      %675 = vmatpush1.xpose.msra.mxu0 0.0
      %676 = vmatprep.subr.mxu0 0.0
      %677 = vmatpush1.xpose.msra.mxu0 0.0
      %678 = vmatprep.subr.mxu0 0.0
      %679 = vmatpush1.xpose.msra.mxu0 0.0
      %680 = vmatprep.subr.mxu0 0.0
      %681 = vmatpush1.xpose.msra.mxu0 0.0
      %682 = vmatprep.subr.mxu0 0.0
      %683 = vmatpush1.xpose.msra.mxu0 0.0
      %684 = vmatprep.subr.mxu0 0.0
      %685 = vmatpush1.xpose.msra.mxu0 0.0
      %686 = vmatprep.subr.mxu0 0.0
      %687 = vmatpush1.xpose.msra.mxu0 0.0
      %688 = vmatprep.subr.mxu0 0.0
      %689 = vmatpush1.xpose.msra.mxu0 0.0
      %690 = vmatprep.subr.mxu0 0.0
      %691 = vmatpush1.xpose.msra.mxu0 0.0
      %692 = vmatprep.subr.mxu0 0.0
      %693 = vmatpush1.xpose.msra.mxu0 %v660
      %694 = vmatprep.subr.mxu0 0.0
      %695 = vmatpush2.xpose.msra.mxu0 0.0
      %696 = vmatprep.subr.mxu0 0.0
      %697 = vmatpush2.xpose.msra.mxu0 0.0
      %698 = vmatprep.subr.mxu0 0.0
      %699 = vmatpush2.xpose.msra.mxu0 0.0
      %700 = vmatprep.subr.mxu0 0.0
      %701 = vmatpush2.xpose.msra.mxu0 0.0
      %702 = vmatprep.subr.mxu0 0.0
      %703 = vmatpush2.xpose.msra.mxu0 0.0
      %704 = vmatprep.subr.mxu0 0.0
      %705 = vmatpush2.xpose.msra.mxu0 0.0
      %706 = vmatprep.subr.mxu0 0.0
      %707 = vmatpush2.xpose.msra.mxu0 0.0
      %708 = vmatprep.subr.mxu0 0.0
      %709 = vmatpush2.xpose.msra.mxu0 0.0
      %710 = vmatprep.subr.mxu0 0.0
      %711 = vmatpush2.xpose.msra.mxu0 0.0
      %712 = vmatprep.subr.mxu0 0.0
      %713 = vmatpush2.xpose.msra.mxu0 0.0
      %714 = vmatprep.subr.mxu0 0.0
      %715 = vmatpush2.xpose.msra.mxu0 0.0
      %716 = vmatprep.subr.mxu0 0.0
      %717 = vmatpush2.xpose.msra.mxu0 0.0
      %718 = vmatprep.subr.mxu0 0.0
      %719 = vmatpush2.xpose.msra.mxu0 0.0
      %720 = vmatprep.subr.mxu0 0.0
      %721 = vmatpush2.xpose.msra.mxu0 0.0
      %722 = vmatprep.subr.mxu0 0.0
      %723 = vmatpush2.xpose.msra.mxu0 0.0
      %724 = vmatprep.subr.mxu0 0.0
      %725 = vmatpush2.xpose.msra.mxu0 0.0
      %726 = vmatprep.mubr.f32.mxu0 0.0
      %727 = vmatmul.mubr.f32.gmra.mxu0 %v660
      %v728 = vpop.f32.mrf.mxu0
      %v729 = vadd.f32 0.0, %v728
      %v730 = vpop.f32.mrf.mxu0
      %731 = vdwg.mxu0
      %v733 = vsel %vm264, %v438, 0
      %735 = vmatprep.subr.mxu0 0.0
      %736 = vmatpush1.xpose.msra.mxu0 0.0
      %737 = vmatprep.subr.mxu0 0.0
      %738 = vmatpush1.xpose.msra.mxu0 0.0
      %739 = vmatprep.subr.mxu0 0.0
      %740 = vmatpush1.xpose.msra.mxu0 0.0
      %741 = vmatprep.subr.mxu0 0.0
      %742 = vmatpush1.xpose.msra.mxu0 0.0
      %743 = vmatprep.subr.mxu0 0.0
      %744 = vmatpush1.xpose.msra.mxu0 0.0
      %745 = vmatprep.subr.mxu0 0.0
      %746 = vmatpush1.xpose.msra.mxu0 0.0
      %747 = vmatprep.subr.mxu0 0.0
      %748 = vmatpush1.xpose.msra.mxu0 0.0
      %749 = vmatprep.subr.mxu0 0.0
      %750 = vmatpush1.xpose.msra.mxu0 0.0
      %751 = vmatprep.subr.mxu0 0.0
      %752 = vmatpush1.xpose.msra.mxu0 0.0
      %753 = vmatprep.subr.mxu0 0.0
      %754 = vmatpush1.xpose.msra.mxu0 0.0
      %755 = vmatprep.subr.mxu0 0.0
      %756 = vmatpush1.xpose.msra.mxu0 0.0
      %757 = vmatprep.subr.mxu0 0.0
      %758 = vmatpush1.xpose.msra.mxu0 0.0
      %759 = vmatprep.subr.mxu0 0.0
      %760 = vmatpush1.xpose.msra.mxu0 0.0
      %761 = vmatprep.subr.mxu0 0.0
      %762 = vmatpush1.xpose.msra.mxu0 0.0
      %763 = vmatprep.subr.mxu0 0.0
      %764 = vmatpush1.xpose.msra.mxu0 0.0
      %765 = vmatprep.subr.mxu0 0.0
      %766 = vmatpush1.xpose.msra.mxu0 %v733
      %767 = vmatprep.subr.mxu0 0.0
      %768 = vmatpush2.xpose.msra.mxu0 0.0
      %769 = vmatprep.subr.mxu0 0.0
      %770 = vmatpush2.xpose.msra.mxu0 0.0
      %771 = vmatprep.subr.mxu0 0.0
      %772 = vmatpush2.xpose.msra.mxu0 0.0
      %773 = vmatprep.subr.mxu0 0.0
      %774 = vmatpush2.xpose.msra.mxu0 0.0
      %775 = vmatprep.subr.mxu0 0.0
      %776 = vmatpush2.xpose.msra.mxu0 0.0
      %777 = vmatprep.subr.mxu0 0.0
      %778 = vmatpush2.xpose.msra.mxu0 0.0
      %779 = vmatprep.subr.mxu0 0.0
      %780 = vmatpush2.xpose.msra.mxu0 0.0
      %781 = vmatprep.subr.mxu0 0.0
      %782 = vmatpush2.xpose.msra.mxu0 0.0
      %783 = vmatprep.subr.mxu0 0.0
      %784 = vmatpush2.xpose.msra.mxu0 0.0
      %785 = vmatprep.subr.mxu0 0.0
      %786 = vmatpush2.xpose.msra.mxu0 0.0
      %787 = vmatprep.subr.mxu0 0.0
      %788 = vmatpush2.xpose.msra.mxu0 0.0
      %789 = vmatprep.subr.mxu0 0.0
      %790 = vmatpush2.xpose.msra.mxu0 0.0
      %791 = vmatprep.subr.mxu0 0.0
      %792 = vmatpush2.xpose.msra.mxu0 0.0
      %793 = vmatprep.subr.mxu0 0.0
      %794 = vmatpush2.xpose.msra.mxu0 0.0
      %795 = vmatprep.subr.mxu0 0.0
      %796 = vmatpush2.xpose.msra.mxu0 0.0
      %797 = vmatprep.subr.mxu0 0.0
      %798 = vmatpush2.xpose.msra.mxu0 0.0
      %799 = vmatprep.mubr.f32.mxu0 0.0
      %800 = vmatmul.mubr.f32.gmra.mxu0 %v733
      %v801 = vpop.f32.mrf.mxu0
      %v802 = vadd.f32 0.0, %v801
      %v803 = vpop.f32.mrf.mxu0
      %804 = vdwg.mxu0
      %v806 = vsel %vm264, %v443, 0
      %808 = vmatprep.subr.mxu0 0.0
      %809 = vmatpush1.xpose.msra.mxu0 0.0
      %810 = vmatprep.subr.mxu0 0.0
      %811 = vmatpush1.xpose.msra.mxu0 0.0
      %812 = vmatprep.subr.mxu0 0.0
      %813 = vmatpush1.xpose.msra.mxu0 0.0
      %814 = vmatprep.subr.mxu0 0.0
      %815 = vmatpush1.xpose.msra.mxu0 0.0
      %816 = vmatprep.subr.mxu0 0.0
      %817 = vmatpush1.xpose.msra.mxu0 0.0
      %818 = vmatprep.subr.mxu0 0.0
      %819 = vmatpush1.xpose.msra.mxu0 0.0
      %820 = vmatprep.subr.mxu0 0.0
      %821 = vmatpush1.xpose.msra.mxu0 0.0
      %822 = vmatprep.subr.mxu0 0.0
      %823 = vmatpush1.xpose.msra.mxu0 0.0
      %824 = vmatprep.subr.mxu0 0.0
      %825 = vmatpush1.xpose.msra.mxu0 0.0
      %826 = vmatprep.subr.mxu0 0.0
      %827 = vmatpush1.xpose.msra.mxu0 0.0
      %828 = vmatprep.subr.mxu0 0.0
      %829 = vmatpush1.xpose.msra.mxu0 0.0
      %830 = vmatprep.subr.mxu0 0.0
      %831 = vmatpush1.xpose.msra.mxu0 0.0
      %832 = vmatprep.subr.mxu0 0.0
      %833 = vmatpush1.xpose.msra.mxu0 0.0
      %834 = vmatprep.subr.mxu0 0.0
      %835 = vmatpush1.xpose.msra.mxu0 0.0
      %836 = vmatprep.subr.mxu0 0.0
      %837 = vmatpush1.xpose.msra.mxu0 0.0
      %838 = vmatprep.subr.mxu0 0.0
      %839 = vmatpush1.xpose.msra.mxu0 %v806
      %840 = vmatprep.subr.mxu0 0.0
      %841 = vmatpush2.xpose.msra.mxu0 0.0
      %842 = vmatprep.subr.mxu0 0.0
      %843 = vmatpush2.xpose.msra.mxu0 0.0
      %844 = vmatprep.subr.mxu0 0.0
      %845 = vmatpush2.xpose.msra.mxu0 0.0
      %846 = vmatprep.subr.mxu0 0.0
      %847 = vmatpush2.xpose.msra.mxu0 0.0
      %848 = vmatprep.subr.mxu0 0.0
      %849 = vmatpush2.xpose.msra.mxu0 0.0
      %850 = vmatprep.subr.mxu0 0.0
      %851 = vmatpush2.xpose.msra.mxu0 0.0
      %852 = vmatprep.subr.mxu0 0.0
      %853 = vmatpush2.xpose.msra.mxu0 0.0
      %854 = vmatprep.subr.mxu0 0.0
      %855 = vmatpush2.xpose.msra.mxu0 0.0
      %856 = vmatprep.subr.mxu0 0.0
      %857 = vmatpush2.xpose.msra.mxu0 0.0
      %858 = vmatprep.subr.mxu0 0.0
      %859 = vmatpush2.xpose.msra.mxu0 0.0
      %860 = vmatprep.subr.mxu0 0.0
      %861 = vmatpush2.xpose.msra.mxu0 0.0
      %862 = vmatprep.subr.mxu0 0.0
      %863 = vmatpush2.xpose.msra.mxu0 0.0
      %864 = vmatprep.subr.mxu0 0.0
      %865 = vmatpush2.xpose.msra.mxu0 0.0
      %866 = vmatprep.subr.mxu0 0.0
      %867 = vmatpush2.xpose.msra.mxu0 0.0
      %868 = vmatprep.subr.mxu0 0.0
      %869 = vmatpush2.xpose.msra.mxu0 0.0
      %870 = vmatprep.subr.mxu0 0.0
      %871 = vmatpush2.xpose.msra.mxu0 0.0
      %872 = vmatprep.mubr.f32.mxu0 0.0
      %873 = vmatmul.mubr.f32.gmra.mxu0 %v806
      %v874 = vpop.f32.mrf.mxu0
      %v875 = vadd.f32 0.0, %v874
      %v876 = vpop.f32.mrf.mxu0
      %877 = vdwg.mxu0
      %v879 = vsel %vm264, %v448, 0
      %881 = vmatprep.subr.mxu0 0.0
      %882 = vmatpush1.xpose.msra.mxu0 0.0
      %883 = vmatprep.subr.mxu0 0.0
      %884 = vmatpush1.xpose.msra.mxu0 0.0
      %885 = vmatprep.subr.mxu0 0.0
      %886 = vmatpush1.xpose.msra.mxu0 0.0
      %887 = vmatprep.subr.mxu0 0.0
      %888 = vmatpush1.xpose.msra.mxu0 0.0
      %889 = vmatprep.subr.mxu0 0.0
      %890 = vmatpush1.xpose.msra.mxu0 0.0
      %891 = vmatprep.subr.mxu0 0.0
      %892 = vmatpush1.xpose.msra.mxu0 0.0
      %893 = vmatprep.subr.mxu0 0.0
      %894 = vmatpush1.xpose.msra.mxu0 0.0
      %895 = vmatprep.subr.mxu0 0.0
      %896 = vmatpush1.xpose.msra.mxu0 0.0
      %897 = vmatprep.subr.mxu0 0.0
      %898 = vmatpush1.xpose.msra.mxu0 0.0
      %899 = vmatprep.subr.mxu0 0.0
      %900 = vmatpush1.xpose.msra.mxu0 0.0
      %901 = vmatprep.subr.mxu0 0.0
      %902 = vmatpush1.xpose.msra.mxu0 0.0
      %903 = vmatprep.subr.mxu0 0.0
      %904 = vmatpush1.xpose.msra.mxu0 0.0
      %905 = vmatprep.subr.mxu0 0.0
      %906 = vmatpush1.xpose.msra.mxu0 0.0
      %907 = vmatprep.subr.mxu0 0.0
      %908 = vmatpush1.xpose.msra.mxu0 0.0
      %909 = vmatprep.subr.mxu0 0.0
      %910 = vmatpush1.xpose.msra.mxu0 0.0
      %911 = vmatprep.subr.mxu0 0.0
      %912 = vmatpush1.xpose.msra.mxu0 %v879
      %913 = vmatprep.subr.mxu0 0.0
      %914 = vmatpush2.xpose.msra.mxu0 0.0
      %915 = vmatprep.subr.mxu0 0.0
      %916 = vmatpush2.xpose.msra.mxu0 0.0
      %917 = vmatprep.subr.mxu0 0.0
      %918 = vmatpush2.xpose.msra.mxu0 0.0
      %919 = vmatprep.subr.mxu0 0.0
      %920 = vmatpush2.xpose.msra.mxu0 0.0
      %921 = vmatprep.subr.mxu0 0.0
      %922 = vmatpush2.xpose.msra.mxu0 0.0
      %923 = vmatprep.subr.mxu0 0.0
      %924 = vmatpush2.xpose.msra.mxu0 0.0
      %925 = vmatprep.subr.mxu0 0.0
      %926 = vmatpush2.xpose.msra.mxu0 0.0
      %927 = vmatprep.subr.mxu0 0.0
      %928 = vmatpush2.xpose.msra.mxu0 0.0
      %929 = vmatprep.subr.mxu0 0.0
      %930 = vmatpush2.xpose.msra.mxu0 0.0
      %931 = vmatprep.subr.mxu0 0.0
      %932 = vmatpush2.xpose.msra.mxu0 0.0
      %933 = vmatprep.subr.mxu0 0.0
      %934 = vmatpush2.xpose.msra.mxu0 0.0
      %935 = vmatprep.subr.mxu0 0.0
      %936 = vmatpush2.xpose.msra.mxu0 0.0
      %937 = vmatprep.subr.mxu0 0.0
      %938 = vmatpush2.xpose.msra.mxu0 0.0
      %939 = vmatprep.subr.mxu0 0.0
      %940 = vmatpush2.xpose.msra.mxu0 0.0
      %941 = vmatprep.subr.mxu0 0.0
      %942 = vmatpush2.xpose.msra.mxu0 0.0
      %943 = vmatprep.subr.mxu0 0.0
      %944 = vmatpush2.xpose.msra.mxu0 0.0
      %945 = vmatprep.mubr.f32.mxu0 0.0
      %946 = vmatmul.mubr.f32.gmra.mxu0 %v879
      %v947 = vpop.f32.mrf.mxu0
      %v948 = vadd.f32 0.0, %v947
      %v949 = vpop.f32.mrf.mxu0
      %950 = vdwg.mxu0
      %v952 = vsel %vm264, %v453, 0
      %954 = vmatprep.subr.mxu0 0.0
      %955 = vmatpush1.xpose.msra.mxu0 0.0
      %956 = vmatprep.subr.mxu0 0.0
      %957 = vmatpush1.xpose.msra.mxu0 0.0
      %958 = vmatprep.subr.mxu0 0.0
      %959 = vmatpush1.xpose.msra.mxu0 0.0
      %960 = vmatprep.subr.mxu0 0.0
      %961 = vmatpush1.xpose.msra.mxu0 0.0
      %962 = vmatprep.subr.mxu0 0.0
      %963 = vmatpush1.xpose.msra.mxu0 0.0
      %964 = vmatprep.subr.mxu0 0.0
      %965 = vmatpush1.xpose.msra.mxu0 0.0
      %966 = vmatprep.subr.mxu0 0.0
      %967 = vmatpush1.xpose.msra.mxu0 0.0
      %968 = vmatprep.subr.mxu0 0.0
      %969 = vmatpush1.xpose.msra.mxu0 0.0
      %970 = vmatprep.subr.mxu0 0.0
      %971 = vmatpush1.xpose.msra.mxu0 0.0
      %972 = vmatprep.subr.mxu0 0.0
      %973 = vmatpush1.xpose.msra.mxu0 0.0
      %974 = vmatprep.subr.mxu0 0.0
      %975 = vmatpush1.xpose.msra.mxu0 0.0
      %976 = vmatprep.subr.mxu0 0.0
      %977 = vmatpush1.xpose.msra.mxu0 0.0
      %978 = vmatprep.subr.mxu0 0.0
      %979 = vmatpush1.xpose.msra.mxu0 0.0
      %980 = vmatprep.subr.mxu0 0.0
      %981 = vmatpush1.xpose.msra.mxu0 0.0
      %982 = vmatprep.subr.mxu0 0.0
      %983 = vmatpush1.xpose.msra.mxu0 0.0
      %984 = vmatprep.subr.mxu0 0.0
      %985 = vmatpush1.xpose.msra.mxu0 %v952
      %986 = vmatprep.subr.mxu0 0.0
      %987 = vmatpush2.xpose.msra.mxu0 0.0
      %988 = vmatprep.subr.mxu0 0.0
      %989 = vmatpush2.xpose.msra.mxu0 0.0
      %990 = vmatprep.subr.mxu0 0.0
      %991 = vmatpush2.xpose.msra.mxu0 0.0
      %992 = vmatprep.subr.mxu0 0.0
      %993 = vmatpush2.xpose.msra.mxu0 0.0
      %994 = vmatprep.subr.mxu0 0.0
      %995 = vmatpush2.xpose.msra.mxu0 0.0
      %996 = vmatprep.subr.mxu0 0.0
      %997 = vmatpush2.xpose.msra.mxu0 0.0
      %998 = vmatprep.subr.mxu0 0.0
      %999 = vmatpush2.xpose.msra.mxu0 0.0
      %1000 = vmatprep.subr.mxu0 0.0
      %1001 = vmatpush2.xpose.msra.mxu0 0.0
      %1002 = vmatprep.subr.mxu0 0.0
      %1003 = vmatpush2.xpose.msra.mxu0 0.0
      %1004 = vmatprep.subr.mxu0 0.0
      %1005 = vmatpush2.xpose.msra.mxu0 0.0
      %1006 = vmatprep.subr.mxu0 0.0
      %1007 = vmatpush2.xpose.msra.mxu0 0.0
      %1008 = vmatprep.subr.mxu0 0.0
      %1009 = vmatpush2.xpose.msra.mxu0 0.0
      %1010 = vmatprep.subr.mxu0 0.0
      %1011 = vmatpush2.xpose.msra.mxu0 0.0
      %1012 = vmatprep.subr.mxu0 0.0
      %1013 = vmatpush2.xpose.msra.mxu0 0.0
      %1014 = vmatprep.subr.mxu0 0.0
      %1015 = vmatpush2.xpose.msra.mxu0 0.0
      %1016 = vmatprep.subr.mxu0 0.0
      %1017 = vmatpush2.xpose.msra.mxu0 0.0
      %1018 = vmatprep.mubr.f32.mxu0 0.0
      %1019 = vmatmul.mubr.f32.gmra.mxu0 %v952
      %v1020 = vpop.f32.mrf.mxu0
      %v1021 = vadd.f32 0.0, %v1020
      %v1022 = vpop.f32.mrf.mxu0
      %1023 = vdwg.mxu0
      %v1025 = vsel %vm264, %v458, 0
      %1027 = vmatprep.subr.mxu0 0.0
      %1028 = vmatpush1.xpose.msra.mxu0 0.0
      %1029 = vmatprep.subr.mxu0 0.0
      %1030 = vmatpush1.xpose.msra.mxu0 0.0
      %1031 = vmatprep.subr.mxu0 0.0
      %1032 = vmatpush1.xpose.msra.mxu0 0.0
      %1033 = vmatprep.subr.mxu0 0.0
      %1034 = vmatpush1.xpose.msra.mxu0 0.0
      %1035 = vmatprep.subr.mxu0 0.0
      %1036 = vmatpush1.xpose.msra.mxu0 0.0
      %1037 = vmatprep.subr.mxu0 0.0
      %1038 = vmatpush1.xpose.msra.mxu0 0.0
      %1039 = vmatprep.subr.mxu0 0.0
      %1040 = vmatpush1.xpose.msra.mxu0 0.0
      %1041 = vmatprep.subr.mxu0 0.0
      %1042 = vmatpush1.xpose.msra.mxu0 0.0
      %1043 = vmatprep.subr.mxu0 0.0
      %1044 = vmatpush1.xpose.msra.mxu0 0.0
      %1045 = vmatprep.subr.mxu0 0.0
      %1046 = vmatpush1.xpose.msra.mxu0 0.0
      %1047 = vmatprep.subr.mxu0 0.0
      %1048 = vmatpush1.xpose.msra.mxu0 0.0
      %1049 = vmatprep.subr.mxu0 0.0
      %1050 = vmatpush1.xpose.msra.mxu0 0.0
      %1051 = vmatprep.subr.mxu0 0.0
      %1052 = vmatpush1.xpose.msra.mxu0 0.0
      %1053 = vmatprep.subr.mxu0 0.0
      %1054 = vmatpush1.xpose.msra.mxu0 0.0
      %1055 = vmatprep.subr.mxu0 0.0
      %1056 = vmatpush1.xpose.msra.mxu0 0.0
      %1057 = vmatprep.subr.mxu0 0.0
      %1058 = vmatpush1.xpose.msra.mxu0 %v1025
      %1059 = vmatprep.subr.mxu0 0.0
      %1060 = vmatpush2.xpose.msra.mxu0 0.0
      %1061 = vmatprep.subr.mxu0 0.0
      %1062 = vmatpush2.xpose.msra.mxu0 0.0
      %1063 = vmatprep.subr.mxu0 0.0
      %1064 = vmatpush2.xpose.msra.mxu0 0.0
      %1065 = vmatprep.subr.mxu0 0.0
      %1066 = vmatpush2.xpose.msra.mxu0 0.0
      %1067 = vmatprep.subr.mxu0 0.0
      %1068 = vmatpush2.xpose.msra.mxu0 0.0
      %1069 = vmatprep.subr.mxu0 0.0
      %1070 = vmatpush2.xpose.msra.mxu0 0.0
      %1071 = vmatprep.subr.mxu0 0.0
      %1072 = vmatpush2.xpose.msra.mxu0 0.0
      %1073 = vmatprep.subr.mxu0 0.0
      %1074 = vmatpush2.xpose.msra.mxu0 0.0
      %1075 = vmatprep.subr.mxu0 0.0
      %1076 = vmatpush2.xpose.msra.mxu0 0.0
      %1077 = vmatprep.subr.mxu0 0.0
      %1078 = vmatpush2.xpose.msra.mxu0 0.0
      %1079 = vmatprep.subr.mxu0 0.0
      %1080 = vmatpush2.xpose.msra.mxu0 0.0
      %1081 = vmatprep.subr.mxu0 0.0
      %1082 = vmatpush2.xpose.msra.mxu0 0.0
      %1083 = vmatprep.subr.mxu0 0.0
      %1084 = vmatpush2.xpose.msra.mxu0 0.0
      %1085 = vmatprep.subr.mxu0 0.0
      %1086 = vmatpush2.xpose.msra.mxu0 0.0
      %1087 = vmatprep.subr.mxu0 0.0
      %1088 = vmatpush2.xpose.msra.mxu0 0.0
      %1089 = vmatprep.subr.mxu0 0.0
      %1090 = vmatpush2.xpose.msra.mxu0 0.0
      %1091 = vmatprep.mubr.f32.mxu0 0.0
      %1092 = vmatmul.mubr.f32.gmra.mxu0 %v1025
      %v1093 = vpop.f32.mrf.mxu0
      %v1094 = vadd.f32 0.0, %v1093
      %v1095 = vpop.f32.mrf.mxu0
      %1096 = vdwg.mxu0
      %v1098 = vsel %vm264, %v463, 0
      %1100 = vmatprep.subr.mxu0 0.0
      %1101 = vmatpush1.xpose.msra.mxu0 0.0
      %1102 = vmatprep.subr.mxu0 0.0
      %1103 = vmatpush1.xpose.msra.mxu0 0.0
      %1104 = vmatprep.subr.mxu0 0.0
      %1105 = vmatpush1.xpose.msra.mxu0 0.0
      %1106 = vmatprep.subr.mxu0 0.0
      %1107 = vmatpush1.xpose.msra.mxu0 0.0
      %1108 = vmatprep.subr.mxu0 0.0
      %1109 = vmatpush1.xpose.msra.mxu0 0.0
      %1110 = vmatprep.subr.mxu0 0.0
      %1111 = vmatpush1.xpose.msra.mxu0 0.0
      %1112 = vmatprep.subr.mxu0 0.0
      %1113 = vmatpush1.xpose.msra.mxu0 0.0
      %1114 = vmatprep.subr.mxu0 0.0
      %1115 = vmatpush1.xpose.msra.mxu0 0.0
      %1116 = vmatprep.subr.mxu0 0.0
      %1117 = vmatpush1.xpose.msra.mxu0 0.0
      %1118 = vmatprep.subr.mxu0 0.0
      %1119 = vmatpush1.xpose.msra.mxu0 0.0
      %1120 = vmatprep.subr.mxu0 0.0
      %1121 = vmatpush1.xpose.msra.mxu0 0.0
      %1122 = vmatprep.subr.mxu0 0.0
      %1123 = vmatpush1.xpose.msra.mxu0 0.0
      %1124 = vmatprep.subr.mxu0 0.0
      %1125 = vmatpush1.xpose.msra.mxu0 0.0
      %1126 = vmatprep.subr.mxu0 0.0
      %1127 = vmatpush1.xpose.msra.mxu0 0.0
      %1128 = vmatprep.subr.mxu0 0.0
      %1129 = vmatpush1.xpose.msra.mxu0 0.0
      %1130 = vmatprep.subr.mxu0 0.0
      %1131 = vmatpush1.xpose.msra.mxu0 %v1098
      %1132 = vmatprep.subr.mxu0 0.0
      %1133 = vmatpush2.xpose.msra.mxu0 0.0
      %1134 = vmatprep.subr.mxu0 0.0
      %1135 = vmatpush2.xpose.msra.mxu0 0.0
      %1136 = vmatprep.subr.mxu0 0.0
      %1137 = vmatpush2.xpose.msra.mxu0 0.0
      %1138 = vmatprep.subr.mxu0 0.0
      %1139 = vmatpush2.xpose.msra.mxu0 0.0
      %1140 = vmatprep.subr.mxu0 0.0
      %1141 = vmatpush2.xpose.msra.mxu0 0.0
      %1142 = vmatprep.subr.mxu0 0.0
      %1143 = vmatpush2.xpose.msra.mxu0 0.0
      %1144 = vmatprep.subr.mxu0 0.0
      %1145 = vmatpush2.xpose.msra.mxu0 0.0
      %1146 = vmatprep.subr.mxu0 0.0
      %1147 = vmatpush2.xpose.msra.mxu0 0.0
      %1148 = vmatprep.subr.mxu0 0.0
      %1149 = vmatpush2.xpose.msra.mxu0 0.0
      %1150 = vmatprep.subr.mxu0 0.0
      %1151 = vmatpush2.xpose.msra.mxu0 0.0
      %1152 = vmatprep.subr.mxu0 0.0
      %1153 = vmatpush2.xpose.msra.mxu0 0.0
      %1154 = vmatprep.subr.mxu0 0.0
      %1155 = vmatpush2.xpose.msra.mxu0 0.0
      %1156 = vmatprep.subr.mxu0 0.0
      %1157 = vmatpush2.xpose.msra.mxu0 0.0
      %1158 = vmatprep.subr.mxu0 0.0
      %1159 = vmatpush2.xpose.msra.mxu0 0.0
      %1160 = vmatprep.subr.mxu0 0.0
      %1161 = vmatpush2.xpose.msra.mxu0 0.0
      %1162 = vmatprep.subr.mxu0 0.0
      %1163 = vmatpush2.xpose.msra.mxu0 0.0
      %1164 = vmatprep.mubr.f32.mxu0 0.0
      %1165 = vmatmul.mubr.f32.gmra.mxu0 %v1098
      %v1166 = vpop.f32.mrf.mxu0
      %v1167 = vadd.f32 0.0, %v1166
      %v1168 = vpop.f32.mrf.mxu0
      %1169 = vdwg.mxu0
      %v1171 = vsel %vm264, %v468, 0
      %1173 = vmatprep.subr.mxu0 0.0
      %1174 = vmatpush1.xpose.msra.mxu0 0.0
      %1175 = vmatprep.subr.mxu0 0.0
      %1176 = vmatpush1.xpose.msra.mxu0 0.0
      %1177 = vmatprep.subr.mxu0 0.0
      %1178 = vmatpush1.xpose.msra.mxu0 0.0
      %1179 = vmatprep.subr.mxu0 0.0
      %1180 = vmatpush1.xpose.msra.mxu0 0.0
      %1181 = vmatprep.subr.mxu0 0.0
      %1182 = vmatpush1.xpose.msra.mxu0 0.0
      %1183 = vmatprep.subr.mxu0 0.0
      %1184 = vmatpush1.xpose.msra.mxu0 0.0
      %1185 = vmatprep.subr.mxu0 0.0
      %1186 = vmatpush1.xpose.msra.mxu0 0.0
      %1187 = vmatprep.subr.mxu0 0.0
      %1188 = vmatpush1.xpose.msra.mxu0 0.0
      %1189 = vmatprep.subr.mxu0 0.0
      %1190 = vmatpush1.xpose.msra.mxu0 0.0
      %1191 = vmatprep.subr.mxu0 0.0
      %1192 = vmatpush1.xpose.msra.mxu0 0.0
      %1193 = vmatprep.subr.mxu0 0.0
      %1194 = vmatpush1.xpose.msra.mxu0 0.0
      %1195 = vmatprep.subr.mxu0 0.0
      %1196 = vmatpush1.xpose.msra.mxu0 0.0
      %1197 = vmatprep.subr.mxu0 0.0
      %1198 = vmatpush1.xpose.msra.mxu0 0.0
      %1199 = vmatprep.subr.mxu0 0.0
      %1200 = vmatpush1.xpose.msra.mxu0 0.0
      %1201 = vmatprep.subr.mxu0 0.0
      %1202 = vmatpush1.xpose.msra.mxu0 0.0
      %1203 = vmatprep.subr.mxu0 0.0
      %1204 = vmatpush1.xpose.msra.mxu0 %v1171
      %1205 = vmatprep.subr.mxu0 0.0
      %1206 = vmatpush2.xpose.msra.mxu0 0.0
      %1207 = vmatprep.subr.mxu0 0.0
      %1208 = vmatpush2.xpose.msra.mxu0 0.0
      %1209 = vmatprep.subr.mxu0 0.0
      %1210 = vmatpush2.xpose.msra.mxu0 0.0
      %1211 = vmatprep.subr.mxu0 0.0
      %1212 = vmatpush2.xpose.msra.mxu0 0.0
      %1213 = vmatprep.subr.mxu0 0.0
      %1214 = vmatpush2.xpose.msra.mxu0 0.0
      %1215 = vmatprep.subr.mxu0 0.0
      %1216 = vmatpush2.xpose.msra.mxu0 0.0
      %1217 = vmatprep.subr.mxu0 0.0
      %1218 = vmatpush2.xpose.msra.mxu0 0.0
      %1219 = vmatprep.subr.mxu0 0.0
      %1220 = vmatpush2.xpose.msra.mxu0 0.0
      %1221 = vmatprep.subr.mxu0 0.0
      %1222 = vmatpush2.xpose.msra.mxu0 0.0
      %1223 = vmatprep.subr.mxu0 0.0
      %1224 = vmatpush2.xpose.msra.mxu0 0.0
      %1225 = vmatprep.subr.mxu0 0.0
      %1226 = vmatpush2.xpose.msra.mxu0 0.0
      %1227 = vmatprep.subr.mxu0 0.0
      %1228 = vmatpush2.xpose.msra.mxu0 0.0
      %1229 = vmatprep.subr.mxu0 0.0
      %1230 = vmatpush2.xpose.msra.mxu0 0.0
      %1231 = vmatprep.subr.mxu0 0.0
      %1232 = vmatpush2.xpose.msra.mxu0 0.0
      %1233 = vmatprep.subr.mxu0 0.0
      %1234 = vmatpush2.xpose.msra.mxu0 0.0
      %1235 = vmatprep.subr.mxu0 0.0
      %1236 = vmatpush2.xpose.msra.mxu0 0.0
      %1237 = vmatprep.mubr.f32.mxu0 0.0
      %1238 = vmatmul.mubr.f32.gmra.mxu0 %v1171
      %v1239 = vpop.f32.mrf.mxu0
      %v1240 = vadd.f32 0.0, %v1239
      %v1241 = vpop.f32.mrf.mxu0
      %1242 = vdwg.mxu0
      %v1244 = vsel %vm264, %v473, 0
      %1246 = vmatprep.subr.mxu0 0.0
      %1247 = vmatpush1.xpose.msra.mxu0 0.0
      %1248 = vmatprep.subr.mxu0 0.0
      %1249 = vmatpush1.xpose.msra.mxu0 0.0
      %1250 = vmatprep.subr.mxu0 0.0
      %1251 = vmatpush1.xpose.msra.mxu0 0.0
      %1252 = vmatprep.subr.mxu0 0.0
      %1253 = vmatpush1.xpose.msra.mxu0 0.0
      %1254 = vmatprep.subr.mxu0 0.0
      %1255 = vmatpush1.xpose.msra.mxu0 0.0
      %1256 = vmatprep.subr.mxu0 0.0
      %1257 = vmatpush1.xpose.msra.mxu0 0.0
      %1258 = vmatprep.subr.mxu0 0.0
      %1259 = vmatpush1.xpose.msra.mxu0 0.0
      %1260 = vmatprep.subr.mxu0 0.0
      %1261 = vmatpush1.xpose.msra.mxu0 0.0
      %1262 = vmatprep.subr.mxu0 0.0
      %1263 = vmatpush1.xpose.msra.mxu0 0.0
      %1264 = vmatprep.subr.mxu0 0.0
      %1265 = vmatpush1.xpose.msra.mxu0 0.0
      %1266 = vmatprep.subr.mxu0 0.0
      %1267 = vmatpush1.xpose.msra.mxu0 0.0
      %1268 = vmatprep.subr.mxu0 0.0
      %1269 = vmatpush1.xpose.msra.mxu0 0.0
      %1270 = vmatprep.subr.mxu0 0.0
      %1271 = vmatpush1.xpose.msra.mxu0 0.0
      %1272 = vmatprep.subr.mxu0 0.0
      %1273 = vmatpush1.xpose.msra.mxu0 0.0
      %1274 = vmatprep.subr.mxu0 0.0
      %1275 = vmatpush1.xpose.msra.mxu0 0.0
      %1276 = vmatprep.subr.mxu0 0.0
      %1277 = vmatpush1.xpose.msra.mxu0 %v1244
      %1278 = vmatprep.subr.mxu0 0.0
      %1279 = vmatpush2.xpose.msra.mxu0 0.0
      %1280 = vmatprep.subr.mxu0 0.0
      %1281 = vmatpush2.xpose.msra.mxu0 0.0
      %1282 = vmatprep.subr.mxu0 0.0
      %1283 = vmatpush2.xpose.msra.mxu0 0.0
      %1284 = vmatprep.subr.mxu0 0.0
      %1285 = vmatpush2.xpose.msra.mxu0 0.0
      %1286 = vmatprep.subr.mxu0 0.0
      %1287 = vmatpush2.xpose.msra.mxu0 0.0
      %1288 = vmatprep.subr.mxu0 0.0
      %1289 = vmatpush2.xpose.msra.mxu0 0.0
      %1290 = vmatprep.subr.mxu0 0.0
      %1291 = vmatpush2.xpose.msra.mxu0 0.0
      %1292 = vmatprep.subr.mxu0 0.0
      %1293 = vmatpush2.xpose.msra.mxu0 0.0
      %1294 = vmatprep.subr.mxu0 0.0
      %1295 = vmatpush2.xpose.msra.mxu0 0.0
      %1296 = vmatprep.subr.mxu0 0.0
      %1297 = vmatpush2.xpose.msra.mxu0 0.0
      %1298 = vmatprep.subr.mxu0 0.0
      %1299 = vmatpush2.xpose.msra.mxu0 0.0
      %1300 = vmatprep.subr.mxu0 0.0
      %1301 = vmatpush2.xpose.msra.mxu0 0.0
      %1302 = vmatprep.subr.mxu0 0.0
      %1303 = vmatpush2.xpose.msra.mxu0 0.0
      %1304 = vmatprep.subr.mxu0 0.0
      %1305 = vmatpush2.xpose.msra.mxu0 0.0
      %1306 = vmatprep.subr.mxu0 0.0
      %1307 = vmatpush2.xpose.msra.mxu0 0.0
      %1308 = vmatprep.subr.mxu0 0.0
      %1309 = vmatpush2.xpose.msra.mxu0 0.0
      %1310 = vmatprep.mubr.f32.mxu0 0.0
      %1311 = vmatmul.mubr.f32.gmra.mxu0 %v1244
      %v1312 = vpop.f32.mrf.mxu0
      %v1313 = vadd.f32 0.0, %v1312
      %v1314 = vpop.f32.mrf.mxu0
      %1315 = vdwg.mxu0
      %v1317 = vsel %vm264, %v478, 0
      %1319 = vmatprep.subr.mxu0 0.0
      %1320 = vmatpush1.xpose.msra.mxu0 0.0
      %1321 = vmatprep.subr.mxu0 0.0
      %1322 = vmatpush1.xpose.msra.mxu0 0.0
      %1323 = vmatprep.subr.mxu0 0.0
      %1324 = vmatpush1.xpose.msra.mxu0 0.0
      %1325 = vmatprep.subr.mxu0 0.0
      %1326 = vmatpush1.xpose.msra.mxu0 0.0
      %1327 = vmatprep.subr.mxu0 0.0
      %1328 = vmatpush1.xpose.msra.mxu0 0.0
      %1329 = vmatprep.subr.mxu0 0.0
      %1330 = vmatpush1.xpose.msra.mxu0 0.0
      %1331 = vmatprep.subr.mxu0 0.0
      %1332 = vmatpush1.xpose.msra.mxu0 0.0
      %1333 = vmatprep.subr.mxu0 0.0
      %1334 = vmatpush1.xpose.msra.mxu0 0.0
      %1335 = vmatprep.subr.mxu0 0.0
      %1336 = vmatpush1.xpose.msra.mxu0 0.0
      %1337 = vmatprep.subr.mxu0 0.0
      %1338 = vmatpush1.xpose.msra.mxu0 0.0
      %1339 = vmatprep.subr.mxu0 0.0
      %1340 = vmatpush1.xpose.msra.mxu0 0.0
      %1341 = vmatprep.subr.mxu0 0.0
      %1342 = vmatpush1.xpose.msra.mxu0 0.0
      %1343 = vmatprep.subr.mxu0 0.0
      %1344 = vmatpush1.xpose.msra.mxu0 0.0
      %1345 = vmatprep.subr.mxu0 0.0
      %1346 = vmatpush1.xpose.msra.mxu0 0.0
      %1347 = vmatprep.subr.mxu0 0.0
      %1348 = vmatpush1.xpose.msra.mxu0 0.0
      %1349 = vmatprep.subr.mxu0 0.0
      %1350 = vmatpush1.xpose.msra.mxu0 %v1317
      %1351 = vmatprep.subr.mxu0 0.0
      %1352 = vmatpush2.xpose.msra.mxu0 0.0
      %1353 = vmatprep.subr.mxu0 0.0
      %1354 = vmatpush2.xpose.msra.mxu0 0.0
      %1355 = vmatprep.subr.mxu0 0.0
      %1356 = vmatpush2.xpose.msra.mxu0 0.0
      %1357 = vmatprep.subr.mxu0 0.0
      %1358 = vmatpush2.xpose.msra.mxu0 0.0
      %1359 = vmatprep.subr.mxu0 0.0
      %1360 = vmatpush2.xpose.msra.mxu0 0.0
      %1361 = vmatprep.subr.mxu0 0.0
      %1362 = vmatpush2.xpose.msra.mxu0 0.0
      %1363 = vmatprep.subr.mxu0 0.0
      %1364 = vmatpush2.xpose.msra.mxu0 0.0
      %1365 = vmatprep.subr.mxu0 0.0
      %1366 = vmatpush2.xpose.msra.mxu0 0.0
      %1367 = vmatprep.subr.mxu0 0.0
      %1368 = vmatpush2.xpose.msra.mxu0 0.0
      %1369 = vmatprep.subr.mxu0 0.0
      %1370 = vmatpush2.xpose.msra.mxu0 0.0
      %1371 = vmatprep.subr.mxu0 0.0
      %1372 = vmatpush2.xpose.msra.mxu0 0.0
      %1373 = vmatprep.subr.mxu0 0.0
      %1374 = vmatpush2.xpose.msra.mxu0 0.0
      %1375 = vmatprep.subr.mxu0 0.0
      %1376 = vmatpush2.xpose.msra.mxu0 0.0
      %1377 = vmatprep.subr.mxu0 0.0
      %1378 = vmatpush2.xpose.msra.mxu0 0.0
      %1379 = vmatprep.subr.mxu0 0.0
      %1380 = vmatpush2.xpose.msra.mxu0 0.0
      %1381 = vmatprep.subr.mxu0 0.0
      %1382 = vmatpush2.xpose.msra.mxu0 0.0
      %1383 = vmatprep.mubr.f32.mxu0 0.0
      %1384 = vmatmul.mubr.f32.gmra.mxu0 %v1317
      %v1385 = vpop.f32.mrf.mxu0
      %v1386 = vadd.f32 0.0, %v1385
      %v1387 = vpop.f32.mrf.mxu0
      %1388 = vdwg.mxu0
      %v1390 = vsel %vm264, %v483, 0
      %1392 = vmatprep.subr.mxu0 0.0
      %1393 = vmatpush1.xpose.msra.mxu0 0.0
      %1394 = vmatprep.subr.mxu0 0.0
      %1395 = vmatpush1.xpose.msra.mxu0 0.0
      %1396 = vmatprep.subr.mxu0 0.0
      %1397 = vmatpush1.xpose.msra.mxu0 0.0
      %1398 = vmatprep.subr.mxu0 0.0
      %1399 = vmatpush1.xpose.msra.mxu0 0.0
      %1400 = vmatprep.subr.mxu0 0.0
      %1401 = vmatpush1.xpose.msra.mxu0 0.0
      %1402 = vmatprep.subr.mxu0 0.0
      %1403 = vmatpush1.xpose.msra.mxu0 0.0
      %1404 = vmatprep.subr.mxu0 0.0
      %1405 = vmatpush1.xpose.msra.mxu0 0.0
      %1406 = vmatprep.subr.mxu0 0.0
      %1407 = vmatpush1.xpose.msra.mxu0 0.0
      %1408 = vmatprep.subr.mxu0 0.0
      %1409 = vmatpush1.xpose.msra.mxu0 0.0
      %1410 = vmatprep.subr.mxu0 0.0
      %1411 = vmatpush1.xpose.msra.mxu0 0.0
      %1412 = vmatprep.subr.mxu0 0.0
      %1413 = vmatpush1.xpose.msra.mxu0 0.0
      %1414 = vmatprep.subr.mxu0 0.0
      %1415 = vmatpush1.xpose.msra.mxu0 0.0
      %1416 = vmatprep.subr.mxu0 0.0
      %1417 = vmatpush1.xpose.msra.mxu0 0.0
      %1418 = vmatprep.subr.mxu0 0.0
      %1419 = vmatpush1.xpose.msra.mxu0 0.0
      %1420 = vmatprep.subr.mxu0 0.0
      %1421 = vmatpush1.xpose.msra.mxu0 0.0
      %1422 = vmatprep.subr.mxu0 0.0
      %1423 = vmatpush1.xpose.msra.mxu0 %v1390
      %1424 = vmatprep.subr.mxu0 0.0
      %1425 = vmatpush2.xpose.msra.mxu0 0.0
      %1426 = vmatprep.subr.mxu0 0.0
      %1427 = vmatpush2.xpose.msra.mxu0 0.0
      %1428 = vmatprep.subr.mxu0 0.0
      %1429 = vmatpush2.xpose.msra.mxu0 0.0
      %1430 = vmatprep.subr.mxu0 0.0
      %1431 = vmatpush2.xpose.msra.mxu0 0.0
      %1432 = vmatprep.subr.mxu0 0.0
      %1433 = vmatpush2.xpose.msra.mxu0 0.0
      %1434 = vmatprep.subr.mxu0 0.0
      %1435 = vmatpush2.xpose.msra.mxu0 0.0
      %1436 = vmatprep.subr.mxu0 0.0
      %1437 = vmatpush2.xpose.msra.mxu0 0.0
      %1438 = vmatprep.subr.mxu0 0.0
      %1439 = vmatpush2.xpose.msra.mxu0 0.0
      %1440 = vmatprep.subr.mxu0 0.0
      %1441 = vmatpush2.xpose.msra.mxu0 0.0
      %1442 = vmatprep.subr.mxu0 0.0
      %1443 = vmatpush2.xpose.msra.mxu0 0.0
      %1444 = vmatprep.subr.mxu0 0.0
      %1445 = vmatpush2.xpose.msra.mxu0 0.0
      %1446 = vmatprep.subr.mxu0 0.0
      %1447 = vmatpush2.xpose.msra.mxu0 0.0
      %1448 = vmatprep.subr.mxu0 0.0
      %1449 = vmatpush2.xpose.msra.mxu0 0.0
      %1450 = vmatprep.subr.mxu0 0.0
      %1451 = vmatpush2.xpose.msra.mxu0 0.0
      %1452 = vmatprep.subr.mxu0 0.0
      %1453 = vmatpush2.xpose.msra.mxu0 0.0
      %1454 = vmatprep.subr.mxu0 0.0
      %1455 = vmatpush2.xpose.msra.mxu0 0.0
      %1456 = vmatprep.mubr.f32.mxu0 0.0
      %1457 = vmatmul.mubr.f32.gmra.mxu0 %v1390
      %v1458 = vpop.f32.mrf.mxu0
      %v1459 = vadd.f32 0.0, %v1458
      %v1460 = vpop.f32.mrf.mxu0
      %1461 = vdwg.mxu0
      %v1463 = vsel %vm264, %v488, 0
      %1465 = vmatprep.subr.mxu0 0.0
      %1466 = vmatpush1.xpose.msra.mxu0 0.0
      %1467 = vmatprep.subr.mxu0 0.0
      %1468 = vmatpush1.xpose.msra.mxu0 0.0
      %1469 = vmatprep.subr.mxu0 0.0
      %1470 = vmatpush1.xpose.msra.mxu0 0.0
      %1471 = vmatprep.subr.mxu0 0.0
      %1472 = vmatpush1.xpose.msra.mxu0 0.0
      %1473 = vmatprep.subr.mxu0 0.0
      %1474 = vmatpush1.xpose.msra.mxu0 0.0
      %1475 = vmatprep.subr.mxu0 0.0
      %1476 = vmatpush1.xpose.msra.mxu0 0.0
      %1477 = vmatprep.subr.mxu0 0.0
      %1478 = vmatpush1.xpose.msra.mxu0 0.0
      %1479 = vmatprep.subr.mxu0 0.0
      %1480 = vmatpush1.xpose.msra.mxu0 0.0
      %1481 = vmatprep.subr.mxu0 0.0
      %1482 = vmatpush1.xpose.msra.mxu0 0.0
      %1483 = vmatprep.subr.mxu0 0.0
      %1484 = vmatpush1.xpose.msra.mxu0 0.0
      %1485 = vmatprep.subr.mxu0 0.0
      %1486 = vmatpush1.xpose.msra.mxu0 0.0
      %1487 = vmatprep.subr.mxu0 0.0
      %1488 = vmatpush1.xpose.msra.mxu0 0.0
      %1489 = vmatprep.subr.mxu0 0.0
      %1490 = vmatpush1.xpose.msra.mxu0 0.0
      %1491 = vmatprep.subr.mxu0 0.0
      %1492 = vmatpush1.xpose.msra.mxu0 0.0
      %1493 = vmatprep.subr.mxu0 0.0
      %1494 = vmatpush1.xpose.msra.mxu0 0.0
      %1495 = vmatprep.subr.mxu0 0.0
      %1496 = vmatpush1.xpose.msra.mxu0 %v1463
      %1497 = vmatprep.subr.mxu0 0.0
      %1498 = vmatpush2.xpose.msra.mxu0 0.0
      %1499 = vmatprep.subr.mxu0 0.0
      %1500 = vmatpush2.xpose.msra.mxu0 0.0
      %1501 = vmatprep.subr.mxu0 0.0
      %1502 = vmatpush2.xpose.msra.mxu0 0.0
      %1503 = vmatprep.subr.mxu0 0.0
      %1504 = vmatpush2.xpose.msra.mxu0 0.0
      %1505 = vmatprep.subr.mxu0 0.0
      %1506 = vmatpush2.xpose.msra.mxu0 0.0
      %1507 = vmatprep.subr.mxu0 0.0
      %1508 = vmatpush2.xpose.msra.mxu0 0.0
      %1509 = vmatprep.subr.mxu0 0.0
      %1510 = vmatpush2.xpose.msra.mxu0 0.0
      %1511 = vmatprep.subr.mxu0 0.0
      %1512 = vmatpush2.xpose.msra.mxu0 0.0
      %1513 = vmatprep.subr.mxu0 0.0
      %1514 = vmatpush2.xpose.msra.mxu0 0.0
      %1515 = vmatprep.subr.mxu0 0.0
      %1516 = vmatpush2.xpose.msra.mxu0 0.0
      %1517 = vmatprep.subr.mxu0 0.0
      %1518 = vmatpush2.xpose.msra.mxu0 0.0
      %1519 = vmatprep.subr.mxu0 0.0
      %1520 = vmatpush2.xpose.msra.mxu0 0.0
      %1521 = vmatprep.subr.mxu0 0.0
      %1522 = vmatpush2.xpose.msra.mxu0 0.0
      %1523 = vmatprep.subr.mxu0 0.0
      %1524 = vmatpush2.xpose.msra.mxu0 0.0
      %1525 = vmatprep.subr.mxu0 0.0
      %1526 = vmatpush2.xpose.msra.mxu0 0.0
      %1527 = vmatprep.subr.mxu0 0.0
      %1528 = vmatpush2.xpose.msra.mxu0 0.0
      %1529 = vmatprep.mubr.f32.mxu0 0.0
      %1530 = vmatmul.mubr.f32.gmra.mxu0 %v1463
      %v1531 = vpop.f32.mrf.mxu0
      %v1532 = vadd.f32 0.0, %v1531
      %v1533 = vpop.f32.mrf.mxu0
      %1534 = vdwg.mxu0
      %v1536 = vsel %vm264, %v493, 0
      %1538 = vmatprep.subr.mxu0 0.0
      %1539 = vmatpush1.xpose.msra.mxu0 0.0
      %1540 = vmatprep.subr.mxu0 0.0
      %1541 = vmatpush1.xpose.msra.mxu0 0.0
      %1542 = vmatprep.subr.mxu0 0.0
      %1543 = vmatpush1.xpose.msra.mxu0 0.0
      %1544 = vmatprep.subr.mxu0 0.0
      %1545 = vmatpush1.xpose.msra.mxu0 0.0
      %1546 = vmatprep.subr.mxu0 0.0
      %1547 = vmatpush1.xpose.msra.mxu0 0.0
      %1548 = vmatprep.subr.mxu0 0.0
      %1549 = vmatpush1.xpose.msra.mxu0 0.0
      %1550 = vmatprep.subr.mxu0 0.0
      %1551 = vmatpush1.xpose.msra.mxu0 0.0
      %1552 = vmatprep.subr.mxu0 0.0
      %1553 = vmatpush1.xpose.msra.mxu0 0.0
      %1554 = vmatprep.subr.mxu0 0.0
      %1555 = vmatpush1.xpose.msra.mxu0 0.0
      %1556 = vmatprep.subr.mxu0 0.0
      %1557 = vmatpush1.xpose.msra.mxu0 0.0
      %1558 = vmatprep.subr.mxu0 0.0
      %1559 = vmatpush1.xpose.msra.mxu0 0.0
      %1560 = vmatprep.subr.mxu0 0.0
      %1561 = vmatpush1.xpose.msra.mxu0 0.0
      %1562 = vmatprep.subr.mxu0 0.0
      %1563 = vmatpush1.xpose.msra.mxu0 0.0
      %1564 = vmatprep.subr.mxu0 0.0
      %1565 = vmatpush1.xpose.msra.mxu0 0.0
      %1566 = vmatprep.subr.mxu0 0.0
      %1567 = vmatpush1.xpose.msra.mxu0 0.0
      %1568 = vmatprep.subr.mxu0 0.0
      %1569 = vmatpush1.xpose.msra.mxu0 %v1536
      %1570 = vmatprep.subr.mxu0 0.0
      %1571 = vmatpush2.xpose.msra.mxu0 0.0
      %1572 = vmatprep.subr.mxu0 0.0
      %1573 = vmatpush2.xpose.msra.mxu0 0.0
      %1574 = vmatprep.subr.mxu0 0.0
      %1575 = vmatpush2.xpose.msra.mxu0 0.0
      %1576 = vmatprep.subr.mxu0 0.0
      %1577 = vmatpush2.xpose.msra.mxu0 0.0
      %1578 = vmatprep.subr.mxu0 0.0
      %1579 = vmatpush2.xpose.msra.mxu0 0.0
      %1580 = vmatprep.subr.mxu0 0.0
      %1581 = vmatpush2.xpose.msra.mxu0 0.0
      %1582 = vmatprep.subr.mxu0 0.0
      %1583 = vmatpush2.xpose.msra.mxu0 0.0
      %1584 = vmatprep.subr.mxu0 0.0
      %1585 = vmatpush2.xpose.msra.mxu0 0.0
      %1586 = vmatprep.subr.mxu0 0.0
      %1587 = vmatpush2.xpose.msra.mxu0 0.0
      %1588 = vmatprep.subr.mxu0 0.0
      %1589 = vmatpush2.xpose.msra.mxu0 0.0
      %1590 = vmatprep.subr.mxu0 0.0
      %1591 = vmatpush2.xpose.msra.mxu0 0.0
      %1592 = vmatprep.subr.mxu0 0.0
      %1593 = vmatpush2.xpose.msra.mxu0 0.0
      %1594 = vmatprep.subr.mxu0 0.0
      %1595 = vmatpush2.xpose.msra.mxu0 0.0
      %1596 = vmatprep.subr.mxu0 0.0
      %1597 = vmatpush2.xpose.msra.mxu0 0.0
      %1598 = vmatprep.subr.mxu0 0.0
      %1599 = vmatpush2.xpose.msra.mxu0 0.0
      %1600 = vmatprep.subr.mxu0 0.0
      %1601 = vmatpush2.xpose.msra.mxu0 0.0
      %1602 = vmatprep.mubr.f32.mxu0 0.0
      %1603 = vmatmul.mubr.f32.gmra.mxu0 %v1536
      %v1604 = vpop.f32.mrf.mxu0
      %v1605 = vadd.f32 0.0, %v1604
      %v1606 = vpop.f32.mrf.mxu0
      %1607 = vdwg.mxu0
      %v1609 = vsel %vm264, %v498, 0
      %1611 = vmatprep.subr.mxu0 0.0
      %1612 = vmatpush1.xpose.msra.mxu0 0.0
      %1613 = vmatprep.subr.mxu0 0.0
      %1614 = vmatpush1.xpose.msra.mxu0 0.0
      %1615 = vmatprep.subr.mxu0 0.0
      %1616 = vmatpush1.xpose.msra.mxu0 0.0
      %1617 = vmatprep.subr.mxu0 0.0
      %1618 = vmatpush1.xpose.msra.mxu0 0.0
      %1619 = vmatprep.subr.mxu0 0.0
      %1620 = vmatpush1.xpose.msra.mxu0 0.0
      %1621 = vmatprep.subr.mxu0 0.0
      %1622 = vmatpush1.xpose.msra.mxu0 0.0
      %1623 = vmatprep.subr.mxu0 0.0
      %1624 = vmatpush1.xpose.msra.mxu0 0.0
      %1625 = vmatprep.subr.mxu0 0.0
      %1626 = vmatpush1.xpose.msra.mxu0 0.0
      %1627 = vmatprep.subr.mxu0 0.0
      %1628 = vmatpush1.xpose.msra.mxu0 0.0
      %1629 = vmatprep.subr.mxu0 0.0
      %1630 = vmatpush1.xpose.msra.mxu0 0.0
      %1631 = vmatprep.subr.mxu0 0.0
      %1632 = vmatpush1.xpose.msra.mxu0 0.0
      %1633 = vmatprep.subr.mxu0 0.0
      %1634 = vmatpush1.xpose.msra.mxu0 0.0
      %1635 = vmatprep.subr.mxu0 0.0
      %1636 = vmatpush1.xpose.msra.mxu0 0.0
      %1637 = vmatprep.subr.mxu0 0.0
      %1638 = vmatpush1.xpose.msra.mxu0 0.0
      %1639 = vmatprep.subr.mxu0 0.0
      %1640 = vmatpush1.xpose.msra.mxu0 0.0
      %1641 = vmatprep.subr.mxu0 0.0
      %1642 = vmatpush1.xpose.msra.mxu0 %v1609
      %1643 = vmatprep.subr.mxu0 0.0
      %1644 = vmatpush2.xpose.msra.mxu0 0.0
      %1645 = vmatprep.subr.mxu0 0.0
      %1646 = vmatpush2.xpose.msra.mxu0 0.0
      %1647 = vmatprep.subr.mxu0 0.0
      %1648 = vmatpush2.xpose.msra.mxu0 0.0
      %1649 = vmatprep.subr.mxu0 0.0
      %1650 = vmatpush2.xpose.msra.mxu0 0.0
      %1651 = vmatprep.subr.mxu0 0.0
      %1652 = vmatpush2.xpose.msra.mxu0 0.0
      %1653 = vmatprep.subr.mxu0 0.0
      %1654 = vmatpush2.xpose.msra.mxu0 0.0
      %1655 = vmatprep.subr.mxu0 0.0
      %1656 = vmatpush2.xpose.msra.mxu0 0.0
      %1657 = vmatprep.subr.mxu0 0.0
      %1658 = vmatpush2.xpose.msra.mxu0 0.0
      %1659 = vmatprep.subr.mxu0 0.0
      %1660 = vmatpush2.xpose.msra.mxu0 0.0
      %1661 = vmatprep.subr.mxu0 0.0
      %1662 = vmatpush2.xpose.msra.mxu0 0.0
      %1663 = vmatprep.subr.mxu0 0.0
      %1664 = vmatpush2.xpose.msra.mxu0 0.0
      %1665 = vmatprep.subr.mxu0 0.0
      %1666 = vmatpush2.xpose.msra.mxu0 0.0
      %1667 = vmatprep.subr.mxu0 0.0
      %1668 = vmatpush2.xpose.msra.mxu0 0.0
      %1669 = vmatprep.subr.mxu0 0.0
      %1670 = vmatpush2.xpose.msra.mxu0 0.0
      %1671 = vmatprep.subr.mxu0 0.0
      %1672 = vmatpush2.xpose.msra.mxu0 0.0
      %1673 = vmatprep.subr.mxu0 0.0
      %1674 = vmatpush2.xpose.msra.mxu0 0.0
      %1675 = vmatprep.mubr.f32.mxu0 0.0
      %1676 = vmatmul.mubr.f32.gmra.mxu0 %v1609
      %v1677 = vpop.f32.mrf.mxu0
      %v1678 = vadd.f32 0.0, %v1677
      %v1679 = vpop.f32.mrf.mxu0
      %1680 = vdwg.mxu0
      %v1682 = vsel %vm264, %v503, 0
      %1684 = vmatprep.subr.mxu0 0.0
      %1685 = vmatpush1.xpose.msra.mxu0 0.0
      %1686 = vmatprep.subr.mxu0 0.0
      %1687 = vmatpush1.xpose.msra.mxu0 0.0
      %1688 = vmatprep.subr.mxu0 0.0
      %1689 = vmatpush1.xpose.msra.mxu0 0.0
      %1690 = vmatprep.subr.mxu0 0.0
      %1691 = vmatpush1.xpose.msra.mxu0 0.0
      %1692 = vmatprep.subr.mxu0 0.0
      %1693 = vmatpush1.xpose.msra.mxu0 0.0
      %1694 = vmatprep.subr.mxu0 0.0
      %1695 = vmatpush1.xpose.msra.mxu0 0.0
      %1696 = vmatprep.subr.mxu0 0.0
      %1697 = vmatpush1.xpose.msra.mxu0 0.0
      %1698 = vmatprep.subr.mxu0 0.0
      %1699 = vmatpush1.xpose.msra.mxu0 0.0
      %1700 = vmatprep.subr.mxu0 0.0
      %1701 = vmatpush1.xpose.msra.mxu0 0.0
      %1702 = vmatprep.subr.mxu0 0.0
      %1703 = vmatpush1.xpose.msra.mxu0 0.0
      %1704 = vmatprep.subr.mxu0 0.0
      %1705 = vmatpush1.xpose.msra.mxu0 0.0
      %1706 = vmatprep.subr.mxu0 0.0
      %1707 = vmatpush1.xpose.msra.mxu0 0.0
      %1708 = vmatprep.subr.mxu0 0.0
      %1709 = vmatpush1.xpose.msra.mxu0 0.0
      %1710 = vmatprep.subr.mxu0 0.0
      %1711 = vmatpush1.xpose.msra.mxu0 0.0
      %1712 = vmatprep.subr.mxu0 0.0
      %1713 = vmatpush1.xpose.msra.mxu0 0.0
      %1714 = vmatprep.subr.mxu0 0.0
      %1715 = vmatpush1.xpose.msra.mxu0 %v1682
      %1716 = vmatprep.subr.mxu0 0.0
      %1717 = vmatpush2.xpose.msra.mxu0 0.0
      %1718 = vmatprep.subr.mxu0 0.0
      %1719 = vmatpush2.xpose.msra.mxu0 0.0
      %1720 = vmatprep.subr.mxu0 0.0
      %1721 = vmatpush2.xpose.msra.mxu0 0.0
      %1722 = vmatprep.subr.mxu0 0.0
      %1723 = vmatpush2.xpose.msra.mxu0 0.0
      %1724 = vmatprep.subr.mxu0 0.0
      %1725 = vmatpush2.xpose.msra.mxu0 0.0
      %1726 = vmatprep.subr.mxu0 0.0
      %1727 = vmatpush2.xpose.msra.mxu0 0.0
      %1728 = vmatprep.subr.mxu0 0.0
      %1729 = vmatpush2.xpose.msra.mxu0 0.0
      %1730 = vmatprep.subr.mxu0 0.0
      %1731 = vmatpush2.xpose.msra.mxu0 0.0
      %1732 = vmatprep.subr.mxu0 0.0
      %1733 = vmatpush2.xpose.msra.mxu0 0.0
      %1734 = vmatprep.subr.mxu0 0.0
      %1735 = vmatpush2.xpose.msra.mxu0 0.0
      %1736 = vmatprep.subr.mxu0 0.0
      %1737 = vmatpush2.xpose.msra.mxu0 0.0
      %1738 = vmatprep.subr.mxu0 0.0
      %1739 = vmatpush2.xpose.msra.mxu0 0.0
      %1740 = vmatprep.subr.mxu0 0.0
      %1741 = vmatpush2.xpose.msra.mxu0 0.0
      %1742 = vmatprep.subr.mxu0 0.0
      %1743 = vmatpush2.xpose.msra.mxu0 0.0
      %1744 = vmatprep.subr.mxu0 0.0
      %1745 = vmatpush2.xpose.msra.mxu0 0.0
      %1746 = vmatprep.subr.mxu0 0.0
      %1747 = vmatpush2.xpose.msra.mxu0 0.0
      %1748 = vmatprep.mubr.f32.mxu0 0.0
      %1749 = vmatmul.mubr.f32.gmra.mxu0 %v1682
      %v1750 = vpop.f32.mrf.mxu0
      %v1751 = vadd.f32 0.0, %v1750
      %v1752 = vpop.f32.mrf.mxu0
      %1753 = vdwg.mxu0
      %v1755 = vsel %vm264, %v508, 0
      %1757 = vmatprep.subr.mxu0 0.0
      %1758 = vmatpush1.xpose.msra.mxu0 0.0
      %1759 = vmatprep.subr.mxu0 0.0
      %1760 = vmatpush1.xpose.msra.mxu0 0.0
      %1761 = vmatprep.subr.mxu0 0.0
      %1762 = vmatpush1.xpose.msra.mxu0 0.0
      %1763 = vmatprep.subr.mxu0 0.0
      %1764 = vmatpush1.xpose.msra.mxu0 0.0
      %1765 = vmatprep.subr.mxu0 0.0
      %1766 = vmatpush1.xpose.msra.mxu0 0.0
      %1767 = vmatprep.subr.mxu0 0.0
      %1768 = vmatpush1.xpose.msra.mxu0 0.0
      %1769 = vmatprep.subr.mxu0 0.0
      %1770 = vmatpush1.xpose.msra.mxu0 0.0
      %1771 = vmatprep.subr.mxu0 0.0
      %1772 = vmatpush1.xpose.msra.mxu0 0.0
      %1773 = vmatprep.subr.mxu0 0.0
      %1774 = vmatpush1.xpose.msra.mxu0 0.0
      %1775 = vmatprep.subr.mxu0 0.0
      %1776 = vmatpush1.xpose.msra.mxu0 0.0
      %1777 = vmatprep.subr.mxu0 0.0
      %1778 = vmatpush1.xpose.msra.mxu0 0.0
      %1779 = vmatprep.subr.mxu0 0.0
      %1780 = vmatpush1.xpose.msra.mxu0 0.0
      %1781 = vmatprep.subr.mxu0 0.0
      %1782 = vmatpush1.xpose.msra.mxu0 0.0
      %1783 = vmatprep.subr.mxu0 0.0
      %1784 = vmatpush1.xpose.msra.mxu0 0.0
      %1785 = vmatprep.subr.mxu0 0.0
      %1786 = vmatpush1.xpose.msra.mxu0 0.0
      %1787 = vmatprep.subr.mxu0 0.0
      %1788 = vmatpush1.xpose.msra.mxu0 %v1755
      %1789 = vmatprep.subr.mxu0 0.0
      %1790 = vmatpush2.xpose.msra.mxu0 0.0
      %1791 = vmatprep.subr.mxu0 0.0
      %1792 = vmatpush2.xpose.msra.mxu0 0.0
      %1793 = vmatprep.subr.mxu0 0.0
      %1794 = vmatpush2.xpose.msra.mxu0 0.0
      %1795 = vmatprep.subr.mxu0 0.0
      %1796 = vmatpush2.xpose.msra.mxu0 0.0
      %1797 = vmatprep.subr.mxu0 0.0
      %1798 = vmatpush2.xpose.msra.mxu0 0.0
      %1799 = vmatprep.subr.mxu0 0.0
      %1800 = vmatpush2.xpose.msra.mxu0 0.0
      %1801 = vmatprep.subr.mxu0 0.0
      %1802 = vmatpush2.xpose.msra.mxu0 0.0
      %1803 = vmatprep.subr.mxu0 0.0
      %1804 = vmatpush2.xpose.msra.mxu0 0.0
      %1805 = vmatprep.subr.mxu0 0.0
      %1806 = vmatpush2.xpose.msra.mxu0 0.0
      %1807 = vmatprep.subr.mxu0 0.0
      %1808 = vmatpush2.xpose.msra.mxu0 0.0
      %1809 = vmatprep.subr.mxu0 0.0
      %1810 = vmatpush2.xpose.msra.mxu0 0.0
      %1811 = vmatprep.subr.mxu0 0.0
      %1812 = vmatpush2.xpose.msra.mxu0 0.0
      %1813 = vmatprep.subr.mxu0 0.0
      %1814 = vmatpush2.xpose.msra.mxu0 0.0
      %1815 = vmatprep.subr.mxu0 0.0
      %1816 = vmatpush2.xpose.msra.mxu0 0.0
      %1817 = vmatprep.subr.mxu0 0.0
      %1818 = vmatpush2.xpose.msra.mxu0 0.0
      %1819 = vmatprep.subr.mxu0 0.0
      %1820 = vmatpush2.xpose.msra.mxu0 0.0
      %1821 = vmatprep.mubr.f32.mxu0 0.0
      %1822 = vmatmul.mubr.f32.gmra.mxu0 %v1755
      %v1823 = vpop.f32.mrf.mxu0
      %v1824 = vadd.f32 0.0, %v1823
      %v1825 = vpop.f32.mrf.mxu0
      %1826 = vdwg.mxu0
      %v1828 = vsel %vm264, %v513, 0
      %1830 = vmatprep.subr.mxu0 0.0
      %1831 = vmatpush1.xpose.msra.mxu0 0.0
      %1832 = vmatprep.subr.mxu0 0.0
      %1833 = vmatpush1.xpose.msra.mxu0 0.0
      %1834 = vmatprep.subr.mxu0 0.0
      %1835 = vmatpush1.xpose.msra.mxu0 0.0
      %1836 = vmatprep.subr.mxu0 0.0
      %1837 = vmatpush1.xpose.msra.mxu0 0.0
      %1838 = vmatprep.subr.mxu0 0.0
      %1839 = vmatpush1.xpose.msra.mxu0 0.0
      %1840 = vmatprep.subr.mxu0 0.0
      %1841 = vmatpush1.xpose.msra.mxu0 0.0
      %1842 = vmatprep.subr.mxu0 0.0
      %1843 = vmatpush1.xpose.msra.mxu0 0.0
      %1844 = vmatprep.subr.mxu0 0.0
      %1845 = vmatpush1.xpose.msra.mxu0 0.0
      %1846 = vmatprep.subr.mxu0 0.0
      %1847 = vmatpush1.xpose.msra.mxu0 0.0
      %1848 = vmatprep.subr.mxu0 0.0
      %1849 = vmatpush1.xpose.msra.mxu0 0.0
      %1850 = vmatprep.subr.mxu0 0.0
      %1851 = vmatpush1.xpose.msra.mxu0 0.0
      %1852 = vmatprep.subr.mxu0 0.0
      %1853 = vmatpush1.xpose.msra.mxu0 0.0
      %1854 = vmatprep.subr.mxu0 0.0
      %1855 = vmatpush1.xpose.msra.mxu0 0.0
      %1856 = vmatprep.subr.mxu0 0.0
      %1857 = vmatpush1.xpose.msra.mxu0 0.0
      %1858 = vmatprep.subr.mxu0 0.0
      %1859 = vmatpush1.xpose.msra.mxu0 0.0
      %1860 = vmatprep.subr.mxu0 0.0
      %1861 = vmatpush1.xpose.msra.mxu0 %v1828
      %1862 = vmatprep.subr.mxu0 0.0
      %1863 = vmatpush2.xpose.msra.mxu0 0.0
      %1864 = vmatprep.subr.mxu0 0.0
      %1865 = vmatpush2.xpose.msra.mxu0 0.0
      %1866 = vmatprep.subr.mxu0 0.0
      %1867 = vmatpush2.xpose.msra.mxu0 0.0
      %1868 = vmatprep.subr.mxu0 0.0
      %1869 = vmatpush2.xpose.msra.mxu0 0.0
      %1870 = vmatprep.subr.mxu0 0.0
      %1871 = vmatpush2.xpose.msra.mxu0 0.0
      %1872 = vmatprep.subr.mxu0 0.0
      %1873 = vmatpush2.xpose.msra.mxu0 0.0
      %1874 = vmatprep.subr.mxu0 0.0
      %1875 = vmatpush2.xpose.msra.mxu0 0.0
      %1876 = vmatprep.subr.mxu0 0.0
      %1877 = vmatpush2.xpose.msra.mxu0 0.0
      %1878 = vmatprep.subr.mxu0 0.0
      %1879 = vmatpush2.xpose.msra.mxu0 0.0
      %1880 = vmatprep.subr.mxu0 0.0
      %1881 = vmatpush2.xpose.msra.mxu0 0.0
      %1882 = vmatprep.subr.mxu0 0.0
      %1883 = vmatpush2.xpose.msra.mxu0 0.0
      %1884 = vmatprep.subr.mxu0 0.0
      %1885 = vmatpush2.xpose.msra.mxu0 0.0
      %1886 = vmatprep.subr.mxu0 0.0
      %1887 = vmatpush2.xpose.msra.mxu0 0.0
      %1888 = vmatprep.subr.mxu0 0.0
      %1889 = vmatpush2.xpose.msra.mxu0 0.0
      %1890 = vmatprep.subr.mxu0 0.0
      %1891 = vmatpush2.xpose.msra.mxu0 0.0
      %1892 = vmatprep.subr.mxu0 0.0
      %1893 = vmatpush2.xpose.msra.mxu0 0.0
      %1894 = vmatprep.mubr.f32.mxu0 0.0
      %1895 = vmatmul.mubr.f32.gmra.mxu0 %v1828
      %v1896 = vpop.f32.mrf.mxu0
      %v1897 = vadd.f32 0.0, %v1896
      %v1898 = vpop.f32.mrf.mxu0
      %1899 = vdwg.mxu0
      %v1901 = vsel %vm264, %v518, 0
      %1903 = vmatprep.subr.mxu0 0.0
      %1904 = vmatpush1.xpose.msra.mxu0 0.0
      %1905 = vmatprep.subr.mxu0 0.0
      %1906 = vmatpush1.xpose.msra.mxu0 0.0
      %1907 = vmatprep.subr.mxu0 0.0
      %1908 = vmatpush1.xpose.msra.mxu0 0.0
      %1909 = vmatprep.subr.mxu0 0.0
      %1910 = vmatpush1.xpose.msra.mxu0 0.0
      %1911 = vmatprep.subr.mxu0 0.0
      %1912 = vmatpush1.xpose.msra.mxu0 0.0
      %1913 = vmatprep.subr.mxu0 0.0
      %1914 = vmatpush1.xpose.msra.mxu0 0.0
      %1915 = vmatprep.subr.mxu0 0.0
      %1916 = vmatpush1.xpose.msra.mxu0 0.0
      %1917 = vmatprep.subr.mxu0 0.0
      %1918 = vmatpush1.xpose.msra.mxu0 0.0
      %1919 = vmatprep.subr.mxu0 0.0
      %1920 = vmatpush1.xpose.msra.mxu0 0.0
      %1921 = vmatprep.subr.mxu0 0.0
      %1922 = vmatpush1.xpose.msra.mxu0 0.0
      %1923 = vmatprep.subr.mxu0 0.0
      %1924 = vmatpush1.xpose.msra.mxu0 0.0
      %1925 = vmatprep.subr.mxu0 0.0
      %1926 = vmatpush1.xpose.msra.mxu0 0.0
      %1927 = vmatprep.subr.mxu0 0.0
      %1928 = vmatpush1.xpose.msra.mxu0 0.0
      %1929 = vmatprep.subr.mxu0 0.0
      %1930 = vmatpush1.xpose.msra.mxu0 0.0
      %1931 = vmatprep.subr.mxu0 0.0
      %1932 = vmatpush1.xpose.msra.mxu0 0.0
      %1933 = vmatprep.subr.mxu0 0.0
      %1934 = vmatpush1.xpose.msra.mxu0 %v1901
      %1935 = vmatprep.subr.mxu0 0.0
      %1936 = vmatpush2.xpose.msra.mxu0 0.0
      %1937 = vmatprep.subr.mxu0 0.0
      %1938 = vmatpush2.xpose.msra.mxu0 0.0
      %1939 = vmatprep.subr.mxu0 0.0
      %1940 = vmatpush2.xpose.msra.mxu0 0.0
      %1941 = vmatprep.subr.mxu0 0.0
      %1942 = vmatpush2.xpose.msra.mxu0 0.0
      %1943 = vmatprep.subr.mxu0 0.0
      %1944 = vmatpush2.xpose.msra.mxu0 0.0
      %1945 = vmatprep.subr.mxu0 0.0
      %1946 = vmatpush2.xpose.msra.mxu0 0.0
      %1947 = vmatprep.subr.mxu0 0.0
      %1948 = vmatpush2.xpose.msra.mxu0 0.0
      %1949 = vmatprep.subr.mxu0 0.0
      %1950 = vmatpush2.xpose.msra.mxu0 0.0
      %1951 = vmatprep.subr.mxu0 0.0
      %1952 = vmatpush2.xpose.msra.mxu0 0.0
      %1953 = vmatprep.subr.mxu0 0.0
      %1954 = vmatpush2.xpose.msra.mxu0 0.0
      %1955 = vmatprep.subr.mxu0 0.0
      %1956 = vmatpush2.xpose.msra.mxu0 0.0
      %1957 = vmatprep.subr.mxu0 0.0
      %1958 = vmatpush2.xpose.msra.mxu0 0.0
      %1959 = vmatprep.subr.mxu0 0.0
      %1960 = vmatpush2.xpose.msra.mxu0 0.0
      %1961 = vmatprep.subr.mxu0 0.0
      %1962 = vmatpush2.xpose.msra.mxu0 0.0
      %1963 = vmatprep.subr.mxu0 0.0
      %1964 = vmatpush2.xpose.msra.mxu0 0.0
      %1965 = vmatprep.subr.mxu0 0.0
      %1966 = vmatpush2.xpose.msra.mxu0 0.0
      %1967 = vmatprep.mubr.f32.mxu0 0.0
      %1968 = vmatmul.mubr.f32.gmra.mxu0 %v1901
      %v1969 = vpop.f32.mrf.mxu0
      %v1970 = vadd.f32 0.0, %v1969
      %v1971 = vpop.f32.mrf.mxu0
      %1972 = vdwg.mxu0
      %v1974 = vsel %vm264, %v523, 0
      %1976 = vmatprep.subr.mxu0 0.0
      %1977 = vmatpush1.xpose.msra.mxu0 0.0
      %1978 = vmatprep.subr.mxu0 0.0
      %1979 = vmatpush1.xpose.msra.mxu0 0.0
      %1980 = vmatprep.subr.mxu0 0.0
      %1981 = vmatpush1.xpose.msra.mxu0 0.0
      %1982 = vmatprep.subr.mxu0 0.0
      %1983 = vmatpush1.xpose.msra.mxu0 0.0
      %1984 = vmatprep.subr.mxu0 0.0
      %1985 = vmatpush1.xpose.msra.mxu0 0.0
      %1986 = vmatprep.subr.mxu0 0.0
      %1987 = vmatpush1.xpose.msra.mxu0 0.0
      %1988 = vmatprep.subr.mxu0 0.0
      %1989 = vmatpush1.xpose.msra.mxu0 0.0
      %1990 = vmatprep.subr.mxu0 0.0
      %1991 = vmatpush1.xpose.msra.mxu0 0.0
      %1992 = vmatprep.subr.mxu0 0.0
      %1993 = vmatpush1.xpose.msra.mxu0 0.0
      %1994 = vmatprep.subr.mxu0 0.0
      %1995 = vmatpush1.xpose.msra.mxu0 0.0
      %1996 = vmatprep.subr.mxu0 0.0
      %1997 = vmatpush1.xpose.msra.mxu0 0.0
      %1998 = vmatprep.subr.mxu0 0.0
      %1999 = vmatpush1.xpose.msra.mxu0 0.0
      %2000 = vmatprep.subr.mxu0 0.0
      %2001 = vmatpush1.xpose.msra.mxu0 0.0
      %2002 = vmatprep.subr.mxu0 0.0
      %2003 = vmatpush1.xpose.msra.mxu0 0.0
      %2004 = vmatprep.subr.mxu0 0.0
      %2005 = vmatpush1.xpose.msra.mxu0 0.0
      %2006 = vmatprep.subr.mxu0 0.0
      %2007 = vmatpush1.xpose.msra.mxu0 %v1974
      %2008 = vmatprep.subr.mxu0 0.0
      %2009 = vmatpush2.xpose.msra.mxu0 0.0
      %2010 = vmatprep.subr.mxu0 0.0
      %2011 = vmatpush2.xpose.msra.mxu0 0.0
      %2012 = vmatprep.subr.mxu0 0.0
      %2013 = vmatpush2.xpose.msra.mxu0 0.0
      %2014 = vmatprep.subr.mxu0 0.0
      %2015 = vmatpush2.xpose.msra.mxu0 0.0
      %2016 = vmatprep.subr.mxu0 0.0
      %2017 = vmatpush2.xpose.msra.mxu0 0.0
      %2018 = vmatprep.subr.mxu0 0.0
      %2019 = vmatpush2.xpose.msra.mxu0 0.0
      %2020 = vmatprep.subr.mxu0 0.0
      %2021 = vmatpush2.xpose.msra.mxu0 0.0
      %2022 = vmatprep.subr.mxu0 0.0
      %2023 = vmatpush2.xpose.msra.mxu0 0.0
      %2024 = vmatprep.subr.mxu0 0.0
      %2025 = vmatpush2.xpose.msra.mxu0 0.0
      %2026 = vmatprep.subr.mxu0 0.0
      %2027 = vmatpush2.xpose.msra.mxu0 0.0
      %2028 = vmatprep.subr.mxu0 0.0
      %2029 = vmatpush2.xpose.msra.mxu0 0.0
      %2030 = vmatprep.subr.mxu0 0.0
      %2031 = vmatpush2.xpose.msra.mxu0 0.0
      %2032 = vmatprep.subr.mxu0 0.0
      %2033 = vmatpush2.xpose.msra.mxu0 0.0
      %2034 = vmatprep.subr.mxu0 0.0
      %2035 = vmatpush2.xpose.msra.mxu0 0.0
      %2036 = vmatprep.subr.mxu0 0.0
      %2037 = vmatpush2.xpose.msra.mxu0 0.0
      %2038 = vmatprep.subr.mxu0 0.0
      %2039 = vmatpush2.xpose.msra.mxu0 0.0
      %2040 = vmatprep.mubr.f32.mxu0 0.0
      %2041 = vmatmul.mubr.f32.gmra.mxu0 %v1974
      %v2042 = vpop.f32.mrf.mxu0
      %v2043 = vadd.f32 0.0, %v2042
      %v2044 = vpop.f32.mrf.mxu0
      %2045 = vdwg.mxu0
      %v2047 = vsel %vm264, %v528, 0
      %2049 = vmatprep.subr.mxu0 0.0
      %2050 = vmatpush1.xpose.msra.mxu0 0.0
      %2051 = vmatprep.subr.mxu0 0.0
      %2052 = vmatpush1.xpose.msra.mxu0 0.0
      %2053 = vmatprep.subr.mxu0 0.0
      %2054 = vmatpush1.xpose.msra.mxu0 0.0
      %2055 = vmatprep.subr.mxu0 0.0
      %2056 = vmatpush1.xpose.msra.mxu0 0.0
      %2057 = vmatprep.subr.mxu0 0.0
      %2058 = vmatpush1.xpose.msra.mxu0 0.0
      %2059 = vmatprep.subr.mxu0 0.0
      %2060 = vmatpush1.xpose.msra.mxu0 0.0
      %2061 = vmatprep.subr.mxu0 0.0
      %2062 = vmatpush1.xpose.msra.mxu0 0.0
      %2063 = vmatprep.subr.mxu0 0.0
      %2064 = vmatpush1.xpose.msra.mxu0 0.0
      %2065 = vmatprep.subr.mxu0 0.0
      %2066 = vmatpush1.xpose.msra.mxu0 0.0
      %2067 = vmatprep.subr.mxu0 0.0
      %2068 = vmatpush1.xpose.msra.mxu0 0.0
      %2069 = vmatprep.subr.mxu0 0.0
      %2070 = vmatpush1.xpose.msra.mxu0 0.0
      %2071 = vmatprep.subr.mxu0 0.0
      %2072 = vmatpush1.xpose.msra.mxu0 0.0
      %2073 = vmatprep.subr.mxu0 0.0
      %2074 = vmatpush1.xpose.msra.mxu0 0.0
      %2075 = vmatprep.subr.mxu0 0.0
      %2076 = vmatpush1.xpose.msra.mxu0 0.0
      %2077 = vmatprep.subr.mxu0 0.0
      %2078 = vmatpush1.xpose.msra.mxu0 0.0
      %2079 = vmatprep.subr.mxu0 0.0
      %2080 = vmatpush1.xpose.msra.mxu0 %v2047
      %2081 = vmatprep.subr.mxu0 0.0
      %2082 = vmatpush2.xpose.msra.mxu0 0.0
      %2083 = vmatprep.subr.mxu0 0.0
      %2084 = vmatpush2.xpose.msra.mxu0 0.0
      %2085 = vmatprep.subr.mxu0 0.0
      %2086 = vmatpush2.xpose.msra.mxu0 0.0
      %2087 = vmatprep.subr.mxu0 0.0
      %2088 = vmatpush2.xpose.msra.mxu0 0.0
      %2089 = vmatprep.subr.mxu0 0.0
      %2090 = vmatpush2.xpose.msra.mxu0 0.0
      %2091 = vmatprep.subr.mxu0 0.0
      %2092 = vmatpush2.xpose.msra.mxu0 0.0
      %2093 = vmatprep.subr.mxu0 0.0
      %2094 = vmatpush2.xpose.msra.mxu0 0.0
      %2095 = vmatprep.subr.mxu0 0.0
      %2096 = vmatpush2.xpose.msra.mxu0 0.0
      %2097 = vmatprep.subr.mxu0 0.0
      %2098 = vmatpush2.xpose.msra.mxu0 0.0
      %2099 = vmatprep.subr.mxu0 0.0
      %2100 = vmatpush2.xpose.msra.mxu0 0.0
      %2101 = vmatprep.subr.mxu0 0.0
      %2102 = vmatpush2.xpose.msra.mxu0 0.0
      %2103 = vmatprep.subr.mxu0 0.0
      %2104 = vmatpush2.xpose.msra.mxu0 0.0
      %2105 = vmatprep.subr.mxu0 0.0
      %2106 = vmatpush2.xpose.msra.mxu0 0.0
      %2107 = vmatprep.subr.mxu0 0.0
      %2108 = vmatpush2.xpose.msra.mxu0 0.0
      %2109 = vmatprep.subr.mxu0 0.0
      %2110 = vmatpush2.xpose.msra.mxu0 0.0
      %2111 = vmatprep.subr.mxu0 0.0
      %2112 = vmatpush2.xpose.msra.mxu0 0.0
      %2113 = vmatprep.mubr.f32.mxu0 0.0
      %2114 = vmatmul.mubr.f32.gmra.mxu0 %v2047
      %v2115 = vpop.f32.mrf.mxu0
      %v2116 = vadd.f32 0.0, %v2115
      %v2117 = vpop.f32.mrf.mxu0
      %2118 = vdwg.mxu0
      %v2120 = vsel %vm264, %v533, 0
      %2122 = vmatprep.subr.mxu0 0.0
      %2123 = vmatpush1.xpose.msra.mxu0 0.0
      %2124 = vmatprep.subr.mxu0 0.0
      %2125 = vmatpush1.xpose.msra.mxu0 0.0
      %2126 = vmatprep.subr.mxu0 0.0
      %2127 = vmatpush1.xpose.msra.mxu0 0.0
      %2128 = vmatprep.subr.mxu0 0.0
      %2129 = vmatpush1.xpose.msra.mxu0 0.0
      %2130 = vmatprep.subr.mxu0 0.0
      %2131 = vmatpush1.xpose.msra.mxu0 0.0
      %2132 = vmatprep.subr.mxu0 0.0
      %2133 = vmatpush1.xpose.msra.mxu0 0.0
      %2134 = vmatprep.subr.mxu0 0.0
      %2135 = vmatpush1.xpose.msra.mxu0 0.0
      %2136 = vmatprep.subr.mxu0 0.0
      %2137 = vmatpush1.xpose.msra.mxu0 0.0
      %2138 = vmatprep.subr.mxu0 0.0
      %2139 = vmatpush1.xpose.msra.mxu0 0.0
      %2140 = vmatprep.subr.mxu0 0.0
      %2141 = vmatpush1.xpose.msra.mxu0 0.0
      %2142 = vmatprep.subr.mxu0 0.0
      %2143 = vmatpush1.xpose.msra.mxu0 0.0
      %2144 = vmatprep.subr.mxu0 0.0
      %2145 = vmatpush1.xpose.msra.mxu0 0.0
      %2146 = vmatprep.subr.mxu0 0.0
      %2147 = vmatpush1.xpose.msra.mxu0 0.0
      %2148 = vmatprep.subr.mxu0 0.0
      %2149 = vmatpush1.xpose.msra.mxu0 0.0
      %2150 = vmatprep.subr.mxu0 0.0
      %2151 = vmatpush1.xpose.msra.mxu0 0.0
      %2152 = vmatprep.subr.mxu0 0.0
      %2153 = vmatpush1.xpose.msra.mxu0 %v2120
      %2154 = vmatprep.subr.mxu0 0.0
      %2155 = vmatpush2.xpose.msra.mxu0 0.0
      %2156 = vmatprep.subr.mxu0 0.0
      %2157 = vmatpush2.xpose.msra.mxu0 0.0
      %2158 = vmatprep.subr.mxu0 0.0
      %2159 = vmatpush2.xpose.msra.mxu0 0.0
      %2160 = vmatprep.subr.mxu0 0.0
      %2161 = vmatpush2.xpose.msra.mxu0 0.0
      %2162 = vmatprep.subr.mxu0 0.0
      %2163 = vmatpush2.xpose.msra.mxu0 0.0
      %2164 = vmatprep.subr.mxu0 0.0
      %2165 = vmatpush2.xpose.msra.mxu0 0.0
      %2166 = vmatprep.subr.mxu0 0.0
      %2167 = vmatpush2.xpose.msra.mxu0 0.0
      %2168 = vmatprep.subr.mxu0 0.0
      %2169 = vmatpush2.xpose.msra.mxu0 0.0
      %2170 = vmatprep.subr.mxu0 0.0
      %2171 = vmatpush2.xpose.msra.mxu0 0.0
      %2172 = vmatprep.subr.mxu0 0.0
      %2173 = vmatpush2.xpose.msra.mxu0 0.0
      %2174 = vmatprep.subr.mxu0 0.0
      %2175 = vmatpush2.xpose.msra.mxu0 0.0
      %2176 = vmatprep.subr.mxu0 0.0
      %2177 = vmatpush2.xpose.msra.mxu0 0.0
      %2178 = vmatprep.subr.mxu0 0.0
      %2179 = vmatpush2.xpose.msra.mxu0 0.0
      %2180 = vmatprep.subr.mxu0 0.0
      %2181 = vmatpush2.xpose.msra.mxu0 0.0
      %2182 = vmatprep.subr.mxu0 0.0
      %2183 = vmatpush2.xpose.msra.mxu0 0.0
      %2184 = vmatprep.subr.mxu0 0.0
      %2185 = vmatpush2.xpose.msra.mxu0 0.0
      %2186 = vmatprep.mubr.f32.mxu0 0.0
      %2187 = vmatmul.mubr.f32.gmra.mxu0 %v2120
      %v2188 = vpop.f32.mrf.mxu0
      %v2189 = vadd.f32 0.0, %v2188
      %v2190 = vpop.f32.mrf.mxu0
      %2191 = vdwg.mxu0
      %v2193 = vsel %vm264, %v538, 0
      %2195 = vmatprep.subr.mxu0 0.0
      %2196 = vmatpush1.xpose.msra.mxu0 0.0
      %2197 = vmatprep.subr.mxu0 0.0
      %2198 = vmatpush1.xpose.msra.mxu0 0.0
      %2199 = vmatprep.subr.mxu0 0.0
      %2200 = vmatpush1.xpose.msra.mxu0 0.0
      %2201 = vmatprep.subr.mxu0 0.0
      %2202 = vmatpush1.xpose.msra.mxu0 0.0
      %2203 = vmatprep.subr.mxu0 0.0
      %2204 = vmatpush1.xpose.msra.mxu0 0.0
      %2205 = vmatprep.subr.mxu0 0.0
      %2206 = vmatpush1.xpose.msra.mxu0 0.0
      %2207 = vmatprep.subr.mxu0 0.0
      %2208 = vmatpush1.xpose.msra.mxu0 0.0
      %2209 = vmatprep.subr.mxu0 0.0
      %2210 = vmatpush1.xpose.msra.mxu0 0.0
      %2211 = vmatprep.subr.mxu0 0.0
      %2212 = vmatpush1.xpose.msra.mxu0 0.0
      %2213 = vmatprep.subr.mxu0 0.0
      %2214 = vmatpush1.xpose.msra.mxu0 0.0
      %2215 = vmatprep.subr.mxu0 0.0
      %2216 = vmatpush1.xpose.msra.mxu0 0.0
      %2217 = vmatprep.subr.mxu0 0.0
      %2218 = vmatpush1.xpose.msra.mxu0 0.0
      %2219 = vmatprep.subr.mxu0 0.0
      %2220 = vmatpush1.xpose.msra.mxu0 0.0
      %2221 = vmatprep.subr.mxu0 0.0
      %2222 = vmatpush1.xpose.msra.mxu0 0.0
      %2223 = vmatprep.subr.mxu0 0.0
      %2224 = vmatpush1.xpose.msra.mxu0 0.0
      %2225 = vmatprep.subr.mxu0 0.0
      %2226 = vmatpush1.xpose.msra.mxu0 %v2193
      %2227 = vmatprep.subr.mxu0 0.0
      %2228 = vmatpush2.xpose.msra.mxu0 0.0
      %2229 = vmatprep.subr.mxu0 0.0
      %2230 = vmatpush2.xpose.msra.mxu0 0.0
      %2231 = vmatprep.subr.mxu0 0.0
      %2232 = vmatpush2.xpose.msra.mxu0 0.0
      %2233 = vmatprep.subr.mxu0 0.0
      %2234 = vmatpush2.xpose.msra.mxu0 0.0
      %2235 = vmatprep.subr.mxu0 0.0
      %2236 = vmatpush2.xpose.msra.mxu0 0.0
      %2237 = vmatprep.subr.mxu0 0.0
      %2238 = vmatpush2.xpose.msra.mxu0 0.0
      %2239 = vmatprep.subr.mxu0 0.0
      %2240 = vmatpush2.xpose.msra.mxu0 0.0
      %2241 = vmatprep.subr.mxu0 0.0
      %2242 = vmatpush2.xpose.msra.mxu0 0.0
      %2243 = vmatprep.subr.mxu0 0.0
      %2244 = vmatpush2.xpose.msra.mxu0 0.0
      %2245 = vmatprep.subr.mxu0 0.0
      %2246 = vmatpush2.xpose.msra.mxu0 0.0
      %2247 = vmatprep.subr.mxu0 0.0
      %2248 = vmatpush2.xpose.msra.mxu0 0.0
      %2249 = vmatprep.subr.mxu0 0.0
      %2250 = vmatpush2.xpose.msra.mxu0 0.0
      %2251 = vmatprep.subr.mxu0 0.0
      %2252 = vmatpush2.xpose.msra.mxu0 0.0
      %2253 = vmatprep.subr.mxu0 0.0
      %2254 = vmatpush2.xpose.msra.mxu0 0.0
      %2255 = vmatprep.subr.mxu0 0.0
      %2256 = vmatpush2.xpose.msra.mxu0 0.0
      %2257 = vmatprep.subr.mxu0 0.0
      %2258 = vmatpush2.xpose.msra.mxu0 0.0
      %2259 = vmatprep.mubr.f32.mxu0 0.0
      %2260 = vmatmul.mubr.f32.gmra.mxu0 %v2193
      %v2261 = vpop.f32.mrf.mxu0
      %v2262 = vadd.f32 0.0, %v2261
      %v2263 = vpop.f32.mrf.mxu0
      %2264 = vdwg.mxu0
      %v2266 = vsel %vm264, %v543, 0
      %2268 = vmatprep.subr.mxu0 0.0
      %2269 = vmatpush1.xpose.msra.mxu0 0.0
      %2270 = vmatprep.subr.mxu0 0.0
      %2271 = vmatpush1.xpose.msra.mxu0 0.0
      %2272 = vmatprep.subr.mxu0 0.0
      %2273 = vmatpush1.xpose.msra.mxu0 0.0
      %2274 = vmatprep.subr.mxu0 0.0
      %2275 = vmatpush1.xpose.msra.mxu0 0.0
      %2276 = vmatprep.subr.mxu0 0.0
      %2277 = vmatpush1.xpose.msra.mxu0 0.0
      %2278 = vmatprep.subr.mxu0 0.0
      %2279 = vmatpush1.xpose.msra.mxu0 0.0
      %2280 = vmatprep.subr.mxu0 0.0
      %2281 = vmatpush1.xpose.msra.mxu0 0.0
      %2282 = vmatprep.subr.mxu0 0.0
      %2283 = vmatpush1.xpose.msra.mxu0 0.0
      %2284 = vmatprep.subr.mxu0 0.0
      %2285 = vmatpush1.xpose.msra.mxu0 0.0
      %2286 = vmatprep.subr.mxu0 0.0
      %2287 = vmatpush1.xpose.msra.mxu0 0.0
      %2288 = vmatprep.subr.mxu0 0.0
      %2289 = vmatpush1.xpose.msra.mxu0 0.0
      %2290 = vmatprep.subr.mxu0 0.0
      %2291 = vmatpush1.xpose.msra.mxu0 0.0
      %2292 = vmatprep.subr.mxu0 0.0
      %2293 = vmatpush1.xpose.msra.mxu0 0.0
      %2294 = vmatprep.subr.mxu0 0.0
      %2295 = vmatpush1.xpose.msra.mxu0 0.0
      %2296 = vmatprep.subr.mxu0 0.0
      %2297 = vmatpush1.xpose.msra.mxu0 0.0
      %2298 = vmatprep.subr.mxu0 0.0
      %2299 = vmatpush1.xpose.msra.mxu0 %v2266
      %2300 = vmatprep.subr.mxu0 0.0
      %2301 = vmatpush2.xpose.msra.mxu0 0.0
      %2302 = vmatprep.subr.mxu0 0.0
      %2303 = vmatpush2.xpose.msra.mxu0 0.0
      %2304 = vmatprep.subr.mxu0 0.0
      %2305 = vmatpush2.xpose.msra.mxu0 0.0
      %2306 = vmatprep.subr.mxu0 0.0
      %2307 = vmatpush2.xpose.msra.mxu0 0.0
      %2308 = vmatprep.subr.mxu0 0.0
      %2309 = vmatpush2.xpose.msra.mxu0 0.0
      %2310 = vmatprep.subr.mxu0 0.0
      %2311 = vmatpush2.xpose.msra.mxu0 0.0
      %2312 = vmatprep.subr.mxu0 0.0
      %2313 = vmatpush2.xpose.msra.mxu0 0.0
      %2314 = vmatprep.subr.mxu0 0.0
      %2315 = vmatpush2.xpose.msra.mxu0 0.0
      %2316 = vmatprep.subr.mxu0 0.0
      %2317 = vmatpush2.xpose.msra.mxu0 0.0
      %2318 = vmatprep.subr.mxu0 0.0
      %2319 = vmatpush2.xpose.msra.mxu0 0.0
      %2320 = vmatprep.subr.mxu0 0.0
      %2321 = vmatpush2.xpose.msra.mxu0 0.0
      %2322 = vmatprep.subr.mxu0 0.0
      %2323 = vmatpush2.xpose.msra.mxu0 0.0
      %2324 = vmatprep.subr.mxu0 0.0
      %2325 = vmatpush2.xpose.msra.mxu0 0.0
      %2326 = vmatprep.subr.mxu0 0.0
      %2327 = vmatpush2.xpose.msra.mxu0 0.0
      %2328 = vmatprep.subr.mxu0 0.0
      %2329 = vmatpush2.xpose.msra.mxu0 0.0
      %2330 = vmatprep.subr.mxu0 0.0
      %2331 = vmatpush2.xpose.msra.mxu0 0.0
      %2332 = vmatprep.mubr.f32.mxu0 0.0
      %2333 = vmatmul.mubr.f32.gmra.mxu0 %v2266
      %v2334 = vpop.f32.mrf.mxu0
      %v2335 = vadd.f32 0.0, %v2334
      %v2336 = vpop.f32.mrf.mxu0
      %2337 = vdwg.mxu0
      %v2339 = vsel %vm264, %v548, 0
      %2341 = vmatprep.subr.mxu0 0.0
      %2342 = vmatpush1.xpose.msra.mxu0 0.0
      %2343 = vmatprep.subr.mxu0 0.0
      %2344 = vmatpush1.xpose.msra.mxu0 0.0
      %2345 = vmatprep.subr.mxu0 0.0
      %2346 = vmatpush1.xpose.msra.mxu0 0.0
      %2347 = vmatprep.subr.mxu0 0.0
      %2348 = vmatpush1.xpose.msra.mxu0 0.0
      %2349 = vmatprep.subr.mxu0 0.0
      %2350 = vmatpush1.xpose.msra.mxu0 0.0
      %2351 = vmatprep.subr.mxu0 0.0
      %2352 = vmatpush1.xpose.msra.mxu0 0.0
      %2353 = vmatprep.subr.mxu0 0.0
      %2354 = vmatpush1.xpose.msra.mxu0 0.0
      %2355 = vmatprep.subr.mxu0 0.0
      %2356 = vmatpush1.xpose.msra.mxu0 0.0
      %2357 = vmatprep.subr.mxu0 0.0
      %2358 = vmatpush1.xpose.msra.mxu0 0.0
      %2359 = vmatprep.subr.mxu0 0.0
      %2360 = vmatpush1.xpose.msra.mxu0 0.0
      %2361 = vmatprep.subr.mxu0 0.0
      %2362 = vmatpush1.xpose.msra.mxu0 0.0
      %2363 = vmatprep.subr.mxu0 0.0
      %2364 = vmatpush1.xpose.msra.mxu0 0.0
      %2365 = vmatprep.subr.mxu0 0.0
      %2366 = vmatpush1.xpose.msra.mxu0 0.0
      %2367 = vmatprep.subr.mxu0 0.0
      %2368 = vmatpush1.xpose.msra.mxu0 0.0
      %2369 = vmatprep.subr.mxu0 0.0
      %2370 = vmatpush1.xpose.msra.mxu0 0.0
      %2371 = vmatprep.subr.mxu0 0.0
      %2372 = vmatpush1.xpose.msra.mxu0 %v2339
      %2373 = vmatprep.subr.mxu0 0.0
      %2374 = vmatpush2.xpose.msra.mxu0 0.0
      %2375 = vmatprep.subr.mxu0 0.0
      %2376 = vmatpush2.xpose.msra.mxu0 0.0
      %2377 = vmatprep.subr.mxu0 0.0
      %2378 = vmatpush2.xpose.msra.mxu0 0.0
      %2379 = vmatprep.subr.mxu0 0.0
      %2380 = vmatpush2.xpose.msra.mxu0 0.0
      %2381 = vmatprep.subr.mxu0 0.0
      %2382 = vmatpush2.xpose.msra.mxu0 0.0
      %2383 = vmatprep.subr.mxu0 0.0
      %2384 = vmatpush2.xpose.msra.mxu0 0.0
      %2385 = vmatprep.subr.mxu0 0.0
      %2386 = vmatpush2.xpose.msra.mxu0 0.0
      %2387 = vmatprep.subr.mxu0 0.0
      %2388 = vmatpush2.xpose.msra.mxu0 0.0
      %2389 = vmatprep.subr.mxu0 0.0
      %2390 = vmatpush2.xpose.msra.mxu0 0.0
      %2391 = vmatprep.subr.mxu0 0.0
      %2392 = vmatpush2.xpose.msra.mxu0 0.0
      %2393 = vmatprep.subr.mxu0 0.0
      %2394 = vmatpush2.xpose.msra.mxu0 0.0
      %2395 = vmatprep.subr.mxu0 0.0
      %2396 = vmatpush2.xpose.msra.mxu0 0.0
      %2397 = vmatprep.subr.mxu0 0.0
      %2398 = vmatpush2.xpose.msra.mxu0 0.0
      %2399 = vmatprep.subr.mxu0 0.0
      %2400 = vmatpush2.xpose.msra.mxu0 0.0
      %2401 = vmatprep.subr.mxu0 0.0
      %2402 = vmatpush2.xpose.msra.mxu0 0.0
      %2403 = vmatprep.subr.mxu0 0.0
      %2404 = vmatpush2.xpose.msra.mxu0 0.0
      %2405 = vmatprep.mubr.f32.mxu0 0.0
      %2406 = vmatmul.mubr.f32.gmra.mxu0 %v2339
      %v2407 = vpop.f32.mrf.mxu0
      %v2408 = vadd.f32 0.0, %v2407
      %v2409 = vpop.f32.mrf.mxu0
      %2410 = vdwg.mxu0
      %v2412 = vsel %vm264, %v553, 0
      %2414 = vmatprep.subr.mxu0 0.0
      %2415 = vmatpush1.xpose.msra.mxu0 0.0
      %2416 = vmatprep.subr.mxu0 0.0
      %2417 = vmatpush1.xpose.msra.mxu0 0.0
      %2418 = vmatprep.subr.mxu0 0.0
      %2419 = vmatpush1.xpose.msra.mxu0 0.0
      %2420 = vmatprep.subr.mxu0 0.0
      %2421 = vmatpush1.xpose.msra.mxu0 0.0
      %2422 = vmatprep.subr.mxu0 0.0
      %2423 = vmatpush1.xpose.msra.mxu0 0.0
      %2424 = vmatprep.subr.mxu0 0.0
      %2425 = vmatpush1.xpose.msra.mxu0 0.0
      %2426 = vmatprep.subr.mxu0 0.0
      %2427 = vmatpush1.xpose.msra.mxu0 0.0
      %2428 = vmatprep.subr.mxu0 0.0
      %2429 = vmatpush1.xpose.msra.mxu0 0.0
      %2430 = vmatprep.subr.mxu0 0.0
      %2431 = vmatpush1.xpose.msra.mxu0 0.0
      %2432 = vmatprep.subr.mxu0 0.0
      %2433 = vmatpush1.xpose.msra.mxu0 0.0
      %2434 = vmatprep.subr.mxu0 0.0
      %2435 = vmatpush1.xpose.msra.mxu0 0.0
      %2436 = vmatprep.subr.mxu0 0.0
      %2437 = vmatpush1.xpose.msra.mxu0 0.0
      %2438 = vmatprep.subr.mxu0 0.0
      %2439 = vmatpush1.xpose.msra.mxu0 0.0
      %2440 = vmatprep.subr.mxu0 0.0
      %2441 = vmatpush1.xpose.msra.mxu0 0.0
      %2442 = vmatprep.subr.mxu0 0.0
      %2443 = vmatpush1.xpose.msra.mxu0 0.0
      %2444 = vmatprep.subr.mxu0 0.0
      %2445 = vmatpush1.xpose.msra.mxu0 %v2412
      %2446 = vmatprep.subr.mxu0 0.0
      %2447 = vmatpush2.xpose.msra.mxu0 0.0
      %2448 = vmatprep.subr.mxu0 0.0
      %2449 = vmatpush2.xpose.msra.mxu0 0.0
      %2450 = vmatprep.subr.mxu0 0.0
      %2451 = vmatpush2.xpose.msra.mxu0 0.0
      %2452 = vmatprep.subr.mxu0 0.0
      %2453 = vmatpush2.xpose.msra.mxu0 0.0
      %2454 = vmatprep.subr.mxu0 0.0
      %2455 = vmatpush2.xpose.msra.mxu0 0.0
      %2456 = vmatprep.subr.mxu0 0.0
      %2457 = vmatpush2.xpose.msra.mxu0 0.0
      %2458 = vmatprep.subr.mxu0 0.0
      %2459 = vmatpush2.xpose.msra.mxu0 0.0
      %2460 = vmatprep.subr.mxu0 0.0
      %2461 = vmatpush2.xpose.msra.mxu0 0.0
      %2462 = vmatprep.subr.mxu0 0.0
      %2463 = vmatpush2.xpose.msra.mxu0 0.0
      %2464 = vmatprep.subr.mxu0 0.0
      %2465 = vmatpush2.xpose.msra.mxu0 0.0
      %2466 = vmatprep.subr.mxu0 0.0
      %2467 = vmatpush2.xpose.msra.mxu0 0.0
      %2468 = vmatprep.subr.mxu0 0.0
      %2469 = vmatpush2.xpose.msra.mxu0 0.0
      %2470 = vmatprep.subr.mxu0 0.0
      %2471 = vmatpush2.xpose.msra.mxu0 0.0
      %2472 = vmatprep.subr.mxu0 0.0
      %2473 = vmatpush2.xpose.msra.mxu0 0.0
      %2474 = vmatprep.subr.mxu0 0.0
      %2475 = vmatpush2.xpose.msra.mxu0 0.0
      %2476 = vmatprep.subr.mxu0 0.0
      %2477 = vmatpush2.xpose.msra.mxu0 0.0
      %2478 = vmatprep.mubr.f32.mxu0 0.0
      %2479 = vmatmul.mubr.f32.gmra.mxu0 %v2412
      %v2480 = vpop.f32.mrf.mxu0
      %v2481 = vadd.f32 0.0, %v2480
      %v2482 = vpop.f32.mrf.mxu0
      %2483 = vdwg.mxu0
      %v2485 = vsel %vm264, %v558, 0
      %2487 = vmatprep.subr.mxu0 0.0
      %2488 = vmatpush1.xpose.msra.mxu0 0.0
      %2489 = vmatprep.subr.mxu0 0.0
      %2490 = vmatpush1.xpose.msra.mxu0 0.0
      %2491 = vmatprep.subr.mxu0 0.0
      %2492 = vmatpush1.xpose.msra.mxu0 0.0
      %2493 = vmatprep.subr.mxu0 0.0
      %2494 = vmatpush1.xpose.msra.mxu0 0.0
      %2495 = vmatprep.subr.mxu0 0.0
      %2496 = vmatpush1.xpose.msra.mxu0 0.0
      %2497 = vmatprep.subr.mxu0 0.0
      %2498 = vmatpush1.xpose.msra.mxu0 0.0
      %2499 = vmatprep.subr.mxu0 0.0
      %2500 = vmatpush1.xpose.msra.mxu0 0.0
      %2501 = vmatprep.subr.mxu0 0.0
      %2502 = vmatpush1.xpose.msra.mxu0 0.0
      %2503 = vmatprep.subr.mxu0 0.0
      %2504 = vmatpush1.xpose.msra.mxu0 0.0
      %2505 = vmatprep.subr.mxu0 0.0
      %2506 = vmatpush1.xpose.msra.mxu0 0.0
      %2507 = vmatprep.subr.mxu0 0.0
      %2508 = vmatpush1.xpose.msra.mxu0 0.0
      %2509 = vmatprep.subr.mxu0 0.0
      %2510 = vmatpush1.xpose.msra.mxu0 0.0
      %2511 = vmatprep.subr.mxu0 0.0
      %2512 = vmatpush1.xpose.msra.mxu0 0.0
      %2513 = vmatprep.subr.mxu0 0.0
      %2514 = vmatpush1.xpose.msra.mxu0 0.0
      %2515 = vmatprep.subr.mxu0 0.0
      %2516 = vmatpush1.xpose.msra.mxu0 0.0
      %2517 = vmatprep.subr.mxu0 0.0
      %2518 = vmatpush1.xpose.msra.mxu0 %v2485
      %2519 = vmatprep.subr.mxu0 0.0
      %2520 = vmatpush2.xpose.msra.mxu0 0.0
      %2521 = vmatprep.subr.mxu0 0.0
      %2522 = vmatpush2.xpose.msra.mxu0 0.0
      %2523 = vmatprep.subr.mxu0 0.0
      %2524 = vmatpush2.xpose.msra.mxu0 0.0
      %2525 = vmatprep.subr.mxu0 0.0
      %2526 = vmatpush2.xpose.msra.mxu0 0.0
      %2527 = vmatprep.subr.mxu0 0.0
      %2528 = vmatpush2.xpose.msra.mxu0 0.0
      %2529 = vmatprep.subr.mxu0 0.0
      %2530 = vmatpush2.xpose.msra.mxu0 0.0
      %2531 = vmatprep.subr.mxu0 0.0
      %2532 = vmatpush2.xpose.msra.mxu0 0.0
      %2533 = vmatprep.subr.mxu0 0.0
      %2534 = vmatpush2.xpose.msra.mxu0 0.0
      %2535 = vmatprep.subr.mxu0 0.0
      %2536 = vmatpush2.xpose.msra.mxu0 0.0
      %2537 = vmatprep.subr.mxu0 0.0
      %2538 = vmatpush2.xpose.msra.mxu0 0.0
      %2539 = vmatprep.subr.mxu0 0.0
      %2540 = vmatpush2.xpose.msra.mxu0 0.0
      %2541 = vmatprep.subr.mxu0 0.0
      %2542 = vmatpush2.xpose.msra.mxu0 0.0
      %2543 = vmatprep.subr.mxu0 0.0
      %2544 = vmatpush2.xpose.msra.mxu0 0.0
      %2545 = vmatprep.subr.mxu0 0.0
      %2546 = vmatpush2.xpose.msra.mxu0 0.0
      %2547 = vmatprep.subr.mxu0 0.0
      %2548 = vmatpush2.xpose.msra.mxu0 0.0
      %2549 = vmatprep.subr.mxu0 0.0
      %2550 = vmatpush2.xpose.msra.mxu0 0.0
      %2551 = vmatprep.mubr.f32.mxu0 0.0
      %2552 = vmatmul.mubr.f32.gmra.mxu0 %v2485
      %v2553 = vpop.f32.mrf.mxu0
      %v2554 = vadd.f32 0.0, %v2553
      %v2555 = vpop.f32.mrf.mxu0
      %2556 = vdwg.mxu0
      %v2558 = vsel %vm264, %v563, 0
      %2560 = vmatprep.subr.mxu0 0.0
      %2561 = vmatpush1.xpose.msra.mxu0 0.0
      %2562 = vmatprep.subr.mxu0 0.0
      %2563 = vmatpush1.xpose.msra.mxu0 0.0
      %2564 = vmatprep.subr.mxu0 0.0
      %2565 = vmatpush1.xpose.msra.mxu0 0.0
      %2566 = vmatprep.subr.mxu0 0.0
      %2567 = vmatpush1.xpose.msra.mxu0 0.0
      %2568 = vmatprep.subr.mxu0 0.0
      %2569 = vmatpush1.xpose.msra.mxu0 0.0
      %2570 = vmatprep.subr.mxu0 0.0
      %2571 = vmatpush1.xpose.msra.mxu0 0.0
      %2572 = vmatprep.subr.mxu0 0.0
      %2573 = vmatpush1.xpose.msra.mxu0 0.0
      %2574 = vmatprep.subr.mxu0 0.0
      %2575 = vmatpush1.xpose.msra.mxu0 0.0
      %2576 = vmatprep.subr.mxu0 0.0
      %2577 = vmatpush1.xpose.msra.mxu0 0.0
      %2578 = vmatprep.subr.mxu0 0.0
      %2579 = vmatpush1.xpose.msra.mxu0 0.0
      %2580 = vmatprep.subr.mxu0 0.0
      %2581 = vmatpush1.xpose.msra.mxu0 0.0
      %2582 = vmatprep.subr.mxu0 0.0
      %2583 = vmatpush1.xpose.msra.mxu0 0.0
      %2584 = vmatprep.subr.mxu0 0.0
      %2585 = vmatpush1.xpose.msra.mxu0 0.0
      %2586 = vmatprep.subr.mxu0 0.0
      %2587 = vmatpush1.xpose.msra.mxu0 0.0
      %2588 = vmatprep.subr.mxu0 0.0
      %2589 = vmatpush1.xpose.msra.mxu0 0.0
      %2590 = vmatprep.subr.mxu0 0.0
      %2591 = vmatpush1.xpose.msra.mxu0 %v2558
      %2592 = vmatprep.subr.mxu0 0.0
      %2593 = vmatpush2.xpose.msra.mxu0 0.0
      %2594 = vmatprep.subr.mxu0 0.0
      %2595 = vmatpush2.xpose.msra.mxu0 0.0
      %2596 = vmatprep.subr.mxu0 0.0
      %2597 = vmatpush2.xpose.msra.mxu0 0.0
      %2598 = vmatprep.subr.mxu0 0.0
      %2599 = vmatpush2.xpose.msra.mxu0 0.0
      %2600 = vmatprep.subr.mxu0 0.0
      %2601 = vmatpush2.xpose.msra.mxu0 0.0
      %2602 = vmatprep.subr.mxu0 0.0
      %2603 = vmatpush2.xpose.msra.mxu0 0.0
      %2604 = vmatprep.subr.mxu0 0.0
      %2605 = vmatpush2.xpose.msra.mxu0 0.0
      %2606 = vmatprep.subr.mxu0 0.0
      %2607 = vmatpush2.xpose.msra.mxu0 0.0
      %2608 = vmatprep.subr.mxu0 0.0
      %2609 = vmatpush2.xpose.msra.mxu0 0.0
      %2610 = vmatprep.subr.mxu0 0.0
      %2611 = vmatpush2.xpose.msra.mxu0 0.0
      %2612 = vmatprep.subr.mxu0 0.0
      %2613 = vmatpush2.xpose.msra.mxu0 0.0
      %2614 = vmatprep.subr.mxu0 0.0
      %2615 = vmatpush2.xpose.msra.mxu0 0.0
      %2616 = vmatprep.subr.mxu0 0.0
      %2617 = vmatpush2.xpose.msra.mxu0 0.0
      %2618 = vmatprep.subr.mxu0 0.0
      %2619 = vmatpush2.xpose.msra.mxu0 0.0
      %2620 = vmatprep.subr.mxu0 0.0
      %2621 = vmatpush2.xpose.msra.mxu0 0.0
      %2622 = vmatprep.subr.mxu0 0.0
      %2623 = vmatpush2.xpose.msra.mxu0 0.0
      %2624 = vmatprep.mubr.f32.mxu0 0.0
      %2625 = vmatmul.mubr.f32.gmra.mxu0 %v2558
      %v2626 = vpop.f32.mrf.mxu0
      %v2627 = vadd.f32 0.0, %v2626
      %v2628 = vpop.f32.mrf.mxu0
      %2629 = vdwg.mxu0
      %v2631 = vsel %vm264, %v568, 0
      %2633 = vmatprep.subr.mxu0 0.0
      %2634 = vmatpush1.xpose.msra.mxu0 0.0
      %2635 = vmatprep.subr.mxu0 0.0
      %2636 = vmatpush1.xpose.msra.mxu0 0.0
      %2637 = vmatprep.subr.mxu0 0.0
      %2638 = vmatpush1.xpose.msra.mxu0 0.0
      %2639 = vmatprep.subr.mxu0 0.0
      %2640 = vmatpush1.xpose.msra.mxu0 0.0
      %2641 = vmatprep.subr.mxu0 0.0
      %2642 = vmatpush1.xpose.msra.mxu0 0.0
      %2643 = vmatprep.subr.mxu0 0.0
      %2644 = vmatpush1.xpose.msra.mxu0 0.0
      %2645 = vmatprep.subr.mxu0 0.0
      %2646 = vmatpush1.xpose.msra.mxu0 0.0
      %2647 = vmatprep.subr.mxu0 0.0
      %2648 = vmatpush1.xpose.msra.mxu0 0.0
      %2649 = vmatprep.subr.mxu0 0.0
      %2650 = vmatpush1.xpose.msra.mxu0 0.0
      %2651 = vmatprep.subr.mxu0 0.0
      %2652 = vmatpush1.xpose.msra.mxu0 0.0
      %2653 = vmatprep.subr.mxu0 0.0
      %2654 = vmatpush1.xpose.msra.mxu0 0.0
      %2655 = vmatprep.subr.mxu0 0.0
      %2656 = vmatpush1.xpose.msra.mxu0 0.0
      %2657 = vmatprep.subr.mxu0 0.0
      %2658 = vmatpush1.xpose.msra.mxu0 0.0
      %2659 = vmatprep.subr.mxu0 0.0
      %2660 = vmatpush1.xpose.msra.mxu0 0.0
      %2661 = vmatprep.subr.mxu0 0.0
      %2662 = vmatpush1.xpose.msra.mxu0 0.0
      %2663 = vmatprep.subr.mxu0 0.0
      %2664 = vmatpush1.xpose.msra.mxu0 %v2631
      %2665 = vmatprep.subr.mxu0 0.0
      %2666 = vmatpush2.xpose.msra.mxu0 0.0
      %2667 = vmatprep.subr.mxu0 0.0
      %2668 = vmatpush2.xpose.msra.mxu0 0.0
      %2669 = vmatprep.subr.mxu0 0.0
      %2670 = vmatpush2.xpose.msra.mxu0 0.0
      %2671 = vmatprep.subr.mxu0 0.0
      %2672 = vmatpush2.xpose.msra.mxu0 0.0
      %2673 = vmatprep.subr.mxu0 0.0
      %2674 = vmatpush2.xpose.msra.mxu0 0.0
      %2675 = vmatprep.subr.mxu0 0.0
      %2676 = vmatpush2.xpose.msra.mxu0 0.0
      %2677 = vmatprep.subr.mxu0 0.0
      %2678 = vmatpush2.xpose.msra.mxu0 0.0
      %2679 = vmatprep.subr.mxu0 0.0
      %2680 = vmatpush2.xpose.msra.mxu0 0.0
      %2681 = vmatprep.subr.mxu0 0.0
      %2682 = vmatpush2.xpose.msra.mxu0 0.0
      %2683 = vmatprep.subr.mxu0 0.0
      %2684 = vmatpush2.xpose.msra.mxu0 0.0
      %2685 = vmatprep.subr.mxu0 0.0
      %2686 = vmatpush2.xpose.msra.mxu0 0.0
      %2687 = vmatprep.subr.mxu0 0.0
      %2688 = vmatpush2.xpose.msra.mxu0 0.0
      %2689 = vmatprep.subr.mxu0 0.0
      %2690 = vmatpush2.xpose.msra.mxu0 0.0
      %2691 = vmatprep.subr.mxu0 0.0
      %2692 = vmatpush2.xpose.msra.mxu0 0.0
      %2693 = vmatprep.subr.mxu0 0.0
      %2694 = vmatpush2.xpose.msra.mxu0 0.0
      %2695 = vmatprep.subr.mxu0 0.0
      %2696 = vmatpush2.xpose.msra.mxu0 0.0
      %2697 = vmatprep.mubr.f32.mxu0 0.0
      %2698 = vmatmul.mubr.f32.gmra.mxu0 %v2631
      %v2699 = vpop.f32.mrf.mxu0
      %v2700 = vadd.f32 0.0, %v2699
      %v2701 = vpop.f32.mrf.mxu0
      %2702 = vdwg.mxu0
      %v2704 = vsel %vm264, %v573, 0
      %2706 = vmatprep.subr.mxu0 0.0
      %2707 = vmatpush1.xpose.msra.mxu0 0.0
      %2708 = vmatprep.subr.mxu0 0.0
      %2709 = vmatpush1.xpose.msra.mxu0 0.0
      %2710 = vmatprep.subr.mxu0 0.0
      %2711 = vmatpush1.xpose.msra.mxu0 0.0
      %2712 = vmatprep.subr.mxu0 0.0
      %2713 = vmatpush1.xpose.msra.mxu0 0.0
      %2714 = vmatprep.subr.mxu0 0.0
      %2715 = vmatpush1.xpose.msra.mxu0 0.0
      %2716 = vmatprep.subr.mxu0 0.0
      %2717 = vmatpush1.xpose.msra.mxu0 0.0
      %2718 = vmatprep.subr.mxu0 0.0
      %2719 = vmatpush1.xpose.msra.mxu0 0.0
      %2720 = vmatprep.subr.mxu0 0.0
      %2721 = vmatpush1.xpose.msra.mxu0 0.0
      %2722 = vmatprep.subr.mxu0 0.0
      %2723 = vmatpush1.xpose.msra.mxu0 0.0
      %2724 = vmatprep.subr.mxu0 0.0
      %2725 = vmatpush1.xpose.msra.mxu0 0.0
      %2726 = vmatprep.subr.mxu0 0.0
      %2727 = vmatpush1.xpose.msra.mxu0 0.0
      %2728 = vmatprep.subr.mxu0 0.0
      %2729 = vmatpush1.xpose.msra.mxu0 0.0
      %2730 = vmatprep.subr.mxu0 0.0
      %2731 = vmatpush1.xpose.msra.mxu0 0.0
      %2732 = vmatprep.subr.mxu0 0.0
      %2733 = vmatpush1.xpose.msra.mxu0 0.0
      %2734 = vmatprep.subr.mxu0 0.0
      %2735 = vmatpush1.xpose.msra.mxu0 0.0
      %2736 = vmatprep.subr.mxu0 0.0
      %2737 = vmatpush1.xpose.msra.mxu0 %v2704
      %2738 = vmatprep.subr.mxu0 0.0
      %2739 = vmatpush2.xpose.msra.mxu0 0.0
      %2740 = vmatprep.subr.mxu0 0.0
      %2741 = vmatpush2.xpose.msra.mxu0 0.0
      %2742 = vmatprep.subr.mxu0 0.0
      %2743 = vmatpush2.xpose.msra.mxu0 0.0
      %2744 = vmatprep.subr.mxu0 0.0
      %2745 = vmatpush2.xpose.msra.mxu0 0.0
      %2746 = vmatprep.subr.mxu0 0.0
      %2747 = vmatpush2.xpose.msra.mxu0 0.0
      %2748 = vmatprep.subr.mxu0 0.0
      %2749 = vmatpush2.xpose.msra.mxu0 0.0
      %2750 = vmatprep.subr.mxu0 0.0
      %2751 = vmatpush2.xpose.msra.mxu0 0.0
      %2752 = vmatprep.subr.mxu0 0.0
      %2753 = vmatpush2.xpose.msra.mxu0 0.0
      %2754 = vmatprep.subr.mxu0 0.0
      %2755 = vmatpush2.xpose.msra.mxu0 0.0
      %2756 = vmatprep.subr.mxu0 0.0
      %2757 = vmatpush2.xpose.msra.mxu0 0.0
      %2758 = vmatprep.subr.mxu0 0.0
      %2759 = vmatpush2.xpose.msra.mxu0 0.0
      %2760 = vmatprep.subr.mxu0 0.0
      %2761 = vmatpush2.xpose.msra.mxu0 0.0
      %2762 = vmatprep.subr.mxu0 0.0
      %2763 = vmatpush2.xpose.msra.mxu0 0.0
      %2764 = vmatprep.subr.mxu0 0.0
      %2765 = vmatpush2.xpose.msra.mxu0 0.0
      %2766 = vmatprep.subr.mxu0 0.0
      %2767 = vmatpush2.xpose.msra.mxu0 0.0
      %2768 = vmatprep.subr.mxu0 0.0
      %2769 = vmatpush2.xpose.msra.mxu0 0.0
      %2770 = vmatprep.mubr.f32.mxu0 0.0
      %2771 = vmatmul.mubr.f32.gmra.mxu0 %v2704
      %v2772 = vpop.f32.mrf.mxu0
      %v2773 = vadd.f32 0.0, %v2772
      %v2774 = vpop.f32.mrf.mxu0
      %2775 = vdwg.mxu0
      %v2777 = vsel %vm264, %v578, 0
      %2779 = vmatprep.subr.mxu0 0.0
      %2780 = vmatpush1.xpose.msra.mxu0 0.0
      %2781 = vmatprep.subr.mxu0 0.0
      %2782 = vmatpush1.xpose.msra.mxu0 0.0
      %2783 = vmatprep.subr.mxu0 0.0
      %2784 = vmatpush1.xpose.msra.mxu0 0.0
      %2785 = vmatprep.subr.mxu0 0.0
      %2786 = vmatpush1.xpose.msra.mxu0 0.0
      %2787 = vmatprep.subr.mxu0 0.0
      %2788 = vmatpush1.xpose.msra.mxu0 0.0
      %2789 = vmatprep.subr.mxu0 0.0
      %2790 = vmatpush1.xpose.msra.mxu0 0.0
      %2791 = vmatprep.subr.mxu0 0.0
      %2792 = vmatpush1.xpose.msra.mxu0 0.0
      %2793 = vmatprep.subr.mxu0 0.0
      %2794 = vmatpush1.xpose.msra.mxu0 0.0
      %2795 = vmatprep.subr.mxu0 0.0
      %2796 = vmatpush1.xpose.msra.mxu0 0.0
      %2797 = vmatprep.subr.mxu0 0.0
      %2798 = vmatpush1.xpose.msra.mxu0 0.0
      %2799 = vmatprep.subr.mxu0 0.0
      %2800 = vmatpush1.xpose.msra.mxu0 0.0
      %2801 = vmatprep.subr.mxu0 0.0
      %2802 = vmatpush1.xpose.msra.mxu0 0.0
      %2803 = vmatprep.subr.mxu0 0.0
      %2804 = vmatpush1.xpose.msra.mxu0 0.0
      %2805 = vmatprep.subr.mxu0 0.0
      %2806 = vmatpush1.xpose.msra.mxu0 0.0
      %2807 = vmatprep.subr.mxu0 0.0
      %2808 = vmatpush1.xpose.msra.mxu0 0.0
      %2809 = vmatprep.subr.mxu0 0.0
      %2810 = vmatpush1.xpose.msra.mxu0 %v2777
      %2811 = vmatprep.subr.mxu0 0.0
      %2812 = vmatpush2.xpose.msra.mxu0 0.0
      %2813 = vmatprep.subr.mxu0 0.0
      %2814 = vmatpush2.xpose.msra.mxu0 0.0
      %2815 = vmatprep.subr.mxu0 0.0
      %2816 = vmatpush2.xpose.msra.mxu0 0.0
      %2817 = vmatprep.subr.mxu0 0.0
      %2818 = vmatpush2.xpose.msra.mxu0 0.0
      %2819 = vmatprep.subr.mxu0 0.0
      %2820 = vmatpush2.xpose.msra.mxu0 0.0
      %2821 = vmatprep.subr.mxu0 0.0
      %2822 = vmatpush2.xpose.msra.mxu0 0.0
      %2823 = vmatprep.subr.mxu0 0.0
      %2824 = vmatpush2.xpose.msra.mxu0 0.0
      %2825 = vmatprep.subr.mxu0 0.0
      %2826 = vmatpush2.xpose.msra.mxu0 0.0
      %2827 = vmatprep.subr.mxu0 0.0
      %2828 = vmatpush2.xpose.msra.mxu0 0.0
      %2829 = vmatprep.subr.mxu0 0.0
      %2830 = vmatpush2.xpose.msra.mxu0 0.0
      %2831 = vmatprep.subr.mxu0 0.0
      %2832 = vmatpush2.xpose.msra.mxu0 0.0
      %2833 = vmatprep.subr.mxu0 0.0
      %2834 = vmatpush2.xpose.msra.mxu0 0.0
      %2835 = vmatprep.subr.mxu0 0.0
      %2836 = vmatpush2.xpose.msra.mxu0 0.0
      %2837 = vmatprep.subr.mxu0 0.0
      %2838 = vmatpush2.xpose.msra.mxu0 0.0
      %2839 = vmatprep.subr.mxu0 0.0
      %2840 = vmatpush2.xpose.msra.mxu0 0.0
      %2841 = vmatprep.subr.mxu0 0.0
      %2842 = vmatpush2.xpose.msra.mxu0 0.0
      %2843 = vmatprep.mubr.f32.mxu0 0.0
      %2844 = vmatmul.mubr.f32.gmra.mxu0 %v2777
      %v2845 = vpop.f32.mrf.mxu0
      %v2846 = vadd.f32 0.0, %v2845
      %v2847 = vpop.f32.mrf.mxu0
      %2848 = vdwg.mxu0
      %v2850 = vsel %vm264, %v583, 0
      %2852 = vmatprep.subr.mxu0 0.0
      %2853 = vmatpush1.xpose.msra.mxu0 0.0
      %2854 = vmatprep.subr.mxu0 0.0
      %2855 = vmatpush1.xpose.msra.mxu0 0.0
      %2856 = vmatprep.subr.mxu0 0.0
      %2857 = vmatpush1.xpose.msra.mxu0 0.0
      %2858 = vmatprep.subr.mxu0 0.0
      %2859 = vmatpush1.xpose.msra.mxu0 0.0
      %2860 = vmatprep.subr.mxu0 0.0
      %2861 = vmatpush1.xpose.msra.mxu0 0.0
      %2862 = vmatprep.subr.mxu0 0.0
      %2863 = vmatpush1.xpose.msra.mxu0 0.0
      %2864 = vmatprep.subr.mxu0 0.0
      %2865 = vmatpush1.xpose.msra.mxu0 0.0
      %2866 = vmatprep.subr.mxu0 0.0
      %2867 = vmatpush1.xpose.msra.mxu0 0.0
      %2868 = vmatprep.subr.mxu0 0.0
      %2869 = vmatpush1.xpose.msra.mxu0 0.0
      %2870 = vmatprep.subr.mxu0 0.0
      %2871 = vmatpush1.xpose.msra.mxu0 0.0
      %2872 = vmatprep.subr.mxu0 0.0
      %2873 = vmatpush1.xpose.msra.mxu0 0.0
      %2874 = vmatprep.subr.mxu0 0.0
      %2875 = vmatpush1.xpose.msra.mxu0 0.0
      %2876 = vmatprep.subr.mxu0 0.0
      %2877 = vmatpush1.xpose.msra.mxu0 0.0
      %2878 = vmatprep.subr.mxu0 0.0
      %2879 = vmatpush1.xpose.msra.mxu0 0.0
      %2880 = vmatprep.subr.mxu0 0.0
      %2881 = vmatpush1.xpose.msra.mxu0 0.0
      %2882 = vmatprep.subr.mxu0 0.0
      %2883 = vmatpush1.xpose.msra.mxu0 %v2850
      %2884 = vmatprep.subr.mxu0 0.0
      %2885 = vmatpush2.xpose.msra.mxu0 0.0
      %2886 = vmatprep.subr.mxu0 0.0
      %2887 = vmatpush2.xpose.msra.mxu0 0.0
      %2888 = vmatprep.subr.mxu0 0.0
      %2889 = vmatpush2.xpose.msra.mxu0 0.0
      %2890 = vmatprep.subr.mxu0 0.0
      %2891 = vmatpush2.xpose.msra.mxu0 0.0
      %2892 = vmatprep.subr.mxu0 0.0
      %2893 = vmatpush2.xpose.msra.mxu0 0.0
      %2894 = vmatprep.subr.mxu0 0.0
      %2895 = vmatpush2.xpose.msra.mxu0 0.0
      %2896 = vmatprep.subr.mxu0 0.0
      %2897 = vmatpush2.xpose.msra.mxu0 0.0
      %2898 = vmatprep.subr.mxu0 0.0
      %2899 = vmatpush2.xpose.msra.mxu0 0.0
      %2900 = vmatprep.subr.mxu0 0.0
      %2901 = vmatpush2.xpose.msra.mxu0 0.0
      %2902 = vmatprep.subr.mxu0 0.0
      %2903 = vmatpush2.xpose.msra.mxu0 0.0
      %2904 = vmatprep.subr.mxu0 0.0
      %2905 = vmatpush2.xpose.msra.mxu0 0.0
      %2906 = vmatprep.subr.mxu0 0.0
      %2907 = vmatpush2.xpose.msra.mxu0 0.0
      %2908 = vmatprep.subr.mxu0 0.0
      %2909 = vmatpush2.xpose.msra.mxu0 0.0
      %2910 = vmatprep.subr.mxu0 0.0
      %2911 = vmatpush2.xpose.msra.mxu0 0.0
      %2912 = vmatprep.subr.mxu0 0.0
      %2913 = vmatpush2.xpose.msra.mxu0 0.0
      %2914 = vmatprep.subr.mxu0 0.0
      %2915 = vmatpush2.xpose.msra.mxu0 0.0
      %2916 = vmatprep.mubr.f32.mxu0 0.0
      %2917 = vmatmul.mubr.f32.gmra.mxu0 %v2850
      %v2918 = vpop.f32.mrf.mxu0
      %v2919 = vadd.f32 0.0, %v2918
      %v2920 = vpop.f32.mrf.mxu0
      %2921 = vdwg.mxu0
      %2922 = vset.pattern.permute.xlu0 34
      %2923 = vperm.xlu0 %2922, %v428
      %v2924 = vpop.permute.xlu0 %2923
      %2926 = vset.pattern.permute.xlu0 34
      %2927 = vperm.xlu0 %2926, %v433
      %v2928 = vpop.permute.xlu0 %2927
      %2930 = vset.pattern.permute.xlu0 34
      %2931 = vperm.xlu0 %2930, %v438
      %v2932 = vpop.permute.xlu0 %2931
      %2934 = vset.pattern.permute.xlu0 34
      %2935 = vperm.xlu0 %2934, %v443
      %v2936 = vpop.permute.xlu0 %2935
      %2938 = vset.pattern.permute.xlu0 34
      %2939 = vperm.xlu0 %2938, %v448
      %v2940 = vpop.permute.xlu0 %2939
      %2942 = vset.pattern.permute.xlu0 34
      %2943 = vperm.xlu0 %2942, %v453
      %v2944 = vpop.permute.xlu0 %2943
      %2946 = vset.pattern.permute.xlu0 34
      %2947 = vperm.xlu0 %2946, %v458
      %v2948 = vpop.permute.xlu0 %2947
      %2950 = vset.pattern.permute.xlu0 34
      %2951 = vperm.xlu0 %2950, %v463
      %v2952 = vpop.permute.xlu0 %2951
      %2954 = vset.pattern.permute.xlu0 34
      %2955 = vperm.xlu0 %2954, %v468
      %v2956 = vpop.permute.xlu0 %2955
      %2958 = vset.pattern.permute.xlu0 34
      %2959 = vperm.xlu0 %2958, %v473
      %v2960 = vpop.permute.xlu0 %2959
      %2962 = vset.pattern.permute.xlu0 34
      %2963 = vperm.xlu0 %2962, %v478
      %v2964 = vpop.permute.xlu0 %2963
      %2966 = vset.pattern.permute.xlu0 34
      %2967 = vperm.xlu0 %2966, %v483
      %v2968 = vpop.permute.xlu0 %2967
      %2970 = vset.pattern.permute.xlu0 34
      %2971 = vperm.xlu0 %2970, %v488
      %v2972 = vpop.permute.xlu0 %2971
      %2974 = vset.pattern.permute.xlu0 34
      %2975 = vperm.xlu0 %2974, %v493
      %v2976 = vpop.permute.xlu0 %2975
      %2978 = vset.pattern.permute.xlu0 34
      %2979 = vperm.xlu0 %2978, %v498
      %v2980 = vpop.permute.xlu0 %2979
      %2982 = vset.pattern.permute.xlu0 34
      %2983 = vperm.xlu0 %2982, %v503
      %v2984 = vpop.permute.xlu0 %2983
      %2986 = vset.pattern.permute.xlu0 34
      %2987 = vperm.xlu0 %2986, %v508
      %v2988 = vpop.permute.xlu0 %2987
      %2990 = vset.pattern.permute.xlu0 34
      %2991 = vperm.xlu0 %2990, %v513
      %v2992 = vpop.permute.xlu0 %2991
      %2994 = vset.pattern.permute.xlu0 34
      %2995 = vperm.xlu0 %2994, %v518
      %v2996 = vpop.permute.xlu0 %2995
      %2998 = vset.pattern.permute.xlu0 34
      %2999 = vperm.xlu0 %2998, %v523
      %v3000 = vpop.permute.xlu0 %2999
      %3002 = vset.pattern.permute.xlu0 34
      %3003 = vperm.xlu0 %3002, %v528
      %v3004 = vpop.permute.xlu0 %3003
      %3006 = vset.pattern.permute.xlu0 34
      %3007 = vperm.xlu0 %3006, %v533
      %v3008 = vpop.permute.xlu0 %3007
      %3010 = vset.pattern.permute.xlu0 34
      %3011 = vperm.xlu0 %3010, %v538
      %v3012 = vpop.permute.xlu0 %3011
      %3014 = vset.pattern.permute.xlu0 34
      %3015 = vperm.xlu0 %3014, %v543
      %v3016 = vpop.permute.xlu0 %3015
      %3018 = vset.pattern.permute.xlu0 34
      %3019 = vperm.xlu0 %3018, %v548
      %v3020 = vpop.permute.xlu0 %3019
      %3022 = vset.pattern.permute.xlu0 34
      %3023 = vperm.xlu0 %3022, %v553
      %v3024 = vpop.permute.xlu0 %3023
      %3026 = vset.pattern.permute.xlu0 34
      %3027 = vperm.xlu0 %3026, %v558
      %v3028 = vpop.permute.xlu0 %3027
      %3030 = vset.pattern.permute.xlu0 34
      %3031 = vperm.xlu0 %3030, %v563
      %v3032 = vpop.permute.xlu0 %3031
      %3034 = vset.pattern.permute.xlu0 34
      %3035 = vperm.xlu0 %3034, %v568
      %v3036 = vpop.permute.xlu0 %3035
      %3038 = vset.pattern.permute.xlu0 34
      %3039 = vperm.xlu0 %3038, %v573
      %v3040 = vpop.permute.xlu0 %3039
      %3042 = vset.pattern.permute.xlu0 34
      %3043 = vperm.xlu0 %3042, %v578
      %v3044 = vpop.permute.xlu0 %3043
      %3046 = vset.pattern.permute.xlu0 34
      %3047 = vperm.xlu0 %3046, %v583
      %v3048 = vpop.permute.xlu0 %3047
      %v3050 = vmul.f32 %v2924, %v656
      %v3051 = vmul.f32 %v2928, %v729
      %v3052 = vmul.f32 %v2932, %v802
      %v3053 = vmul.f32 %v2936, %v875
      %v3054 = vmul.f32 %v2940, %v948
      %v3055 = vmul.f32 %v2944, %v1021
      %v3056 = vmul.f32 %v2948, %v1094
      %v3057 = vmul.f32 %v2952, %v1167
      %v3058 = vmul.f32 %v2956, %v1240
      %v3059 = vmul.f32 %v2960, %v1313
      %v3060 = vmul.f32 %v2964, %v1386
      %v3061 = vmul.f32 %v2968, %v1459
      %v3062 = vmul.f32 %v2972, %v1532
      %v3063 = vmul.f32 %v2976, %v1605
      %v3064 = vmul.f32 %v2980, %v1678
      %v3065 = vmul.f32 %v2984, %v1751
      %v3066 = vmul.f32 %v2988, %v1824
      %v3067 = vmul.f32 %v2992, %v1897
      %v3068 = vmul.f32 %v2996, %v1970
      %v3069 = vmul.f32 %v3000, %v2043
      %v3070 = vmul.f32 %v3004, %v2116
      %v3071 = vmul.f32 %v3008, %v2189
      %v3072 = vmul.f32 %v3012, %v2262
      %v3073 = vmul.f32 %v3016, %v2335
      %v3074 = vmul.f32 %v3020, %v2408
      %v3075 = vmul.f32 %v3024, %v2481
      %v3076 = vmul.f32 %v3028, %v2554
      %v3077 = vmul.f32 %v3032, %v2627
      %v3078 = vmul.f32 %v3036, %v2700
      %v3079 = vmul.f32 %v3040, %v2773
      %v3080 = vmul.f32 %v3044, %v2846
      %v3081 = vmul.f32 %v3048, %v2919
      %v3082 = vld [vmem:[%s1] sm:$0xff]
      %v3083 = vmul.f32 %v3050, %v3082
      %v3084 = vmul.f32 %v3051, %v3082
      %v3085 = vmul.f32 %v3052, %v3082
      %v3086 = vmul.f32 %v3053, %v3082
      %v3087 = vmul.f32 %v3054, %v3082
      %v3088 = vmul.f32 %v3055, %v3082
      %v3089 = vmul.f32 %v3056, %v3082
      %v3090 = vmul.f32 %v3057, %v3082
      %v3091 = vmul.f32 %v3058, %v3082
      %v3092 = vmul.f32 %v3059, %v3082
      %v3093 = vmul.f32 %v3060, %v3082
      %v3094 = vmul.f32 %v3061, %v3082
      %v3095 = vmul.f32 %v3062, %v3082
      %v3096 = vmul.f32 %v3063, %v3082
      %v3097 = vmul.f32 %v3064, %v3082
      %v3098 = vmul.f32 %v3065, %v3082
      %v3099 = vmul.f32 %v3066, %v3082
      %v3100 = vmul.f32 %v3067, %v3082
      %v3101 = vmul.f32 %v3068, %v3082
      %v3102 = vmul.f32 %v3069, %v3082
      %v3103 = vmul.f32 %v3070, %v3082
      %v3104 = vmul.f32 %v3071, %v3082
      %v3105 = vmul.f32 %v3072, %v3082
      %v3106 = vmul.f32 %v3073, %v3082
      %v3107 = vmul.f32 %v3074, %v3082
      %v3108 = vmul.f32 %v3075, %v3082
      %v3109 = vmul.f32 %v3076, %v3082
      %v3110 = vmul.f32 %v3077, %v3082
      %v3111 = vmul.f32 %v3078, %v3082
      %v3112 = vmul.f32 %v3079, %v3082
      %v3113 = vmul.f32 %v3080, %v3082
      %v3114 = vmul.f32 %v3081, %v3082
      %v3115 = vld [vmem:[%s2] sm:$0xff]
      %3116 = vset.pattern.permute.xlu0 33
      %3117 = vperm.xlu0 %3116, %v428
      %v3118 = vpop.permute.xlu0 %3117
      %3120 = vset.pattern.permute.xlu0 33
      %3121 = vperm.xlu0 %3120, %v433
      %v3122 = vpop.permute.xlu0 %3121
      %3124 = vset.pattern.permute.xlu0 33
      %3125 = vperm.xlu0 %3124, %v438
      %v3126 = vpop.permute.xlu0 %3125
      %3128 = vset.pattern.permute.xlu0 33
      %3129 = vperm.xlu0 %3128, %v443
      %v3130 = vpop.permute.xlu0 %3129
      %3132 = vset.pattern.permute.xlu0 33
      %3133 = vperm.xlu0 %3132, %v448
      %v3134 = vpop.permute.xlu0 %3133
      %3136 = vset.pattern.permute.xlu0 33
      %3137 = vperm.xlu0 %3136, %v453
      %v3138 = vpop.permute.xlu0 %3137
      %3140 = vset.pattern.permute.xlu0 33
      %3141 = vperm.xlu0 %3140, %v458
      %v3142 = vpop.permute.xlu0 %3141
      %3144 = vset.pattern.permute.xlu0 33
      %3145 = vperm.xlu0 %3144, %v463
      %v3146 = vpop.permute.xlu0 %3145
      %3148 = vset.pattern.permute.xlu0 33
      %3149 = vperm.xlu0 %3148, %v468
      %v3150 = vpop.permute.xlu0 %3149
      %3152 = vset.pattern.permute.xlu0 33
      %3153 = vperm.xlu0 %3152, %v473
      %v3154 = vpop.permute.xlu0 %3153
      %3156 = vset.pattern.permute.xlu0 33
      %3157 = vperm.xlu0 %3156, %v478
      %v3158 = vpop.permute.xlu0 %3157
      %3160 = vset.pattern.permute.xlu0 33
      %3161 = vperm.xlu0 %3160, %v483
      %v3162 = vpop.permute.xlu0 %3161
      %3164 = vset.pattern.permute.xlu0 33
      %3165 = vperm.xlu0 %3164, %v488
      %v3166 = vpop.permute.xlu0 %3165
      %3168 = vset.pattern.permute.xlu0 33
      %3169 = vperm.xlu0 %3168, %v493
      %v3170 = vpop.permute.xlu0 %3169
      %3172 = vset.pattern.permute.xlu0 33
      %3173 = vperm.xlu0 %3172, %v498
      %v3174 = vpop.permute.xlu0 %3173
      %3176 = vset.pattern.permute.xlu0 33
      %3177 = vperm.xlu0 %3176, %v503
      %v3178 = vpop.permute.xlu0 %3177
      %3180 = vset.pattern.permute.xlu0 33
      %3181 = vperm.xlu0 %3180, %v508
      %v3182 = vpop.permute.xlu0 %3181
      %3184 = vset.pattern.permute.xlu0 33
      %3185 = vperm.xlu0 %3184, %v513
      %v3186 = vpop.permute.xlu0 %3185
      %3188 = vset.pattern.permute.xlu0 33
      %3189 = vperm.xlu0 %3188, %v518
      %v3190 = vpop.permute.xlu0 %3189
      %3192 = vset.pattern.permute.xlu0 33
      %3193 = vperm.xlu0 %3192, %v523
      %v3194 = vpop.permute.xlu0 %3193
      %3196 = vset.pattern.permute.xlu0 33
      %3197 = vperm.xlu0 %3196, %v528
      %v3198 = vpop.permute.xlu0 %3197
      %3200 = vset.pattern.permute.xlu0 33
      %3201 = vperm.xlu0 %3200, %v533
      %v3202 = vpop.permute.xlu0 %3201
      %3204 = vset.pattern.permute.xlu0 33
      %3205 = vperm.xlu0 %3204, %v538
      %v3206 = vpop.permute.xlu0 %3205
      %3208 = vset.pattern.permute.xlu0 33
      %3209 = vperm.xlu0 %3208, %v543
      %v3210 = vpop.permute.xlu0 %3209
      %3212 = vset.pattern.permute.xlu0 33
      %3213 = vperm.xlu0 %3212, %v548
      %v3214 = vpop.permute.xlu0 %3213
      %3216 = vset.pattern.permute.xlu0 33
      %3217 = vperm.xlu0 %3216, %v553
      %v3218 = vpop.permute.xlu0 %3217
      %3220 = vset.pattern.permute.xlu0 33
      %3221 = vperm.xlu0 %3220, %v558
      %v3222 = vpop.permute.xlu0 %3221
      %3224 = vset.pattern.permute.xlu0 33
      %3225 = vperm.xlu0 %3224, %v563
      %v3226 = vpop.permute.xlu0 %3225
      %3228 = vset.pattern.permute.xlu0 33
      %3229 = vperm.xlu0 %3228, %v568
      %v3230 = vpop.permute.xlu0 %3229
      %3232 = vset.pattern.permute.xlu0 33
      %3233 = vperm.xlu0 %3232, %v573
      %v3234 = vpop.permute.xlu0 %3233
      %3236 = vset.pattern.permute.xlu0 33
      %3237 = vperm.xlu0 %3236, %v578
      %v3238 = vpop.permute.xlu0 %3237
      %3240 = vset.pattern.permute.xlu0 33
      %3241 = vperm.xlu0 %3240, %v583
      %v3242 = vpop.permute.xlu0 %3241
      %v3244 = vmul.f32 %v3118, %v3115
      %v3245 = vmul.f32 %v3122, %v3115
      %v3246 = vmul.f32 %v3126, %v3115
      %v3247 = vmul.f32 %v3130, %v3115
      %v3248 = vmul.f32 %v3134, %v3115
      %v3249 = vmul.f32 %v3138, %v3115
      %v3250 = vmul.f32 %v3142, %v3115
      %v3251 = vmul.f32 %v3146, %v3115
      %v3252 = vmul.f32 %v3150, %v3115
      %v3253 = vmul.f32 %v3154, %v3115
      %v3254 = vmul.f32 %v3158, %v3115
      %v3255 = vmul.f32 %v3162, %v3115
      %v3256 = vmul.f32 %v3166, %v3115
      %v3257 = vmul.f32 %v3170, %v3115
      %v3258 = vmul.f32 %v3174, %v3115
      %v3259 = vmul.f32 %v3178, %v3115
      %v3260 = vmul.f32 %v3182, %v3115
      %v3261 = vmul.f32 %v3186, %v3115
      %v3262 = vmul.f32 %v3190, %v3115
      %v3263 = vmul.f32 %v3194, %v3115
      %v3264 = vmul.f32 %v3198, %v3115
      %v3265 = vmul.f32 %v3202, %v3115
      %v3266 = vmul.f32 %v3206, %v3115
      %v3267 = vmul.f32 %v3210, %v3115
      %v3268 = vmul.f32 %v3214, %v3115
      %v3269 = vmul.f32 %v3218, %v3115
      %v3270 = vmul.f32 %v3222, %v3115
      %v3271 = vmul.f32 %v3226, %v3115
      %v3272 = vmul.f32 %v3230, %v3115
      %v3273 = vmul.f32 %v3234, %v3115
      %v3274 = vmul.f32 %v3238, %v3115
      %v3275 = vmul.f32 %v3242, %v3115
      %v3276 = vadd.f32 %v3083, %v3244
      %v3277 = vadd.f32 %v3084, %v3245
      %v3278 = vadd.f32 %v3085, %v3246
      %v3279 = vadd.f32 %v3086, %v3247
      %v3280 = vadd.f32 %v3087, %v3248
      %v3281 = vadd.f32 %v3088, %v3249
      %v3282 = vadd.f32 %v3089, %v3250
      %v3283 = vadd.f32 %v3090, %v3251
      %v3284 = vadd.f32 %v3091, %v3252
      %v3285 = vadd.f32 %v3092, %v3253
      %v3286 = vadd.f32 %v3093, %v3254
      %v3287 = vadd.f32 %v3094, %v3255
      %v3288 = vadd.f32 %v3095, %v3256
      %v3289 = vadd.f32 %v3096, %v3257
      %v3290 = vadd.f32 %v3097, %v3258
      %v3291 = vadd.f32 %v3098, %v3259
      %v3292 = vadd.f32 %v3099, %v3260
      %v3293 = vadd.f32 %v3100, %v3261
      %v3294 = vadd.f32 %v3101, %v3262
      %v3295 = vadd.f32 %v3102, %v3263
      %v3296 = vadd.f32 %v3103, %v3264
      %v3297 = vadd.f32 %v3104, %v3265
      %v3298 = vadd.f32 %v3105, %v3266
      %v3299 = vadd.f32 %v3106, %v3267
      %v3300 = vadd.f32 %v3107, %v3268
      %v3301 = vadd.f32 %v3108, %v3269
      %v3302 = vadd.f32 %v3109, %v3270
      %v3303 = vadd.f32 %v3110, %v3271
      %v3304 = vadd.f32 %v3111, %v3272
      %v3305 = vadd.f32 %v3112, %v3273
      %v3306 = vadd.f32 %v3113, %v3274
      %v3307 = vadd.f32 %v3114, %v3275
      %vm3308 = vcmask 64512
      %v3309 = vsel %vm3308, %v3276, 0.0
      %v3310 = vrot.slane %v3309, 4
      %v3311 = vadd.f32 %v3309, %v3310
      %v3312 = vrot.slane %v3311, 2
      %v3313 = vadd.f32 %v3311, %v3312
      %v3314 = vrot.slane %v3313, 1
      %v3315 = vadd.f32 %v3313, %v3314
      %v3316 = vsel %vm3308, %v3277, 0.0
      %v3317 = vrot.slane %v3316, 4
      %v3318 = vadd.f32 %v3316, %v3317
      %v3319 = vrot.slane %v3318, 2
      %v3320 = vadd.f32 %v3318, %v3319
      %v3321 = vrot.slane %v3320, 1
      %v3322 = vadd.f32 %v3320, %v3321
      %v3323 = vsel %vm3308, %v3278, 0.0
      %v3324 = vrot.slane %v3323, 4
      %v3325 = vadd.f32 %v3323, %v3324
      %v3326 = vrot.slane %v3325, 2
      %v3327 = vadd.f32 %v3325, %v3326
      %v3328 = vrot.slane %v3327, 1
      %v3329 = vadd.f32 %v3327, %v3328
      %v3330 = vsel %vm3308, %v3279, 0.0
      %v3331 = vrot.slane %v3330, 4
      %v3332 = vadd.f32 %v3330, %v3331
      %v3333 = vrot.slane %v3332, 2
      %v3334 = vadd.f32 %v3332, %v3333
      %v3335 = vrot.slane %v3334, 1
      %v3336 = vadd.f32 %v3334, %v3335
      %v3337 = vsel %vm3308, %v3280, 0.0
      %v3338 = vrot.slane %v3337, 4
      %v3339 = vadd.f32 %v3337, %v3338
      %v3340 = vrot.slane %v3339, 2
      %v3341 = vadd.f32 %v3339, %v3340
      %v3342 = vrot.slane %v3341, 1
      %v3343 = vadd.f32 %v3341, %v3342
      %v3344 = vsel %vm3308, %v3281, 0.0
      %v3345 = vrot.slane %v3344, 4
      %v3346 = vadd.f32 %v3344, %v3345
      %v3347 = vrot.slane %v3346, 2
      %v3348 = vadd.f32 %v3346, %v3347
      %v3349 = vrot.slane %v3348, 1
      %v3350 = vadd.f32 %v3348, %v3349
      %v3351 = vsel %vm3308, %v3282, 0.0
      %v3352 = vrot.slane %v3351, 4
      %v3353 = vadd.f32 %v3351, %v3352
      %v3354 = vrot.slane %v3353, 2
      %v3355 = vadd.f32 %v3353, %v3354
      %v3356 = vrot.slane %v3355, 1
      %v3357 = vadd.f32 %v3355, %v3356
      %v3358 = vsel %vm3308, %v3283, 0.0
      %v3359 = vrot.slane %v3358, 4
      %v3360 = vadd.f32 %v3358, %v3359
      %v3361 = vrot.slane %v3360, 2
      %v3362 = vadd.f32 %v3360, %v3361
      %v3363 = vrot.slane %v3362, 1
      %v3364 = vadd.f32 %v3362, %v3363
      %v3365 = vsel %vm3308, %v3284, 0.0
      %v3366 = vrot.slane %v3365, 4
      %v3367 = vadd.f32 %v3365, %v3366
      %v3368 = vrot.slane %v3367, 2
      %v3369 = vadd.f32 %v3367, %v3368
      %v3370 = vrot.slane %v3369, 1
      %v3371 = vadd.f32 %v3369, %v3370
      %v3372 = vsel %vm3308, %v3285, 0.0
      %v3373 = vrot.slane %v3372, 4
      %v3374 = vadd.f32 %v3372, %v3373
      %v3375 = vrot.slane %v3374, 2
      %v3376 = vadd.f32 %v3374, %v3375
      %v3377 = vrot.slane %v3376, 1
      %v3378 = vadd.f32 %v3376, %v3377
      %v3379 = vsel %vm3308, %v3286, 0.0
      %v3380 = vrot.slane %v3379, 4
      %v3381 = vadd.f32 %v3379, %v3380
      %v3382 = vrot.slane %v3381, 2
      %v3383 = vadd.f32 %v3381, %v3382
      %v3384 = vrot.slane %v3383, 1
      %v3385 = vadd.f32 %v3383, %v3384
      %v3386 = vsel %vm3308, %v3287, 0.0
      %v3387 = vrot.slane %v3386, 4
      %v3388 = vadd.f32 %v3386, %v3387
      %v3389 = vrot.slane %v3388, 2
      %v3390 = vadd.f32 %v3388, %v3389
      %v3391 = vrot.slane %v3390, 1
      %v3392 = vadd.f32 %v3390, %v3391
      %v3393 = vsel %vm3308, %v3288, 0.0
      %v3394 = vrot.slane %v3393, 4
      %v3395 = vadd.f32 %v3393, %v3394
      %v3396 = vrot.slane %v3395, 2
      %v3397 = vadd.f32 %v3395, %v3396
      %v3398 = vrot.slane %v3397, 1
      %v3399 = vadd.f32 %v3397, %v3398
      %v3400 = vsel %vm3308, %v3289, 0.0
      %v3401 = vrot.slane %v3400, 4
      %v3402 = vadd.f32 %v3400, %v3401
      %v3403 = vrot.slane %v3402, 2
      %v3404 = vadd.f32 %v3402, %v3403
      %v3405 = vrot.slane %v3404, 1
      %v3406 = vadd.f32 %v3404, %v3405
      %v3407 = vsel %vm3308, %v3290, 0.0
      %v3408 = vrot.slane %v3407, 4
      %v3409 = vadd.f32 %v3407, %v3408
      %v3410 = vrot.slane %v3409, 2
      %v3411 = vadd.f32 %v3409, %v3410
      %v3412 = vrot.slane %v3411, 1
      %v3413 = vadd.f32 %v3411, %v3412
      %v3414 = vsel %vm3308, %v3291, 0.0
      %v3415 = vrot.slane %v3414, 4
      %v3416 = vadd.f32 %v3414, %v3415
      %v3417 = vrot.slane %v3416, 2
      %v3418 = vadd.f32 %v3416, %v3417
      %v3419 = vrot.slane %v3418, 1
      %v3420 = vadd.f32 %v3418, %v3419
      %v3421 = vsel %vm3308, %v3292, 0.0
      %v3422 = vrot.slane %v3421, 4
      %v3423 = vadd.f32 %v3421, %v3422
      %v3424 = vrot.slane %v3423, 2
      %v3425 = vadd.f32 %v3423, %v3424
      %v3426 = vrot.slane %v3425, 1
      %v3427 = vadd.f32 %v3425, %v3426
      %v3428 = vsel %vm3308, %v3293, 0.0
      %v3429 = vrot.slane %v3428, 4
      %v3430 = vadd.f32 %v3428, %v3429
      %v3431 = vrot.slane %v3430, 2
      %v3432 = vadd.f32 %v3430, %v3431
      %v3433 = vrot.slane %v3432, 1
      %v3434 = vadd.f32 %v3432, %v3433
      %v3435 = vsel %vm3308, %v3294, 0.0
      %v3436 = vrot.slane %v3435, 4
      %v3437 = vadd.f32 %v3435, %v3436
      %v3438 = vrot.slane %v3437, 2
      %v3439 = vadd.f32 %v3437, %v3438
      %v3440 = vrot.slane %v3439, 1
      %v3441 = vadd.f32 %v3439, %v3440
      %v3442 = vsel %vm3308, %v3295, 0.0
      %v3443 = vrot.slane %v3442, 4
      %v3444 = vadd.f32 %v3442, %v3443
      %v3445 = vrot.slane %v3444, 2
      %v3446 = vadd.f32 %v3444, %v3445
      %v3447 = vrot.slane %v3446, 1
      %v3448 = vadd.f32 %v3446, %v3447
      %v3449 = vsel %vm3308, %v3296, 0.0
      %v3450 = vrot.slane %v3449, 4
      %v3451 = vadd.f32 %v3449, %v3450
      %v3452 = vrot.slane %v3451, 2
      %v3453 = vadd.f32 %v3451, %v3452
      %v3454 = vrot.slane %v3453, 1
      %v3455 = vadd.f32 %v3453, %v3454
      %v3456 = vsel %vm3308, %v3297, 0.0
      %v3457 = vrot.slane %v3456, 4
      %v3458 = vadd.f32 %v3456, %v3457
      %v3459 = vrot.slane %v3458, 2
      %v3460 = vadd.f32 %v3458, %v3459
      %v3461 = vrot.slane %v3460, 1
      %v3462 = vadd.f32 %v3460, %v3461
      %v3463 = vsel %vm3308, %v3298, 0.0
      %v3464 = vrot.slane %v3463, 4
      %v3465 = vadd.f32 %v3463, %v3464
      %v3466 = vrot.slane %v3465, 2
      %v3467 = vadd.f32 %v3465, %v3466
      %v3468 = vrot.slane %v3467, 1
      %v3469 = vadd.f32 %v3467, %v3468
      %v3470 = vsel %vm3308, %v3299, 0.0
      %v3471 = vrot.slane %v3470, 4
      %v3472 = vadd.f32 %v3470, %v3471
      %v3473 = vrot.slane %v3472, 2
      %v3474 = vadd.f32 %v3472, %v3473
      %v3475 = vrot.slane %v3474, 1
      %v3476 = vadd.f32 %v3474, %v3475
      %v3477 = vsel %vm3308, %v3300, 0.0
      %v3478 = vrot.slane %v3477, 4
      %v3479 = vadd.f32 %v3477, %v3478
      %v3480 = vrot.slane %v3479, 2
      %v3481 = vadd.f32 %v3479, %v3480
      %v3482 = vrot.slane %v3481, 1
      %v3483 = vadd.f32 %v3481, %v3482
      %v3484 = vsel %vm3308, %v3301, 0.0
      %v3485 = vrot.slane %v3484, 4
      %v3486 = vadd.f32 %v3484, %v3485
      %v3487 = vrot.slane %v3486, 2
      %v3488 = vadd.f32 %v3486, %v3487
      %v3489 = vrot.slane %v3488, 1
      %v3490 = vadd.f32 %v3488, %v3489
      %v3491 = vsel %vm3308, %v3302, 0.0
      %v3492 = vrot.slane %v3491, 4
      %v3493 = vadd.f32 %v3491, %v3492
      %v3494 = vrot.slane %v3493, 2
      %v3495 = vadd.f32 %v3493, %v3494
      %v3496 = vrot.slane %v3495, 1
      %v3497 = vadd.f32 %v3495, %v3496
      %v3498 = vsel %vm3308, %v3303, 0.0
      %v3499 = vrot.slane %v3498, 4
      %v3500 = vadd.f32 %v3498, %v3499
      %v3501 = vrot.slane %v3500, 2
      %v3502 = vadd.f32 %v3500, %v3501
      %v3503 = vrot.slane %v3502, 1
      %v3504 = vadd.f32 %v3502, %v3503
      %v3505 = vsel %vm3308, %v3304, 0.0
      %v3506 = vrot.slane %v3505, 4
      %v3507 = vadd.f32 %v3505, %v3506
      %v3508 = vrot.slane %v3507, 2
      %v3509 = vadd.f32 %v3507, %v3508
      %v3510 = vrot.slane %v3509, 1
      %v3511 = vadd.f32 %v3509, %v3510
      %v3512 = vsel %vm3308, %v3305, 0.0
      %v3513 = vrot.slane %v3512, 4
      %v3514 = vadd.f32 %v3512, %v3513
      %v3515 = vrot.slane %v3514, 2
      %v3516 = vadd.f32 %v3514, %v3515
      %v3517 = vrot.slane %v3516, 1
      %v3518 = vadd.f32 %v3516, %v3517
      %v3519 = vsel %vm3308, %v3306, 0.0
      %v3520 = vrot.slane %v3519, 4
      %v3521 = vadd.f32 %v3519, %v3520
      %v3522 = vrot.slane %v3521, 2
      %v3523 = vadd.f32 %v3521, %v3522
      %v3524 = vrot.slane %v3523, 1
      %v3525 = vadd.f32 %v3523, %v3524
      %v3526 = vsel %vm3308, %v3307, 0.0
      %v3527 = vrot.slane %v3526, 4
      %v3528 = vadd.f32 %v3526, %v3527
      %v3529 = vrot.slane %v3528, 2
      %v3530 = vadd.f32 %v3528, %v3529
      %v3531 = vrot.slane %v3530, 1
      %v3532 = vadd.f32 %v3530, %v3531
      %3533 = vset.pattern.permute.xlu0 32
      %3534 = vperm.xlu0 %3533, %v428
      %v3535 = vpop.permute.xlu0 %3534
      %3537 = vset.pattern.permute.xlu0 32
      %3538 = vperm.xlu0 %3537, %v433
      %v3539 = vpop.permute.xlu0 %3538
      %3541 = vset.pattern.permute.xlu0 32
      %3542 = vperm.xlu0 %3541, %v438
      %v3543 = vpop.permute.xlu0 %3542
      %3545 = vset.pattern.permute.xlu0 32
      %3546 = vperm.xlu0 %3545, %v443
      %v3547 = vpop.permute.xlu0 %3546
      %3549 = vset.pattern.permute.xlu0 32
      %3550 = vperm.xlu0 %3549, %v448
      %v3551 = vpop.permute.xlu0 %3550
      %3553 = vset.pattern.permute.xlu0 32
      %3554 = vperm.xlu0 %3553, %v453
      %v3555 = vpop.permute.xlu0 %3554
      %3557 = vset.pattern.permute.xlu0 32
      %3558 = vperm.xlu0 %3557, %v458
      %v3559 = vpop.permute.xlu0 %3558
      %3561 = vset.pattern.permute.xlu0 32
      %3562 = vperm.xlu0 %3561, %v463
      %v3563 = vpop.permute.xlu0 %3562
      %3565 = vset.pattern.permute.xlu0 32
      %3566 = vperm.xlu0 %3565, %v468
      %v3567 = vpop.permute.xlu0 %3566
      %3569 = vset.pattern.permute.xlu0 32
      %3570 = vperm.xlu0 %3569, %v473
      %v3571 = vpop.permute.xlu0 %3570
      %3573 = vset.pattern.permute.xlu0 32
      %3574 = vperm.xlu0 %3573, %v478
      %v3575 = vpop.permute.xlu0 %3574
      %3577 = vset.pattern.permute.xlu0 32
      %3578 = vperm.xlu0 %3577, %v483
      %v3579 = vpop.permute.xlu0 %3578
      %3581 = vset.pattern.permute.xlu0 32
      %3582 = vperm.xlu0 %3581, %v488
      %v3583 = vpop.permute.xlu0 %3582
      %3585 = vset.pattern.permute.xlu0 32
      %3586 = vperm.xlu0 %3585, %v493
      %v3587 = vpop.permute.xlu0 %3586
      %3589 = vset.pattern.permute.xlu0 32
      %3590 = vperm.xlu0 %3589, %v498
      %v3591 = vpop.permute.xlu0 %3590
      %3593 = vset.pattern.permute.xlu0 32
      %3594 = vperm.xlu0 %3593, %v503
      %v3595 = vpop.permute.xlu0 %3594
      %3597 = vset.pattern.permute.xlu0 32
      %3598 = vperm.xlu0 %3597, %v508
      %v3599 = vpop.permute.xlu0 %3598
      %3601 = vset.pattern.permute.xlu0 32
      %3602 = vperm.xlu0 %3601, %v513
      %v3603 = vpop.permute.xlu0 %3602
      %3605 = vset.pattern.permute.xlu0 32
      %3606 = vperm.xlu0 %3605, %v518
      %v3607 = vpop.permute.xlu0 %3606
      %3609 = vset.pattern.permute.xlu0 32
      %3610 = vperm.xlu0 %3609, %v523
      %v3611 = vpop.permute.xlu0 %3610
      %3613 = vset.pattern.permute.xlu0 32
      %3614 = vperm.xlu0 %3613, %v528
      %v3615 = vpop.permute.xlu0 %3614
      %3617 = vset.pattern.permute.xlu0 32
      %3618 = vperm.xlu0 %3617, %v533
      %v3619 = vpop.permute.xlu0 %3618
      %3621 = vset.pattern.permute.xlu0 32
      %3622 = vperm.xlu0 %3621, %v538
      %v3623 = vpop.permute.xlu0 %3622
      %3625 = vset.pattern.permute.xlu0 32
      %3626 = vperm.xlu0 %3625, %v543
      %v3627 = vpop.permute.xlu0 %3626
      %3629 = vset.pattern.permute.xlu0 32
      %3630 = vperm.xlu0 %3629, %v548
      %v3631 = vpop.permute.xlu0 %3630
      %3633 = vset.pattern.permute.xlu0 32
      %3634 = vperm.xlu0 %3633, %v553
      %v3635 = vpop.permute.xlu0 %3634
      %3637 = vset.pattern.permute.xlu0 32
      %3638 = vperm.xlu0 %3637, %v558
      %v3639 = vpop.permute.xlu0 %3638
      %3641 = vset.pattern.permute.xlu0 32
      %3642 = vperm.xlu0 %3641, %v563
      %v3643 = vpop.permute.xlu0 %3642
      %3645 = vset.pattern.permute.xlu0 32
      %3646 = vperm.xlu0 %3645, %v568
      %v3647 = vpop.permute.xlu0 %3646
      %3649 = vset.pattern.permute.xlu0 32
      %3650 = vperm.xlu0 %3649, %v573
      %v3651 = vpop.permute.xlu0 %3650
      %3653 = vset.pattern.permute.xlu0 32
      %3654 = vperm.xlu0 %3653, %v578
      %v3655 = vpop.permute.xlu0 %3654
      %3657 = vset.pattern.permute.xlu0 32
      %3658 = vperm.xlu0 %3657, %v583
      %v3659 = vpop.permute.xlu0 %3658
      %v3661 = vadd.f32 %v3535, %v3315
      %v3662 = vadd.f32 %v3539, %v3322
      %v3663 = vadd.f32 %v3543, %v3329
      %v3664 = vadd.f32 %v3547, %v3336
      %v3665 = vadd.f32 %v3551, %v3343
      %v3666 = vadd.f32 %v3555, %v3350
      %v3667 = vadd.f32 %v3559, %v3357
      %v3668 = vadd.f32 %v3563, %v3364
      %v3669 = vadd.f32 %v3567, %v3371
      %v3670 = vadd.f32 %v3571, %v3378
      %v3671 = vadd.f32 %v3575, %v3385
      %v3672 = vadd.f32 %v3579, %v3392
      %v3673 = vadd.f32 %v3583, %v3399
      %v3674 = vadd.f32 %v3587, %v3406
      %v3675 = vadd.f32 %v3591, %v3413
      %v3676 = vadd.f32 %v3595, %v3420
      %v3677 = vadd.f32 %v3599, %v3427
      %v3678 = vadd.f32 %v3603, %v3434
      %v3679 = vadd.f32 %v3607, %v3441
      %v3680 = vadd.f32 %v3611, %v3448
      %v3681 = vadd.f32 %v3615, %v3455
      %v3682 = vadd.f32 %v3619, %v3462
      %v3683 = vadd.f32 %v3623, %v3469
      %v3684 = vadd.f32 %v3627, %v3476
      %v3685 = vadd.f32 %v3631, %v3483
      %v3686 = vadd.f32 %v3635, %v3490
      %v3687 = vadd.f32 %v3639, %v3497
      %v3688 = vadd.f32 %v3643, %v3504
      %v3689 = vadd.f32 %v3647, %v3511
      %v3690 = vadd.f32 %v3651, %v3518
      %v3691 = vadd.f32 %v3655, %v3525
      %v3692 = vadd.f32 %v3659, %v3532
      %v3693 = vmul.f32 %v3661, 0.2
      %v3694 = vmul.f32 %v3662, 0.2
      %v3695 = vmul.f32 %v3663, 0.2
      %v3696 = vmul.f32 %v3664, 0.2
      %v3697 = vmul.f32 %v3665, 0.2
      %v3698 = vmul.f32 %v3666, 0.2
      %v3699 = vmul.f32 %v3667, 0.2
      %v3700 = vmul.f32 %v3668, 0.2
      %v3701 = vmul.f32 %v3669, 0.2
      %v3702 = vmul.f32 %v3670, 0.2
      %v3703 = vmul.f32 %v3671, 0.2
      %v3704 = vmul.f32 %v3672, 0.2
      %v3705 = vmul.f32 %v3673, 0.2
      %v3706 = vmul.f32 %v3674, 0.2
      %v3707 = vmul.f32 %v3675, 0.2
      %v3708 = vmul.f32 %v3676, 0.2
      %v3709 = vmul.f32 %v3677, 0.2
      %v3710 = vmul.f32 %v3678, 0.2
      %v3711 = vmul.f32 %v3679, 0.2
      %v3712 = vmul.f32 %v3680, 0.2
      %v3713 = vmul.f32 %v3681, 0.2
      %v3714 = vmul.f32 %v3682, 0.2
      %v3715 = vmul.f32 %v3683, 0.2
      %v3716 = vmul.f32 %v3684, 0.2
      %v3717 = vmul.f32 %v3685, 0.2
      %v3718 = vmul.f32 %v3686, 0.2
      %v3719 = vmul.f32 %v3687, 0.2
      %v3720 = vmul.f32 %v3688, 0.2
      %v3721 = vmul.f32 %v3689, 0.2
      %v3722 = vmul.f32 %v3690, 0.2
      %v3723 = vmul.f32 %v3691, 0.2
      %v3724 = vmul.f32 %v3692, 0.2
      %v3725 = vmax.f32 %v3661, %v3693
      %v3726 = vmax.f32 %v3662, %v3694
      %v3727 = vmax.f32 %v3663, %v3695
      %v3728 = vmax.f32 %v3664, %v3696
      %v3729 = vmax.f32 %v3665, %v3697
      %v3730 = vmax.f32 %v3666, %v3698
      %v3731 = vmax.f32 %v3667, %v3699
      %v3732 = vmax.f32 %v3668, %v3700
      %v3733 = vmax.f32 %v3669, %v3701
      %v3734 = vmax.f32 %v3670, %v3702
      %v3735 = vmax.f32 %v3671, %v3703
      %v3736 = vmax.f32 %v3672, %v3704
      %v3737 = vmax.f32 %v3673, %v3705
      %v3738 = vmax.f32 %v3674, %v3706
      %v3739 = vmax.f32 %v3675, %v3707
      %v3740 = vmax.f32 %v3676, %v3708
      %v3741 = vmax.f32 %v3677, %v3709
      %v3742 = vmax.f32 %v3678, %v3710
      %v3743 = vmax.f32 %v3679, %v3711
      %v3744 = vmax.f32 %v3680, %v3712
      %v3745 = vmax.f32 %v3681, %v3713
      %v3746 = vmax.f32 %v3682, %v3714
      %v3747 = vmax.f32 %v3683, %v3715
      %v3748 = vmax.f32 %v3684, %v3716
      %v3749 = vmax.f32 %v3685, %v3717
      %v3750 = vmax.f32 %v3686, %v3718
      %v3751 = vmax.f32 %v3687, %v3719
      %v3752 = vmax.f32 %v3688, %v3720
      %v3753 = vmax.f32 %v3689, %v3721
      %v3754 = vmax.f32 %v3690, %v3722
      %v3755 = vmax.f32 %v3691, %v3723
      %v3756 = vmax.f32 %v3692, %v3724
      %v3757 = vld [vmem:[%s3] sm:$0xff]
      %vm3758 = vcmp.ne.f32.partialorder %v3757, 0.0
      %v3759 = vsel %vm3758, 1, 0
      %vm3760 = vcmp.eq.s32.totalorder %v3759, 1
      %v3761 = vsel %vm3760, %v3725, -9e+15
      %v3762 = vsel %vm3760, %v3726, -9e+15
      %v3763 = vsel %vm3760, %v3727, -9e+15
      %v3764 = vsel %vm3760, %v3728, -9e+15
      %v3765 = vsel %vm3760, %v3729, -9e+15
      %v3766 = vsel %vm3760, %v3730, -9e+15
      %v3767 = vsel %vm3760, %v3731, -9e+15
      %v3768 = vsel %vm3760, %v3732, -9e+15
      %v3769 = vsel %vm3760, %v3733, -9e+15
      %v3770 = vsel %vm3760, %v3734, -9e+15
      %v3771 = vsel %vm3760, %v3735, -9e+15
      %v3772 = vsel %vm3760, %v3736, -9e+15
      %v3773 = vsel %vm3760, %v3737, -9e+15
      %v3774 = vsel %vm3760, %v3738, -9e+15
      %v3775 = vsel %vm3760, %v3739, -9e+15
      %v3776 = vsel %vm3760, %v3740, -9e+15
      %v3777 = vsel %vm3760, %v3741, -9e+15
      %v3778 = vsel %vm3760, %v3742, -9e+15
      %v3779 = vsel %vm3760, %v3743, -9e+15
      %v3780 = vsel %vm3760, %v3744, -9e+15
      %v3781 = vsel %vm3760, %v3745, -9e+15
      %v3782 = vsel %vm3760, %v3746, -9e+15
      %v3783 = vsel %vm3760, %v3747, -9e+15
      %v3784 = vsel %vm3760, %v3748, -9e+15
      %v3785 = vsel %vm3760, %v3749, -9e+15
      %v3786 = vsel %vm3760, %v3750, -9e+15
      %v3787 = vsel %vm3760, %v3751, -9e+15
      %v3788 = vsel %vm3760, %v3752, -9e+15
      %v3789 = vsel %vm3760, %v3753, -9e+15
      %v3790 = vsel %vm3760, %v3754, -9e+15
      %v3791 = vsel %vm3760, %v3755, -9e+15
      %v3792 = vsel %vm3760, %v3756, -9e+15
      %v3793 = vsel %vm3308, %v3761, -inf
      %3794 = vmax.xlane.f32.xlu0 %v3793
      %v3795 = vpop.xlane.xlu0 %3794
      %v3796 = vsel %vm3308, %v3762, -inf
      %3797 = vmax.xlane.f32.xlu0 %v3796
      %v3798 = vpop.xlane.xlu0 %3797
      %v3799 = vsel %vm3308, %v3763, -inf
      %3800 = vmax.xlane.f32.xlu0 %v3799
      %v3801 = vpop.xlane.xlu0 %3800
      %v3802 = vsel %vm3308, %v3764, -inf
      %3803 = vmax.xlane.f32.xlu0 %v3802
      %v3804 = vpop.xlane.xlu0 %3803
      %v3805 = vsel %vm3308, %v3765, -inf
      %3806 = vmax.xlane.f32.xlu0 %v3805
      %v3807 = vpop.xlane.xlu0 %3806
      %v3808 = vsel %vm3308, %v3766, -inf
      %3809 = vmax.xlane.f32.xlu0 %v3808
      %v3810 = vpop.xlane.xlu0 %3809
      %v3811 = vsel %vm3308, %v3767, -inf
      %3812 = vmax.xlane.f32.xlu0 %v3811
      %v3813 = vpop.xlane.xlu0 %3812
      %v3814 = vsel %vm3308, %v3768, -inf
      %3815 = vmax.xlane.f32.xlu0 %v3814
      %v3816 = vpop.xlane.xlu0 %3815
      %v3817 = vsel %vm3308, %v3769, -inf
      %3818 = vmax.xlane.f32.xlu0 %v3817
      %v3819 = vpop.xlane.xlu0 %3818
      %v3820 = vsel %vm3308, %v3770, -inf
      %3821 = vmax.xlane.f32.xlu0 %v3820
      %v3822 = vpop.xlane.xlu0 %3821
      %v3823 = vsel %vm3308, %v3771, -inf
      %3824 = vmax.xlane.f32.xlu0 %v3823
      %v3825 = vpop.xlane.xlu0 %3824
      %v3826 = vsel %vm3308, %v3772, -inf
      %3827 = vmax.xlane.f32.xlu0 %v3826
      %v3828 = vpop.xlane.xlu0 %3827
      %v3829 = vsel %vm3308, %v3773, -inf
      %3830 = vmax.xlane.f32.xlu0 %v3829
      %v3831 = vpop.xlane.xlu0 %3830
      %v3832 = vsel %vm3308, %v3774, -inf
      %3833 = vmax.xlane.f32.xlu0 %v3832
      %v3834 = vpop.xlane.xlu0 %3833
      %v3835 = vsel %vm3308, %v3775, -inf
      %3836 = vmax.xlane.f32.xlu0 %v3835
      %v3837 = vpop.xlane.xlu0 %3836
      %v3838 = vsel %vm3308, %v3776, -inf
      %3839 = vmax.xlane.f32.xlu0 %v3838
      %v3840 = vpop.xlane.xlu0 %3839
      %v3841 = vsel %vm3308, %v3777, -inf
      %3842 = vmax.xlane.f32.xlu0 %v3841
      %v3843 = vpop.xlane.xlu0 %3842
      %v3844 = vsel %vm3308, %v3778, -inf
      %3845 = vmax.xlane.f32.xlu0 %v3844
      %v3846 = vpop.xlane.xlu0 %3845
      %v3847 = vsel %vm3308, %v3779, -inf
      %3848 = vmax.xlane.f32.xlu0 %v3847
      %v3849 = vpop.xlane.xlu0 %3848
      %v3850 = vsel %vm3308, %v3780, -inf
      %3851 = vmax.xlane.f32.xlu0 %v3850
      %v3852 = vpop.xlane.xlu0 %3851
      %v3853 = vsel %vm3308, %v3781, -inf
      %3854 = vmax.xlane.f32.xlu0 %v3853
      %v3855 = vpop.xlane.xlu0 %3854
      %v3856 = vsel %vm3308, %v3782, -inf
      %3857 = vmax.xlane.f32.xlu0 %v3856
      %v3858 = vpop.xlane.xlu0 %3857
      %v3859 = vsel %vm3308, %v3783, -inf
      %3860 = vmax.xlane.f32.xlu0 %v3859
      %v3861 = vpop.xlane.xlu0 %3860
      %v3862 = vsel %vm3308, %v3784, -inf
      %3863 = vmax.xlane.f32.xlu0 %v3862
      %v3864 = vpop.xlane.xlu0 %3863
      %v3865 = vsel %vm3308, %v3785, -inf
      %3866 = vmax.xlane.f32.xlu0 %v3865
      %v3867 = vpop.xlane.xlu0 %3866
      %v3868 = vsel %vm3308, %v3786, -inf
      %3869 = vmax.xlane.f32.xlu0 %v3868
      %v3870 = vpop.xlane.xlu0 %3869
      %v3871 = vsel %vm3308, %v3787, -inf
      %3872 = vmax.xlane.f32.xlu0 %v3871
      %v3873 = vpop.xlane.xlu0 %3872
      %v3874 = vsel %vm3308, %v3788, -inf
      %3875 = vmax.xlane.f32.xlu0 %v3874
      %v3876 = vpop.xlane.xlu0 %3875
      %v3877 = vsel %vm3308, %v3789, -inf
      %3878 = vmax.xlane.f32.xlu0 %v3877
      %v3879 = vpop.xlane.xlu0 %3878
      %v3880 = vsel %vm3308, %v3790, -inf
      %3881 = vmax.xlane.f32.xlu0 %v3880
      %v3882 = vpop.xlane.xlu0 %3881
      %v3883 = vsel %vm3308, %v3791, -inf
      %3884 = vmax.xlane.f32.xlu0 %v3883
      %v3885 = vpop.xlane.xlu0 %3884
      %v3886 = vsel %vm3308, %v3792, -inf
      %3887 = vmax.xlane.f32.xlu0 %v3886
      %v3888 = vpop.xlane.xlu0 %3887
      %v3889 = vsub.f32 %v3761, %v3795
      %v3890 = vsub.f32 %v3762, %v3798
      %v3891 = vsub.f32 %v3763, %v3801
      %v3892 = vsub.f32 %v3764, %v3804
      %v3893 = vsub.f32 %v3765, %v3807
      %v3894 = vsub.f32 %v3766, %v3810
      %v3895 = vsub.f32 %v3767, %v3813
      %v3896 = vsub.f32 %v3768, %v3816
      %v3897 = vsub.f32 %v3769, %v3819
      %v3898 = vsub.f32 %v3770, %v3822
      %v3899 = vsub.f32 %v3771, %v3825
      %v3900 = vsub.f32 %v3772, %v3828
      %v3901 = vsub.f32 %v3773, %v3831
      %v3902 = vsub.f32 %v3774, %v3834
      %v3903 = vsub.f32 %v3775, %v3837
      %v3904 = vsub.f32 %v3776, %v3840
      %v3905 = vsub.f32 %v3777, %v3843
      %v3906 = vsub.f32 %v3778, %v3846
      %v3907 = vsub.f32 %v3779, %v3849
      %v3908 = vsub.f32 %v3780, %v3852
      %v3909 = vsub.f32 %v3781, %v3855
      %v3910 = vsub.f32 %v3782, %v3858
      %v3911 = vsub.f32 %v3783, %v3861
      %v3912 = vsub.f32 %v3784, %v3864
      %v3913 = vsub.f32 %v3785, %v3867
      %v3914 = vsub.f32 %v3786, %v3870
      %v3915 = vsub.f32 %v3787, %v3873
      %v3916 = vsub.f32 %v3788, %v3876
      %v3917 = vsub.f32 %v3789, %v3879
      %v3918 = vsub.f32 %v3790, %v3882
      %v3919 = vsub.f32 %v3791, %v3885
      %v3920 = vsub.f32 %v3792, %v3888
      %v3921 = vmul.f32 %v3889, 1.442695
      %v3922 = vpow.pop %v3921
      %v3923 = vmul.f32 %v3890, 1.442695
      %v3924 = vpow.pop %v3923
      %v3925 = vmul.f32 %v3891, 1.442695
      %v3926 = vpow.pop %v3925
      %v3927 = vmul.f32 %v3892, 1.442695
      %v3928 = vpow.pop %v3927
      %v3929 = vmul.f32 %v3893, 1.442695
      %v3930 = vpow.pop %v3929
      %v3931 = vmul.f32 %v3894, 1.442695
      %v3932 = vpow.pop %v3931
      %v3933 = vmul.f32 %v3895, 1.442695
      %v3934 = vpow.pop %v3933
      %v3935 = vmul.f32 %v3896, 1.442695
      %v3936 = vpow.pop %v3935
      %v3937 = vmul.f32 %v3897, 1.442695
      %v3938 = vpow.pop %v3937
      %v3939 = vmul.f32 %v3898, 1.442695
      %v3940 = vpow.pop %v3939
      %v3941 = vmul.f32 %v3899, 1.442695
      %v3942 = vpow.pop %v3941
      %v3943 = vmul.f32 %v3900, 1.442695
      %v3944 = vpow.pop %v3943
      %v3945 = vmul.f32 %v3901, 1.442695
      %v3946 = vpow.pop %v3945
      %v3947 = vmul.f32 %v3902, 1.442695
      %v3948 = vpow.pop %v3947
      %v3949 = vmul.f32 %v3903, 1.442695
      %v3950 = vpow.pop %v3949
      %v3951 = vmul.f32 %v3904, 1.442695
      %v3952 = vpow.pop %v3951
      %v3953 = vmul.f32 %v3905, 1.442695
      %v3954 = vpow.pop %v3953
      %v3955 = vmul.f32 %v3906, 1.442695
      %v3956 = vpow.pop %v3955
      %v3957 = vmul.f32 %v3907, 1.442695
      %v3958 = vpow.pop %v3957
      %v3959 = vmul.f32 %v3908, 1.442695
      %v3960 = vpow.pop %v3959
      %v3961 = vmul.f32 %v3909, 1.442695
      %v3962 = vpow.pop %v3961
      %v3963 = vmul.f32 %v3910, 1.442695
      %v3964 = vpow.pop %v3963
      %v3965 = vmul.f32 %v3911, 1.442695
      %v3966 = vpow.pop %v3965
      %v3967 = vmul.f32 %v3912, 1.442695
      %v3968 = vpow.pop %v3967
      %v3969 = vmul.f32 %v3913, 1.442695
      %v3970 = vpow.pop %v3969
      %v3971 = vmul.f32 %v3914, 1.442695
      %v3972 = vpow.pop %v3971
      %v3973 = vmul.f32 %v3915, 1.442695
      %v3974 = vpow.pop %v3973
      %v3975 = vmul.f32 %v3916, 1.442695
      %v3976 = vpow.pop %v3975
      %v3977 = vmul.f32 %v3917, 1.442695
      %v3978 = vpow.pop %v3977
      %v3979 = vmul.f32 %v3918, 1.442695
      %v3980 = vpow.pop %v3979
      %v3981 = vmul.f32 %v3919, 1.442695
      %v3982 = vpow.pop %v3981
      %v3983 = vmul.f32 %v3920, 1.442695
      %v3984 = vpow.pop %v3983
      %v3985 = vsel %vm3308, %v3922, 0.0
      %3986 = vadd.xlane.f32.xlu0 %v3985
      %v3987 = vpop.xlane.xlu0 %3986
      %v3988 = vsel %vm3308, %v3924, 0.0
      %3989 = vadd.xlane.f32.xlu0 %v3988
      %v3990 = vpop.xlane.xlu0 %3989
      %v3991 = vsel %vm3308, %v3926, 0.0
      %3992 = vadd.xlane.f32.xlu0 %v3991
      %v3993 = vpop.xlane.xlu0 %3992
      %v3994 = vsel %vm3308, %v3928, 0.0
      %3995 = vadd.xlane.f32.xlu0 %v3994
      %v3996 = vpop.xlane.xlu0 %3995
      %v3997 = vsel %vm3308, %v3930, 0.0
      %3998 = vadd.xlane.f32.xlu0 %v3997
      %v3999 = vpop.xlane.xlu0 %3998
      %v4000 = vsel %vm3308, %v3932, 0.0
      %4001 = vadd.xlane.f32.xlu0 %v4000
      %v4002 = vpop.xlane.xlu0 %4001
      %v4003 = vsel %vm3308, %v3934, 0.0
      %4004 = vadd.xlane.f32.xlu0 %v4003
      %v4005 = vpop.xlane.xlu0 %4004
      %v4006 = vsel %vm3308, %v3936, 0.0
      %4007 = vadd.xlane.f32.xlu0 %v4006
      %v4008 = vpop.xlane.xlu0 %4007
      %v4009 = vsel %vm3308, %v3938, 0.0
      %4010 = vadd.xlane.f32.xlu0 %v4009
      %v4011 = vpop.xlane.xlu0 %4010
      %v4012 = vsel %vm3308, %v3940, 0.0
      %4013 = vadd.xlane.f32.xlu0 %v4012
      %v4014 = vpop.xlane.xlu0 %4013
      %v4015 = vsel %vm3308, %v3942, 0.0
      %4016 = vadd.xlane.f32.xlu0 %v4015
      %v4017 = vpop.xlane.xlu0 %4016
      %v4018 = vsel %vm3308, %v3944, 0.0
      %4019 = vadd.xlane.f32.xlu0 %v4018
      %v4020 = vpop.xlane.xlu0 %4019
      %v4021 = vsel %vm3308, %v3946, 0.0
      %4022 = vadd.xlane.f32.xlu0 %v4021
      %v4023 = vpop.xlane.xlu0 %4022
      %v4024 = vsel %vm3308, %v3948, 0.0
      %4025 = vadd.xlane.f32.xlu0 %v4024
      %v4026 = vpop.xlane.xlu0 %4025
      %v4027 = vsel %vm3308, %v3950, 0.0
      %4028 = vadd.xlane.f32.xlu0 %v4027
      %v4029 = vpop.xlane.xlu0 %4028
      %v4030 = vsel %vm3308, %v3952, 0.0
      %4031 = vadd.xlane.f32.xlu0 %v4030
      %v4032 = vpop.xlane.xlu0 %4031
      %v4033 = vsel %vm3308, %v3954, 0.0
      %4034 = vadd.xlane.f32.xlu0 %v4033
      %v4035 = vpop.xlane.xlu0 %4034
      %v4036 = vsel %vm3308, %v3956, 0.0
      %4037 = vadd.xlane.f32.xlu0 %v4036
      %v4038 = vpop.xlane.xlu0 %4037
      %v4039 = vsel %vm3308, %v3958, 0.0
      %4040 = vadd.xlane.f32.xlu0 %v4039
      %v4041 = vpop.xlane.xlu0 %4040
      %v4042 = vsel %vm3308, %v3960, 0.0
      %4043 = vadd.xlane.f32.xlu0 %v4042
      %v4044 = vpop.xlane.xlu0 %4043
      %v4045 = vsel %vm3308, %v3962, 0.0
      %4046 = vadd.xlane.f32.xlu0 %v4045
      %v4047 = vpop.xlane.xlu0 %4046
      %v4048 = vsel %vm3308, %v3964, 0.0
      %4049 = vadd.xlane.f32.xlu0 %v4048
      %v4050 = vpop.xlane.xlu0 %4049
      %v4051 = vsel %vm3308, %v3966, 0.0
      %4052 = vadd.xlane.f32.xlu0 %v4051
      %v4053 = vpop.xlane.xlu0 %4052
      %v4054 = vsel %vm3308, %v3968, 0.0
      %4055 = vadd.xlane.f32.xlu0 %v4054
      %v4056 = vpop.xlane.xlu0 %4055
      %v4057 = vsel %vm3308, %v3970, 0.0
      %4058 = vadd.xlane.f32.xlu0 %v4057
      %v4059 = vpop.xlane.xlu0 %4058
      %v4060 = vsel %vm3308, %v3972, 0.0
      %4061 = vadd.xlane.f32.xlu0 %v4060
      %v4062 = vpop.xlane.xlu0 %4061
      %v4063 = vsel %vm3308, %v3974, 0.0
      %4064 = vadd.xlane.f32.xlu0 %v4063
      %v4065 = vpop.xlane.xlu0 %4064
      %v4066 = vsel %vm3308, %v3976, 0.0
      %4067 = vadd.xlane.f32.xlu0 %v4066
      %v4068 = vpop.xlane.xlu0 %4067
      %v4069 = vsel %vm3308, %v3978, 0.0
      %4070 = vadd.xlane.f32.xlu0 %v4069
      %v4071 = vpop.xlane.xlu0 %4070
      %v4072 = vsel %vm3308, %v3980, 0.0
      %4073 = vadd.xlane.f32.xlu0 %v4072
      %v4074 = vpop.xlane.xlu0 %4073
      %v4075 = vsel %vm3308, %v3982, 0.0
      %4076 = vadd.xlane.f32.xlu0 %v4075
      %v4077 = vpop.xlane.xlu0 %4076
      %v4078 = vsel %vm3308, %v3984, 0.0
      %4079 = vadd.xlane.f32.xlu0 %v4078
      %v4080 = vpop.xlane.xlu0 %4079
      %v4081 = vrcp.pop %v3987
      %v4082 = vrcp.pop %v3990
      %v4083 = vrcp.pop %v3993
      %v4084 = vrcp.pop %v3996
      %v4085 = vrcp.pop %v3999
      %v4086 = vrcp.pop %v4002
      %v4087 = vrcp.pop %v4005
      %v4088 = vrcp.pop %v4008
      %v4089 = vrcp.pop %v4011
      %v4090 = vrcp.pop %v4014
      %v4091 = vrcp.pop %v4017
      %v4092 = vrcp.pop %v4020
      %v4093 = vrcp.pop %v4023
      %v4094 = vrcp.pop %v4026
      %v4095 = vrcp.pop %v4029
      %v4096 = vrcp.pop %v4032
      %v4097 = vrcp.pop %v4035
      %v4098 = vrcp.pop %v4038
      %v4099 = vrcp.pop %v4041
      %v4100 = vrcp.pop %v4044
      %v4101 = vrcp.pop %v4047
      %v4102 = vrcp.pop %v4050
      %v4103 = vrcp.pop %v4053
      %v4104 = vrcp.pop %v4056
      %v4105 = vrcp.pop %v4059
      %v4106 = vrcp.pop %v4062
      %v4107 = vrcp.pop %v4065
      %v4108 = vrcp.pop %v4068
      %v4109 = vrcp.pop %v4071
      %v4110 = vrcp.pop %v4074
      %v4111 = vrcp.pop %v4077
      %v4112 = vrcp.pop %v4080
      %v4113 = vmul.f32 %v3987, %v4081
      %v4114 = vmul.f32 %v3990, %v4082
      %v4115 = vmul.f32 %v3993, %v4083
      %v4116 = vmul.f32 %v3996, %v4084
      %v4117 = vmul.f32 %v3999, %v4085
      %v4118 = vmul.f32 %v4002, %v4086
      %v4119 = vmul.f32 %v4005, %v4087
      %v4120 = vmul.f32 %v4008, %v4088
      %v4121 = vmul.f32 %v4011, %v4089
      %v4122 = vmul.f32 %v4014, %v4090
      %v4123 = vmul.f32 %v4017, %v4091
      %v4124 = vmul.f32 %v4020, %v4092
      %v4125 = vmul.f32 %v4023, %v4093
      %v4126 = vmul.f32 %v4026, %v4094
      %v4127 = vmul.f32 %v4029, %v4095
      %v4128 = vmul.f32 %v4032, %v4096
      %v4129 = vmul.f32 %v4035, %v4097
      %v4130 = vmul.f32 %v4038, %v4098
      %v4131 = vmul.f32 %v4041, %v4099
      %v4132 = vmul.f32 %v4044, %v4100
      %v4133 = vmul.f32 %v4047, %v4101
      %v4134 = vmul.f32 %v4050, %v4102
      %v4135 = vmul.f32 %v4053, %v4103
      %v4136 = vmul.f32 %v4056, %v4104
      %v4137 = vmul.f32 %v4059, %v4105
      %v4138 = vmul.f32 %v4062, %v4106
      %v4139 = vmul.f32 %v4065, %v4107
      %v4140 = vmul.f32 %v4068, %v4108
      %v4141 = vmul.f32 %v4071, %v4109
      %v4142 = vmul.f32 %v4074, %v4110
      %v4143 = vmul.f32 %v4077, %v4111
      %v4144 = vmul.f32 %v4080, %v4112
      %v4145 = vsub.f32 2.0, %v4113
      %v4146 = vsub.f32 2.0, %v4114
      %v4147 = vsub.f32 2.0, %v4115
      %v4148 = vsub.f32 2.0, %v4116
      %v4149 = vsub.f32 2.0, %v4117
      %v4150 = vsub.f32 2.0, %v4118
      %v4151 = vsub.f32 2.0, %v4119
      %v4152 = vsub.f32 2.0, %v4120
      %v4153 = vsub.f32 2.0, %v4121
      %v4154 = vsub.f32 2.0, %v4122
      %v4155 = vsub.f32 2.0, %v4123
      %v4156 = vsub.f32 2.0, %v4124
      %v4157 = vsub.f32 2.0, %v4125
      %v4158 = vsub.f32 2.0, %v4126
      %v4159 = vsub.f32 2.0, %v4127
      %v4160 = vsub.f32 2.0, %v4128
      %v4161 = vsub.f32 2.0, %v4129
      %v4162 = vsub.f32 2.0, %v4130
      %v4163 = vsub.f32 2.0, %v4131
      %v4164 = vsub.f32 2.0, %v4132
      %v4165 = vsub.f32 2.0, %v4133
      %v4166 = vsub.f32 2.0, %v4134
      %v4167 = vsub.f32 2.0, %v4135
      %v4168 = vsub.f32 2.0, %v4136
      %v4169 = vsub.f32 2.0, %v4137
      %v4170 = vsub.f32 2.0, %v4138
      %v4171 = vsub.f32 2.0, %v4139
      %v4172 = vsub.f32 2.0, %v4140
      %v4173 = vsub.f32 2.0, %v4141
      %v4174 = vsub.f32 2.0, %v4142
      %v4175 = vsub.f32 2.0, %v4143
      %v4176 = vsub.f32 2.0, %v4144
      %v4177 = vmul.f32 %v4081, %v4145
      %v4178 = vmul.f32 %v4082, %v4146
      %v4179 = vmul.f32 %v4083, %v4147
      %v4180 = vmul.f32 %v4084, %v4148
      %v4181 = vmul.f32 %v4085, %v4149
      %v4182 = vmul.f32 %v4086, %v4150
      %v4183 = vmul.f32 %v4087, %v4151
      %v4184 = vmul.f32 %v4088, %v4152
      %v4185 = vmul.f32 %v4089, %v4153
      %v4186 = vmul.f32 %v4090, %v4154
      %v4187 = vmul.f32 %v4091, %v4155
      %v4188 = vmul.f32 %v4092, %v4156
      %v4189 = vmul.f32 %v4093, %v4157
      %v4190 = vmul.f32 %v4094, %v4158
      %v4191 = vmul.f32 %v4095, %v4159
      %v4192 = vmul.f32 %v4096, %v4160
      %v4193 = vmul.f32 %v4097, %v4161
      %v4194 = vmul.f32 %v4098, %v4162
      %v4195 = vmul.f32 %v4099, %v4163
      %v4196 = vmul.f32 %v4100, %v4164
      %v4197 = vmul.f32 %v4101, %v4165
      %v4198 = vmul.f32 %v4102, %v4166
      %v4199 = vmul.f32 %v4103, %v4167
      %v4200 = vmul.f32 %v4104, %v4168
      %v4201 = vmul.f32 %v4105, %v4169
      %v4202 = vmul.f32 %v4106, %v4170
      %v4203 = vmul.f32 %v4107, %v4171
      %v4204 = vmul.f32 %v4108, %v4172
      %v4205 = vmul.f32 %v4109, %v4173
      %v4206 = vmul.f32 %v4110, %v4174
      %v4207 = vmul.f32 %v4111, %v4175
      %v4208 = vmul.f32 %v4112, %v4176
      %v4209 = vmul.f32 %v3922, %v4177
      %v4210 = vmul.f32 %v3924, %v4178
      %v4211 = vmul.f32 %v3926, %v4179
      %v4212 = vmul.f32 %v3928, %v4180
      %v4213 = vmul.f32 %v3930, %v4181
      %v4214 = vmul.f32 %v3932, %v4182
      %v4215 = vmul.f32 %v3934, %v4183
      %v4216 = vmul.f32 %v3936, %v4184
      %v4217 = vmul.f32 %v3938, %v4185
      %v4218 = vmul.f32 %v3940, %v4186
      %v4219 = vmul.f32 %v3942, %v4187
      %v4220 = vmul.f32 %v3944, %v4188
      %v4221 = vmul.f32 %v3946, %v4189
      %v4222 = vmul.f32 %v3948, %v4190
      %v4223 = vmul.f32 %v3950, %v4191
      %v4224 = vmul.f32 %v3952, %v4192
      %v4225 = vmul.f32 %v3954, %v4193
      %v4226 = vmul.f32 %v3956, %v4194
      %v4227 = vmul.f32 %v3958, %v4195
      %v4228 = vmul.f32 %v3960, %v4196
      %v4229 = vmul.f32 %v3962, %v4197
      %v4230 = vmul.f32 %v3964, %v4198
      %v4231 = vmul.f32 %v3966, %v4199
      %v4232 = vmul.f32 %v3968, %v4200
      %v4233 = vmul.f32 %v3970, %v4201
      %v4234 = vmul.f32 %v3972, %v4202
      %v4235 = vmul.f32 %v3974, %v4203
      %v4236 = vmul.f32 %v3976, %v4204
      %v4237 = vmul.f32 %v3978, %v4205
      %v4238 = vmul.f32 %v3980, %v4206
      %v4239 = vmul.f32 %v3982, %v4207
      %v4240 = vmul.f32 %v3984, %v4208
      %4241 = vst.msk [vmem:[%s226] sm:$0xff] %vm3308, %v4209
      %4242 = vst.msk [vmem:[%s226 + $0x8] sm:$0xff] %vm3308, %v4210
      %4243 = vst.msk [vmem:[%s226 + $0x10] sm:$0xff] %vm3308, %v4211
      %4244 = vst.msk [vmem:[%s226 + $0x18] sm:$0xff] %vm3308, %v4212
      %4245 = vst.msk [vmem:[%s226 + $0x20] sm:$0xff] %vm3308, %v4213
      %4246 = vst.msk [vmem:[%s226 + $0x28] sm:$0xff] %vm3308, %v4214
      %4247 = vst.msk [vmem:[%s226 + $0x30] sm:$0xff] %vm3308, %v4215
      %4248 = vst.msk [vmem:[%s226 + $0x38] sm:$0xff] %vm3308, %v4216
      %4249 = vst.msk [vmem:[%s226 + $0x40] sm:$0xff] %vm3308, %v4217
      %4250 = vst.msk [vmem:[%s226 + $0x48] sm:$0xff] %vm3308, %v4218
      %4251 = vst.msk [vmem:[%s226 + $0x50] sm:$0xff] %vm3308, %v4219
      %4252 = vst.msk [vmem:[%s226 + $0x58] sm:$0xff] %vm3308, %v4220
      %4253 = vst.msk [vmem:[%s226 + $0x60] sm:$0xff] %vm3308, %v4221
      %4254 = vst.msk [vmem:[%s226 + $0x68] sm:$0xff] %vm3308, %v4222
      %4255 = vst.msk [vmem:[%s226 + $0x70] sm:$0xff] %vm3308, %v4223
      %4256 = vst.msk [vmem:[%s226 + $0x78] sm:$0xff] %vm3308, %v4224
      %4257 = vst.msk [vmem:[%s226 + $0x80] sm:$0xff] %vm3308, %v4225
      %4258 = vst.msk [vmem:[%s226 + $0x88] sm:$0xff] %vm3308, %v4226
      %4259 = vst.msk [vmem:[%s226 + $0x90] sm:$0xff] %vm3308, %v4227
      %4260 = vst.msk [vmem:[%s226 + $0x98] sm:$0xff] %vm3308, %v4228
      %4261 = vst.msk [vmem:[%s226 + $0xa0] sm:$0xff] %vm3308, %v4229
      %4262 = vst.msk [vmem:[%s226 + $0xa8] sm:$0xff] %vm3308, %v4230
      %4263 = vst.msk [vmem:[%s226 + $0xb0] sm:$0xff] %vm3308, %v4231
      %4264 = vst.msk [vmem:[%s226 + $0xb8] sm:$0xff] %vm3308, %v4232
      %4265 = vst.msk [vmem:[%s226 + $0xc0] sm:$0xff] %vm3308, %v4233
      %4266 = vst.msk [vmem:[%s226 + $0xc8] sm:$0xff] %vm3308, %v4234
      %4267 = vst.msk [vmem:[%s226 + $0xd0] sm:$0xff] %vm3308, %v4235
      %4268 = vst.msk [vmem:[%s226 + $0xd8] sm:$0xff] %vm3308, %v4236
      %4269 = vst.msk [vmem:[%s226 + $0xe0] sm:$0xff] %vm3308, %v4237
      %4270 = vst.msk [vmem:[%s226 + $0xe8] sm:$0xff] %vm3308, %v4238
      %4271 = vst.msk [vmem:[%s226 + $0xf0] sm:$0xff] %vm3308, %v4239
      %4272 = vst.msk [vmem:[%s226 + $0xf8] sm:$0xff] %vm3308, %v4240
      %s4273 = smul.u32 32, %s16
      %p4274 = scmp.lt.s32.totalorder %s4273, 63
      %s4275 = scalar_select %p4274, %s4273, 63
      %s4276 = smul.addr %s4275, 8
      %s4277 = scalar_lea.vmem %s5, %s4276
      // Predicated region
      $region41: #{tpu_custom_call.1} parent=39 // pred_check
        %p4278 = pneg %p144
      $region42: #{tpu_custom_call.1} parent=39 // pred_check_branch
        %4280 = sbr.rel (%p4278) target = $region44
      $region43: #{tpu_custom_call.1} parent=39 // pred_region
        %s4281 = smul.u32 32, %s16
      $region44: #{tpu_custom_call.1} parent=39 // pred_fallthru
        _
    $region40: #{tpu_custom_call.1} parent=5 // pred_fallthru
      _
    %p4282 = scmp.le.s32.totalorder 2, %s11
    // Predicated region
    $region45: #{tpu_custom_call.1} parent=5 // pred_check
      %p4283 = pneg %p4282
    $region46: #{tpu_custom_call.1} parent=5 // pred_check_branch
      %4285 = sbr.rel (%p4283) target = $region48
    $region47: #{tpu_custom_call.1} parent=5 // pred_region
      %s4286 = ssub.s32 %s11, 2
      // Predicated region
      $region49: #{tpu_custom_call.1} parent=47 // pred_check
        %p4287 = pneg %p150
      $region50: #{tpu_custom_call.1} parent=47 // pred_check_branch
        %4289 = sbr.rel (%p4287) target = $region52
      $region51: #{tpu_custom_call.1} parent=47 // pred_region
        %s4290 = smul.u32 32, %s17
        %p4291 = scmp.lt.s32.totalorder %s4290, 63
        %s4292 = scalar_select %p4291, %s4290, 63
        %s4293 = smul.addr %s4292, 8
        %s4294 = scalar_lea.vmem %s5, %s4293
      $region52: #{tpu_custom_call.1} parent=47 // pred_fallthru
        _
    $region48: #{tpu_custom_call.1} parent=5 // pred_fallthru
      _
  $region6: #{tpu_custom_call.1} parent=0 // loop_footer
    %s15 = sadd.s32 1, %s11
  $region7: #{tpu_custom_call.1} parent=0 // loop_footer_branch
    %10 = sbr.rel target = $region3
  $region8: #{tpu_custom_call.1} parent=0 // loop_exit
    _

</llo_original>
